<compile_context>
chip_gen: v5e
topology: v5e:2x2
jax: 0.10.0
libtpu: 0.0.40
codegen_flags: <defaults>
</compile_context>

<pallas_src>
import functools

import jax
import jax.numpy as jnp
import numpy as np
from jax.experimental import pallas as pl
from jax.experimental.pallas import tpu as pltpu


def _round_up(x, m):
    return (x + m - 1) // m * m


def _double_conv_kernel(H, W, HT, Wp, Cin_p, Cout_p,
                        xblk_ref, xhbm_ref, w1_ref, s1_ref, b1_ref,
                        w2_ref, s2_ref, b2_ref, out_ref, xbuf_ref, sem_ref):
    """One (batch, row-tile) grid step: conv3x3+BN+ReLU twice, fused.

    xblk_ref : (HT, W, Cin_p)        auto-pipelined centre rows of the tile (VMEM)
    xhbm_ref : (N, H, W, Cin_p)      full input left in HBM (halo DMAs only)
    w1_ref   : (9*Cin_p, Cout_p)     stage-1 im2col weights
    w2_ref   : (9*Cout_p, Cout_p)    stage-2 im2col weights
    s*/b*    : (1, Cout_p)           folded BN scale / shift (f32)
    out_ref  : (HT, W, Cout_p)       output tile (VMEM)
    xbuf_ref : (HT+6, Wp, Cin_p)     row-tile + 2-row halos + guard rows + zero cols
    sem_ref  : DMA semaphores (2,)
    """
    n = pl.program_id(0)
    i = pl.program_id(1)
    n_i = pl.num_programs(1)
    h0 = i * HT
    R1 = HT + 2                       # stage-1 rows produced (tile + 1 halo each side)
    cdt = xbuf_ref.dtype

    # Zero the regions never written by copies: guard rows and right padding columns.
    # (Done every step -> no cross-step scratch state; both grid axes stay parallel.)
    xbuf_ref[0:1, :, :] = jnp.zeros((1, Wp, Cin_p), cdt)
    xbuf_ref[HT + 5:HT + 6, :, :] = jnp.zeros((1, Wp, Cin_p), cdt)
    xbuf_ref[:, W:Wp, :] = jnp.zeros((HT + 6, Wp - W, Cin_p), cdt)

    # 2-row top/bottom halos via small manual DMAs (source clamped at the image edge;
    # boundary tiles re-zero those rows below, which implements the vertical SAME pad).
    src_top = jnp.maximum(h0 - 2, 0)
    src_bot = jnp.minimum(h0 + HT, H - 2)
    top_cp = pltpu.make_async_copy(
        xhbm_ref.at[n, pl.ds(src_top, 2), :, :],
        xbuf_ref.at[pl.ds(1, 2), pl.ds(0, W), :],
        sem_ref.at[0])
    bot_cp = pltpu.make_async_copy(
        xhbm_ref.at[n, pl.ds(src_bot, 2), :, :],
        xbuf_ref.at[pl.ds(HT + 3, 2), pl.ds(0, W), :],
        sem_ref.at[1])
    top_cp.start()
    bot_cp.start()

    # Centre rows come from the auto-pipelined (double-buffered) block.
    xbuf_ref[3:3 + HT, 0:W, :] = xblk_ref[...]

    top_cp.wait()
    bot_cp.wait()

    @pl.when(i == 0)
    def _zero_top_halo():
        xbuf_ref[1:3, :, :] = jnp.zeros((2, Wp, Cin_p), cdt)

    @pl.when(i == n_i - 1)
    def _zero_bot_halo():
        xbuf_ref[HT + 3:HT + 5, :, :] = jnp.zeros((2, Wp, Cin_p), cdt)

    # ----- stage 1: conv3x3 (single matmul, K = 9*Cin_p) + folded BN + ReLU --------
    # Flatten (rows, Wp) onto the sublane axis: tap (dy, dx) is the row slice starting
    # at (dy+1)*Wp + (dx-1); the zero columns [W, Wp) and the guard rows supply the
    # SAME padding (including across the row wrap for the dx = +-1 shifts).
    x2d = xbuf_ref[...].reshape((HT + 6) * Wp, Cin_p)
    taps1 = [x2d[(dy + 1) * Wp + dx - 1:(dy + 1) * Wp + dx - 1 + R1 * Wp, :]
             for dy in range(3) for dx in range(3)]
    patch1 = jnp.concatenate(taps1, axis=1)                       # (R1*Wp, 9*Cin_p)
    y1 = jnp.dot(patch1, w1_ref[...], preferred_element_type=jnp.float32)
    y1 = jnp.maximum(y1 * s1_ref[...] + b1_ref[...], 0.0)

    # Mask the intermediate so every padding position stage 2 reads is an exact zero:
    # columns >= W, plus row 0 on the first tile / row R1-1 on the last tile.
    y1 = y1.reshape(R1, Wp, Cout_p)
    rr = jax.lax.broadcasted_iota(jnp.int32, (R1, Wp, 1), 0)
    cc = jax.lax.broadcasted_iota(jnp.int32, (R1, Wp, 1), 1)
    valid = cc < W
    valid = jnp.logical_and(valid, jnp.logical_or(rr > 0, i > 0))
    valid = jnp.logical_and(valid, jnp.logical_or(rr < R1 - 1, i < n_i - 1))
    y1 = jnp.where(valid, y1, 0.0)
    y1 = y1.reshape(R1 * Wp, Cout_p).astype(cdt)

    # ----- stage 2: conv3x3 (single matmul, K = 9*Cout_p) + folded BN + ReLU -------
    zrow = jnp.zeros((Wp, Cout_p), cdt)
    y1p = jnp.concatenate([zrow, y1, zrow], axis=0)               # ((R1+2)*Wp, Cout_p)
    taps2 = [y1p[(dy + 1) * Wp + dx - 1:(dy + 1) * Wp + dx - 1 + HT * Wp, :]
             for dy in range(3) for dx in range(3)]
    patch2 = jnp.concatenate(taps2, axis=1)                       # (HT*Wp, 9*Cout_p)
    y2 = jnp.dot(patch2, w2_ref[...], preferred_element_type=jnp.float32)
    y2 = jnp.maximum(y2 * s2_ref[...] + b2_ref[...], 0.0)

    out_ref[...] = y2.reshape(HT, Wp, Cout_p)[:, :W, :].astype(out_ref.dtype)


def double_conv_forward(x_nchw, params, eps=1e-5, row_tile=8,
                        compute_dtype=jnp.float32):
    """DoubleConv forward.  x_nchw: (N, Cin, H, W) -> (N, Cout, H, W)."""
    (w1, g1, b1, m1, v1, w2, g2, b2, m2, v2) = params
    N, Cin, H, W = x_nchw.shape
    Cout = w1.shape[0]

    Cin_p = _round_up(Cin, 128)           # lane-dense channels
    Cout_p = _round_up(Cout, 128)
    Wp = _round_up(W + 2, 8)              # buffer width: W + zero padding, 8-aligned
    HT = row_tile if (H % row_tile == 0 and 2 <= row_tile <= H) else H
    n_i = H // HT

    # NCHW -> NHWC, channels zero-padded to the lane width.
    x = jnp.transpose(x_nchw, (0, 2, 3, 1))
    x = jnp.pad(x, ((0, 0), (0, 0), (0, 0), (0, Cin_p - Cin))).astype(compute_dtype)

    def prep_weight(w, cin, cin_p):
        # OIHW -> HWIO, pad channels, reshape to the (dy, dx, cin)-major im2col matrix.
        w = jnp.transpose(w, (2, 3, 1, 0))
        w = jnp.pad(w, ((0, 0), (0, 0), (0, cin_p - cin), (0, Cout_p - Cout)))
        return w.reshape(9 * cin_p, Cout_p).astype(compute_dtype)

    def fold_bn(g, b, m, v):
        s = g / jnp.sqrt(v + eps)
        sh = b - m * s
        s = jnp.pad(s, (0, Cout_p - Cout)).reshape(1, Cout_p).astype(jnp.float32)
        sh = jnp.pad(sh, (0, Cout_p - Cout)).reshape(1, Cout_p).astype(jnp.float32)
        return s, sh

    w1m = prep_weight(w1, Cin, Cin_p)
    w2m = prep_weight(w2, Cout, Cout_p)
    s1, sh1 = fold_bn(g1, b1, m1, v1)
    s2, sh2 = fold_bn(g2, b2, m2, v2)

    kernel = functools.partial(_double_conv_kernel, H, W, HT, Wp, Cin_p, Cout_p)

    flops = 2 * N * H * Wp * 9 * (Cin_p + Cout_p) * Cout_p
    bytes_accessed = (x.size * x.dtype.itemsize
                      + w1m.size * w1m.dtype.itemsize
                      + w2m.size * w2m.dtype.itemsize
                      + N * H * W * Cout_p * jnp.dtype(x_nchw.dtype).itemsize)

    out = pl.pallas_call(
        kernel,
        out_shape=jax.ShapeDtypeStruct((N, H, W, Cout_p), x_nchw.dtype),
        grid=(N, n_i),
        in_specs=[
            # bulk of the row tile: auto-pipelined / double-buffered by Pallas
            pl.BlockSpec((None, HT, W, Cin_p), lambda n, i: (n, i, 0, 0)),
            # same array left in HBM for the small manual halo DMAs
            pl.BlockSpec(memory_space=pl.ANY),
            pl.BlockSpec((9 * Cin_p, Cout_p), lambda n, i: (0, 0)),
            pl.BlockSpec((1, Cout_p), lambda n, i: (0, 0)),
            pl.BlockSpec((1, Cout_p), lambda n, i: (0, 0)),
            pl.BlockSpec((9 * Cout_p, Cout_p), lambda n, i: (0, 0)),
            pl.BlockSpec((1, Cout_p), lambda n, i: (0, 0)),
            pl.BlockSpec((1, Cout_p), lambda n, i: (0, 0)),
        ],
        out_specs=pl.BlockSpec((None, HT, W, Cout_p), lambda n, i: (n, i, 0, 0)),
        scratch_shapes=[
            pltpu.VMEM((HT + 6, Wp, Cin_p), compute_dtype),
            pltpu.SemaphoreType.DMA((2,)),
        ],
        compiler_params=pltpu.CompilerParams(
            dimension_semantics=("parallel", "parallel"),
            vmem_limit_bytes=32 * 1024 * 1024),
        cost_estimate=pl.CostEstimate(flops=flops, transcendentals=0,
                                      bytes_accessed=bytes_accessed),
    )(x, x, w1m, s1, sh1, w2m, s2, sh2)

    out = out[..., :Cout]                          # drop channel padding
    return jnp.transpose(out, (0, 3, 1, 2))        # NHWC -> NCHW


def double_conv_reference(x_nchw, params, eps=1e-5):
    """Pure-JAX reference (no Pallas) for correctness check."""
    (w1, g1, b1, m1, v1, w2, g2, b2, m2, v2) = params

    def stage(x, w, g, b, m, v):
        y = jax.lax.conv_general_dilated(
            x, jnp.transpose(w, (2, 3, 1, 0)), window_strides=(1, 1),
            padding='SAME', dimension_numbers=('NHWC', 'HWIO', 'NHWC'),
            precision=jax.lax.Precision.HIGHEST)
        y = (y - m) / jnp.sqrt(v + eps) * g + b
        return jnp.maximum(y, 0.0)

    x = jnp.transpose(x_nchw, (0, 2, 3, 1))
    y = stage(x, w1, g1, b1, m1, v1)
    y = stage(y, w2, g2, b2, m2, v2)
    return jnp.transpose(y, (0, 3, 1, 2))


if __name__ == "__main__":
    N, Cin, Cout, H, W = 2, 4, 8, 16, 16
    key = jax.random.PRNGKey(0)
    ks = jax.random.split(key, 11)

    x = jax.random.normal(ks[0], (N, Cin, H, W), jnp.float32)

    # Deterministic synthetic parameters (shapes follow nn.Conv2d / nn.BatchNorm2d).
    w1 = 0.3 * jax.random.normal(ks[1], (Cout, Cin, 3, 3), jnp.float32)   # OIHW
    g1 = jax.random.uniform(ks[2], (Cout,), jnp.float32, 0.5, 1.5)        # gamma
    b1 = 0.1 * jax.random.normal(ks[3], (Cout,), jnp.float32)             # beta
    m1 = 0.1 * jax.random.normal(ks[4], (Cout,), jnp.float32)             # running_mean
    v1 = jax.random.uniform(ks[5], (Cout,), jnp.float32, 0.5, 1.5)        # running_var

    w2 = 0.3 * jax.random.normal(ks[6], (Cout, Cout, 3, 3), jnp.float32)
    g2 = jax.random.uniform(ks[7], (Cout,), jnp.float32, 0.5, 1.5)
    b2 = 0.1 * jax.random.normal(ks[8], (Cout,), jnp.float32)
    m2 = 0.1 * jax.random.normal(ks[9], (Cout,), jnp.float32)
    v2 = jax.random.uniform(ks[10], (Cout,), jnp.float32, 0.5, 1.5)

    params = (w1, g1, b1, m1, v1, w2, g2, b2, m2, v2)

    out = jax.block_until_ready(double_conv_forward(x, params))   # row_tile=8 -> 2 H-tiles
    ref = jax.block_until_ready(double_conv_reference(x, params))

    assert out.shape == (N, Cout, H, W), out.shape
    np.testing.assert_allclose(np.asarray(out), np.asarray(ref), rtol=1e-3, atol=1e-3)
    print("KERNEL_OK")
</pallas_src>

<mosaic_0001>
module attributes {stable_mosaic.version = 11 : i64} {
  func.func @_double_conv_kernel(%arg0: i32, %arg1: i32, %arg2: memref<1x8x16x128xf32, #tpu.memory_space<vmem>>, %arg3: memref<2x16x16x128xf32, #tpu.memory_space<any>>, %arg4: memref<1152x128xf32, #tpu.memory_space<vmem>>, %arg5: memref<1x128xf32, #tpu.memory_space<vmem>>, %arg6: memref<1x128xf32, #tpu.memory_space<vmem>>, %arg7: memref<1152x128xf32, #tpu.memory_space<vmem>>, %arg8: memref<1x128xf32, #tpu.memory_space<vmem>>, %arg9: memref<1x128xf32, #tpu.memory_space<vmem>>, %arg10: memref<1x8x16x128xf32, #tpu.memory_space<vmem>>, %arg11: memref<14x24x128xf32, #tpu.memory_space<vmem>>, %arg12: memref<2x!tpu.dma_semaphore, #tpu.memory_space<semaphore_mem>>) attributes {dimension_semantics = [#tpu.dimension_semantics<parallel>, #tpu.dimension_semantics<parallel>], iteration_bounds = array<i64: 2, 2>, scalar_prefetch = 0 : i64, scratch_operands = 2 : i64, tpu.core_type = #tpu.core_type<tc>, window_params = [{transform_indices = @transform_0, window_bounds = array<i64: 1, 8, 16, 128>}, {}, {pipeline_mode = #tpu.pipeline_mode<synchronous>, transform_indices = @transform_2, window_bounds = array<i64: 1152, 128>}, {pipeline_mode = #tpu.pipeline_mode<synchronous>, transform_indices = @transform_3, window_bounds = array<i64: 1, 128>}, {pipeline_mode = #tpu.pipeline_mode<synchronous>, transform_indices = @transform_4, window_bounds = array<i64: 1, 128>}, {pipeline_mode = #tpu.pipeline_mode<synchronous>, transform_indices = @transform_5, window_bounds = array<i64: 1152, 128>}, {pipeline_mode = #tpu.pipeline_mode<synchronous>, transform_indices = @transform_6, window_bounds = array<i64: 1, 128>}, {pipeline_mode = #tpu.pipeline_mode<synchronous>, transform_indices = @transform_7, window_bounds = array<i64: 1, 128>}, {transform_indices = @transform_8, window_bounds = array<i64: 1, 8, 16, 128>}]} {
    %c8_i32 = arith.constant 8 : i32
    %0 = arith.muli %arg1, %c8_i32 : i32
    %cst = arith.constant 0.000000e+00 : f32
    %1 = vector.broadcast %cst : f32 to vector<1x24x128xf32>
    %c0 = arith.constant 0 : index
    %c0_0 = arith.constant 0 : index
    %c0_1 = arith.constant 0 : index
    %2 = vector.load %arg11[%c0, %c0_0, %c0_1] : memref<14x24x128xf32, #tpu.memory_space<vmem>>, vector<1x24x128xf32>
    tpu.vector_store %arg11[%c0, %c0_0, %c0_1], %1 {strides = array<i32>} : memref<14x24x128xf32, #tpu.memory_space<vmem>>, vector<1x24x128xf32>,
    %cst_2 = arith.constant 0.000000e+00 : f32
    %3 = vector.broadcast %cst_2 : f32 to vector<1x24x128xf32>
    %c13 = arith.constant 13 : index
    %c0_3 = arith.constant 0 : index
    %c0_4 = arith.constant 0 : index
    %4 = vector.load %arg11[%c13, %c0_3, %c0_4] : memref<14x24x128xf32, #tpu.memory_space<vmem>>, vector<1x24x128xf32>
    tpu.vector_store %arg11[%c13, %c0_3, %c0_4], %3 {strides = array<i32>} : memref<14x24x128xf32, #tpu.memory_space<vmem>>, vector<1x24x128xf32>,
    %cst_5 = arith.constant 0.000000e+00 : f32
    %5 = vector.broadcast %cst_5 : f32 to vector<14x8x128xf32>
    %c0_6 = arith.constant 0 : index
    %c16 = arith.constant 16 : index
    %c0_7 = arith.constant 0 : index
    %6 = vector.load %arg11[%c0_6, %c16, %c0_7] : memref<14x24x128xf32, #tpu.memory_space<vmem>>, vector<14x8x128xf32>
    tpu.vector_store %arg11[%c0_6, %c16, %c0_7], %5 {strides = array<i32>} : memref<14x24x128xf32, #tpu.memory_space<vmem>>, vector<14x8x128xf32>,
    %c2_i32 = arith.constant 2 : i32
    %7 = arith.subi %0, %c2_i32 : i32
    %c0_i32 = arith.constant 0 : i32
    %8 = arith.maxsi %7, %c0_i32 : i32
    %c8_i32_8 = arith.constant 8 : i32
    %9 = arith.addi %0, %c8_i32_8 : i32
    %c14_i32 = arith.constant 14 : i32
    %10 = arith.minsi %9, %c14_i32 : i32
    %c0_i32_9 = arith.constant 0 : i32
    %c0_i32_10 = arith.constant 0 : i32
    %c0_i32_11 = arith.constant 0 : i32
    %11 = tpu.memref_slice %arg3[%arg0, %8, %c0_i32_10, %c0_i32_11] : memref<2x16x16x128xf32, #tpu.memory_space<any>> -> memref<1x2x16x128xf32, #tpu.memory_space<any>>
    %12 = tpu.memref_squeeze %11 : memref<1x2x16x128xf32, #tpu.memory_space<any>> -> memref<2x16x128xf32, #tpu.memory_space<any>>
    %c1_i32 = arith.constant 1 : i32
    %c0_i32_12 = arith.constant 0 : i32
    %c0_i32_13 = arith.constant 0 : i32
    %13 = tpu.memref_slice %arg11[%c1_i32, %c0_i32_12, %c0_i32_13] : memref<14x24x128xf32, #tpu.memory_space<vmem>> -> memref<2x16x128xf32, #tpu.memory_space<vmem>>
    %14 = tpu.memref_slice %arg12[%c0_i32_9] : memref<2x!tpu.dma_semaphore, #tpu.memory_space<semaphore_mem>> -> memref<1x!tpu.dma_semaphore, #tpu.memory_space<semaphore_mem>>
    %15 = tpu.memref_squeeze %14 : memref<1x!tpu.dma_semaphore, #tpu.memory_space<semaphore_mem>> -> memref<!tpu.dma_semaphore, #tpu.memory_space<semaphore_mem>>
    tpu.enqueue_dma source(%12 : memref<2x16x128xf32, #tpu.memory_space<any>>) target(%13 : memref<2x16x128xf32, #tpu.memory_space<vmem>>) target_semaphore(%15 : memref<!tpu.dma_semaphore, #tpu.memory_space<semaphore_mem>>)
    %c1_i32_14 = arith.constant 1 : i32
    %c0_i32_15 = arith.constant 0 : i32
    %c0_i32_16 = arith.constant 0 : i32
    %16 = tpu.memref_slice %arg3[%arg0, %10, %c0_i32_15, %c0_i32_16] : memref<2x16x16x128xf32, #tpu.memory_space<any>> -> memref<1x2x16x128xf32, #tpu.memory_space<any>>
    %17 = tpu.memref_squeeze %16 : memref<1x2x16x128xf32, #tpu.memory_space<any>> -> memref<2x16x128xf32, #tpu.memory_space<any>>
    %c11_i32 = arith.constant 11 : i32
    %c0_i32_17 = arith.constant 0 : i32
    %c0_i32_18 = arith.constant 0 : i32
    %18 = tpu.memref_slice %arg11[%c11_i32, %c0_i32_17, %c0_i32_18] : memref<14x24x128xf32, #tpu.memory_space<vmem>> -> memref<2x16x128xf32, #tpu.memory_space<vmem>>
    %19 = tpu.memref_slice %arg12[%c1_i32_14] : memref<2x!tpu.dma_semaphore, #tpu.memory_space<semaphore_mem>> -> memref<1x!tpu.dma_semaphore, #tpu.memory_space<semaphore_mem>>
    %20 = tpu.memref_squeeze %19 : memref<1x!tpu.dma_semaphore, #tpu.memory_space<semaphore_mem>> -> memref<!tpu.dma_semaphore, #tpu.memory_space<semaphore_mem>>
    tpu.enqueue_dma source(%17 : memref<2x16x128xf32, #tpu.memory_space<any>>) target(%18 : memref<2x16x128xf32, #tpu.memory_space<vmem>>) target_semaphore(%20 : memref<!tpu.dma_semaphore, #tpu.memory_space<semaphore_mem>>)
    %c0_19 = arith.constant 0 : index
    %c0_20 = arith.constant 0 : index
    %c0_21 = arith.constant 0 : index
    %c0_22 = arith.constant 0 : index
    %21 = vector.load %arg2[%c0_19, %c0_20, %c0_21, %c0_22] : memref<1x8x16x128xf32, #tpu.memory_space<vmem>>, vector<1x8x16x128xf32>
    %22 = vector.shape_cast %21 : vector<1x8x16x128xf32> to vector<8x16x128xf32>
    %c3 = arith.constant 3 : index
    %c0_23 = arith.constant 0 : index
    %c0_24 = arith.constant 0 : index
    %23 = vector.load %arg11[%c3, %c0_23, %c0_24] : memref<14x24x128xf32, #tpu.memory_space<vmem>>, vector<8x16x128xf32>
    tpu.vector_store %arg11[%c3, %c0_23, %c0_24], %22 {strides = array<i32>} : memref<14x24x128xf32, #tpu.memory_space<vmem>>, vector<8x16x128xf32>,
    %c0_i32_25 = arith.constant 0 : i32
    %c0_i32_26 = arith.constant 0 : i32
    %c0_i32_27 = arith.constant 0 : i32
    %24 = tpu.memref_slice %arg3[%arg0, %8, %c0_i32_26, %c0_i32_27] : memref<2x16x16x128xf32, #tpu.memory_space<any>> -> memref<1x2x16x128xf32, #tpu.memory_space<any>>
    %25 = tpu.memref_squeeze %24 : memref<1x2x16x128xf32, #tpu.memory_space<any>> -> memref<2x16x128xf32, #tpu.memory_space<any>>
    %c1_i32_28 = arith.constant 1 : i32
    %c0_i32_29 = arith.constant 0 : i32
    %c0_i32_30 = arith.constant 0 : i32
    %26 = tpu.memref_slice %arg11[%c1_i32_28, %c0_i32_29, %c0_i32_30] : memref<14x24x128xf32, #tpu.memory_space<vmem>> -> memref<2x16x128xf32, #tpu.memory_space<vmem>>
    %27 = tpu.memref_slice %arg12[%c0_i32_25] : memref<2x!tpu.dma_semaphore, #tpu.memory_space<semaphore_mem>> -> memref<1x!tpu.dma_semaphore, #tpu.memory_space<semaphore_mem>>
    %28 = tpu.memref_squeeze %27 : memref<1x!tpu.dma_semaphore, #tpu.memory_space<semaphore_mem>> -> memref<!tpu.dma_semaphore, #tpu.memory_space<semaphore_mem>>
    tpu.wait_dma2 semaphore(%28 : memref<!tpu.dma_semaphore, #tpu.memory_space<semaphore_mem>>) src(%25 : memref<2x16x128xf32, #tpu.memory_space<any>>) dst(%26 : memref<2x16x128xf32, #tpu.memory_space<vmem>>)
    %c1_i32_31 = arith.constant 1 : i32
    %c0_i32_32 = arith.constant 0 : i32
    %c0_i32_33 = arith.constant 0 : i32
    %29 = tpu.memref_slice %arg3[%arg0, %10, %c0_i32_32, %c0_i32_33] : memref<2x16x16x128xf32, #tpu.memory_space<any>> -> memref<1x2x16x128xf32, #tpu.memory_space<any>>
    %30 = tpu.memref_squeeze %29 : memref<1x2x16x128xf32, #tpu.memory_space<any>> -> memref<2x16x128xf32, #tpu.memory_space<any>>
    %c11_i32_34 = arith.constant 11 : i32
    %c0_i32_35 = arith.constant 0 : i32
    %c0_i32_36 = arith.constant 0 : i32
    %31 = tpu.memref_slice %arg11[%c11_i32_34, %c0_i32_35, %c0_i32_36] : memref<14x24x128xf32, #tpu.memory_space<vmem>> -> memref<2x16x128xf32, #tpu.memory_space<vmem>>
    %32 = tpu.memref_slice %arg12[%c1_i32_31] : memref<2x!tpu.dma_semaphore, #tpu.memory_space<semaphore_mem>> -> memref<1x!tpu.dma_semaphore, #tpu.memory_space<semaphore_mem>>
    %33 = tpu.memref_squeeze %32 : memref<1x!tpu.dma_semaphore, #tpu.memory_space<semaphore_mem>> -> memref<!tpu.dma_semaphore, #tpu.memory_space<semaphore_mem>>
    tpu.wait_dma2 semaphore(%33 : memref<!tpu.dma_semaphore, #tpu.memory_space<semaphore_mem>>) src(%30 : memref<2x16x128xf32, #tpu.memory_space<any>>) dst(%31 : memref<2x16x128xf32, #tpu.memory_space<vmem>>)
    %c0_i32_37 = arith.constant 0 : i32
    %34 = arith.cmpi eq, %arg1, %c0_i32_37 : i32
    %35 = arith.extui %34 : i1 to i32
    %c0_i32_38 = arith.constant 0 : i32
    %36 = arith.cmpi ne, %35, %c0_i32_38 : i32
    scf.if %36 {
      %cst_69 = arith.constant 0.000000e+00 : f32
      %111 = vector.broadcast %cst_69 : f32 to vector<2x24x128xf32>
      %c1 = arith.constant 1 : index
      %c0_70 = arith.constant 0 : index
      %c0_71 = arith.constant 0 : index
      %112 = vector.load %arg11[%c1, %c0_70, %c0_71] : memref<14x24x128xf32, #tpu.memory_space<vmem>>, vector<2x24x128xf32>
      tpu.vector_store %arg11[%c1, %c0_70, %c0_71], %111 {strides = array<i32>} : memref<14x24x128xf32, #tpu.memory_space<vmem>>, vector<2x24x128xf32>,
    } else {
    }
    %c1_i32_39 = arith.constant 1 : i32
    %37 = arith.cmpi eq, %arg1, %c1_i32_39 : i32
    %38 = arith.extui %37 : i1 to i32
    %c0_i32_40 = arith.constant 0 : i32
    %39 = arith.cmpi ne, %38, %c0_i32_40 : i32
    scf.if %39 {
      %cst_69 = arith.constant 0.000000e+00 : f32
      %111 = vector.broadcast %cst_69 : f32 to vector<2x24x128xf32>
      %c11 = arith.constant 11 : index
      %c0_70 = arith.constant 0 : index
      %c0_71 = arith.constant 0 : index
      %112 = vector.load %arg11[%c11, %c0_70, %c0_71] : memref<14x24x128xf32, #tpu.memory_space<vmem>>, vector<2x24x128xf32>
      tpu.vector_store %arg11[%c11, %c0_70, %c0_71], %111 {strides = array<i32>} : memref<14x24x128xf32, #tpu.memory_space<vmem>>, vector<2x24x128xf32>,
    } else {
    }
    %c0_41 = arith.constant 0 : index
    %c0_42 = arith.constant 0 : index
    %c0_43 = arith.constant 0 : index
    %40 = vector.load %arg11[%c0_41, %c0_42, %c0_43] : memref<14x24x128xf32, #tpu.memory_space<vmem>>, vector<14x24x128xf32>
    %41 = vector.shape_cast %40 : vector<14x24x128xf32> to vector<336x128xf32>
    %42 = vector.extract_strided_slice %41 {offsets = [23, 0], sizes = [240, 128], strides = [1, 1]} : vector<336x128xf32> to vector<240x128xf32>
    %43 = vector.extract_strided_slice %41 {offsets = [24, 0], sizes = [240, 128], strides = [1, 1]} : vector<336x128xf32> to vector<240x128xf32>
    %44 = vector.extract_strided_slice %41 {offsets = [25, 0], sizes = [240, 128], strides = [1, 1]} : vector<336x128xf32> to vector<240x128xf32>
    %45 = vector.extract_strided_slice %41 {offsets = [47, 0], sizes = [240, 128], strides = [1, 1]} : vector<336x128xf32> to vector<240x128xf32>
    %46 = vector.extract_strided_slice %41 {offsets = [48, 0], sizes = [240, 128], strides = [1, 1]} : vector<336x128xf32> to vector<240x128xf32>
    %47 = vector.extract_strided_slice %41 {offsets = [49, 0], sizes = [240, 128], strides = [1, 1]} : vector<336x128xf32> to vector<240x128xf32>
    %48 = vector.extract_strided_slice %41 {offsets = [71, 0], sizes = [240, 128], strides = [1, 1]} : vector<336x128xf32> to vector<240x128xf32>
    %49 = vector.extract_strided_slice %41 {offsets = [72, 0], sizes = [240, 128], strides = [1, 1]} : vector<336x128xf32> to vector<240x128xf32>
    %50 = vector.extract_strided_slice %41 {offsets = [73, 0], sizes = [240, 128], strides = [1, 1]} : vector<336x128xf32> to vector<240x128xf32>
    %51 = tpu.concatenate %42, %43, %44, %45, %46, %47, %48, %49, %50 in 1 : vector<240x128xf32>, vector<240x128xf32>, vector<240x128xf32>, vector<240x128xf32>, vector<240x128xf32>, vector<240x128xf32>, vector<240x128xf32>, vector<240x128xf32>, vector<240x128xf32> -> vector<240x1152xf32>
    %c0_44 = arith.constant 0 : index
    %c0_45 = arith.constant 0 : index
    %52 = vector.load %arg4[%c0_44, %c0_45] : memref<1152x128xf32, #tpu.memory_space<vmem>>, vector<1152x128xf32>
    %cst_46 = arith.constant dense<0.000000e+00> : vector<240x128xf32>
    %53 = tpu.matmul %51, %52, %cst_46 {dimension_numbers = #tpu.dot_dimension_numbers<[1], [0], [0], [1], [0, 0, 1, 1], [], []>} : vector<240x1152xf32>, vector<1152x128xf32>, vector<240x128xf32> -> vector<240x128xf32>
    %c0_47 = arith.constant 0 : index
    %c0_48 = arith.constant 0 : index
    %54 = vector.load %arg5[%c0_47, %c0_48] : memref<1x128xf32, #tpu.memory_space<vmem>>, vector<1x128xf32>
    %55 = vector.broadcast %54 : vector<1x128xf32> to vector<240x128xf32>
    %56 = arith.mulf %53, %55 : vector<240x128xf32>
    %c0_49 = arith.constant 0 : index
    %c0_50 = arith.constant 0 : index
    %57 = vector.load %arg6[%c0_49, %c0_50] : memref<1x128xf32, #tpu.memory_space<vmem>>, vector<1x128xf32>
    %58 = vector.broadcast %57 : vector<1x128xf32> to vector<240x128xf32>
    %59 = arith.addf %56, %58 : vector<240x128xf32>
    %cst_51 = arith.constant 0.000000e+00 : f32
    %60 = vector.broadcast %cst_51 : f32 to vector<240x128xf32>
    %61 = arith.maximumf %59, %60 : vector<240x128xf32>
    %62 = vector.shape_cast %61 : vector<240x128xf32> to vector<10x24x128xf32>
    %63 = tpu.iota {dimensions = array<i32: 0>} : vector<10x24x1xi32>
    %64 = tpu.iota {dimensions = array<i32: 1>} : vector<10x24x1xi32>
    %c16_i32 = arith.constant 16 : i32
    %65 = vector.broadcast %c16_i32 : i32 to vector<10x24x1xi32>
    %66 = arith.cmpi slt, %64, %65 : vector<10x24x1xi32>
    %c0_i32_52 = arith.constant 0 : i32
    %67 = vector.broadcast %c0_i32_52 : i32 to vector<10x24x1xi32>
    %68 = arith.cmpi sgt, %63, %67 : vector<10x24x1xi32>
    %c0_i32_53 = arith.constant 0 : i32
    %69 = arith.cmpi sgt, %arg1, %c0_i32_53 : i32
    %70 = vector.broadcast %69 : i1 to vector<10x24x1xi1>
    %71 = arith.ori %68, %70 : vector<10x24x1xi1>
    %72 = arith.andi %66, %71 : vector<10x24x1xi1>
    %c9_i32 = arith.constant 9 : i32
    %73 = vector.broadcast %c9_i32 : i32 to vector<10x24x1xi32>
    %74 = arith.cmpi slt, %63, %73 : vector<10x24x1xi32>
    %c1_i32_54 = arith.constant 1 : i32
    %75 = arith.cmpi slt, %arg1, %c1_i32_54 : i32
    %76 = vector.broadcast %75 : i1 to vector<10x24x1xi1>
    %77 = arith.ori %74, %76 : vector<10x24x1xi1>
    %78 = arith.andi %72, %77 : vector<10x24x1xi1>
    %cst_55 = arith.constant 0.000000e+00 : f32
    %79 = vector.shape_cast %78 : vector<10x24x1xi1> to vector<10x24x1xi1>
    %80 = vector.broadcast %79 : vector<10x24x1xi1> to vector<10x24x128xi1>
    %81 = vector.broadcast %cst_55 : f32 to vector<10x24x128xf32>
    %82 = arith.select %80, %62, %81 : vector<10x24x128xi1>, vector<10x24x128xf32>
    %83 = vector.shape_cast %82 : vector<10x24x128xf32> to vector<240x128xf32>
    %cst_56 = arith.constant 0.000000e+00 : f32
    %84 = vector.broadcast %cst_56 : f32 to vector<24x128xf32>
    %85 = tpu.concatenate %84, %83, %84 in 0 : vector<24x128xf32>, vector<240x128xf32>, vector<24x128xf32> -> vector<288x128xf32>
    %86 = vector.extract_strided_slice %85 {offsets = [23, 0], sizes = [192, 128], strides = [1, 1]} : vector<288x128xf32> to vector<192x128xf32>
    %87 = vector.extract_strided_slice %85 {offsets = [24, 0], sizes = [192, 128], strides = [1, 1]} : vector<288x128xf32> to vector<192x128xf32>
    %88 = vector.extract_strided_slice %85 {offsets = [25, 0], sizes = [192, 128], strides = [1, 1]} : vector<288x128xf32> to vector<192x128xf32>
    %89 = vector.extract_strided_slice %85 {offsets = [47, 0], sizes = [192, 128], strides = [1, 1]} : vector<288x128xf32> to vector<192x128xf32>
    %90 = vector.extract_strided_slice %85 {offsets = [48, 0], sizes = [192, 128], strides = [1, 1]} : vector<288x128xf32> to vector<192x128xf32>
    %91 = vector.extract_strided_slice %85 {offsets = [49, 0], sizes = [192, 128], strides = [1, 1]} : vector<288x128xf32> to vector<192x128xf32>
    %92 = vector.extract_strided_slice %85 {offsets = [71, 0], sizes = [192, 128], strides = [1, 1]} : vector<288x128xf32> to vector<192x128xf32>
    %93 = vector.extract_strided_slice %85 {offsets = [72, 0], sizes = [192, 128], strides = [1, 1]} : vector<288x128xf32> to vector<192x128xf32>
    %94 = vector.extract_strided_slice %85 {offsets = [73, 0], sizes = [192, 128], strides = [1, 1]} : vector<288x128xf32> to vector<192x128xf32>
    %95 = tpu.concatenate %86, %87, %88, %89, %90, %91, %92, %93, %94 in 1 : vector<192x128xf32>, vector<192x128xf32>, vector<192x128xf32>, vector<192x128xf32>, vector<192x128xf32>, vector<192x128xf32>, vector<192x128xf32>, vector<192x128xf32>, vector<192x128xf32> -> vector<192x1152xf32>
    %c0_57 = arith.constant 0 : index
    %c0_58 = arith.constant 0 : index
    %96 = vector.load %arg7[%c0_57, %c0_58] : memref<1152x128xf32, #tpu.memory_space<vmem>>, vector<1152x128xf32>
    %cst_59 = arith.constant dense<0.000000e+00> : vector<192x128xf32>
    %97 = tpu.matmul %95, %96, %cst_59 {dimension_numbers = #tpu.dot_dimension_numbers<[1], [0], [0], [1], [0, 0, 1, 1], [], []>} : vector<192x1152xf32>, vector<1152x128xf32>, vector<192x128xf32> -> vector<192x128xf32>
    %c0_60 = arith.constant 0 : index
    %c0_61 = arith.constant 0 : index
    %98 = vector.load %arg8[%c0_60, %c0_61] : memref<1x128xf32, #tpu.memory_space<vmem>>, vector<1x128xf32>
    %99 = vector.broadcast %98 : vector<1x128xf32> to vector<192x128xf32>
    %100 = arith.mulf %97, %99 : vector<192x128xf32>
    %c0_62 = arith.constant 0 : index
    %c0_63 = arith.constant 0 : index
    %101 = vector.load %arg9[%c0_62, %c0_63] : memref<1x128xf32, #tpu.memory_space<vmem>>, vector<1x128xf32>
    %102 = vector.broadcast %101 : vector<1x128xf32> to vector<192x128xf32>
    %103 = arith.addf %100, %102 : vector<192x128xf32>
    %cst_64 = arith.constant 0.000000e+00 : f32
    %104 = vector.broadcast %cst_64 : f32 to vector<192x128xf32>
    %105 = arith.maximumf %103, %104 : vector<192x128xf32>
    %106 = vector.shape_cast %105 : vector<192x128xf32> to vector<8x24x128xf32>
    %107 = vector.extract_strided_slice %106 {offsets = [0, 0, 0], sizes = [8, 16, 128], strides = [1, 1, 1]} : vector<8x24x128xf32> to vector<8x16x128xf32>
    %c0_65 = arith.constant 0 : index
    %c0_66 = arith.constant 0 : index
    %c0_67 = arith.constant 0 : index
    %c0_68 = arith.constant 0 : index
    %108 = vector.load %arg10[%c0_65, %c0_66, %c0_67, %c0_68] : memref<1x8x16x128xf32, #tpu.memory_space<vmem>>, vector<1x8x16x128xf32>
    %109 = vector.shape_cast %108 : vector<1x8x16x128xf32> to vector<8x16x128xf32>
    %110 = vector.shape_cast %107 : vector<8x16x128xf32> to vector<1x8x16x128xf32>
    tpu.vector_store %arg10[%c0_65, %c0_66, %c0_67, %c0_68], %110 {strides = array<i32>} : memref<1x8x16x128xf32, #tpu.memory_space<vmem>>, vector<1x8x16x128xf32>,
    return
  }
  func.func @transform_0(%arg0: i32, %arg1: i32) -> (i32, i32, i32, i32) {
    %c0_i32 = arith.constant 0 : i32
    %c0_i32_0 = arith.constant 0 : i32
    %c0_i32_1 = arith.constant 0 : i32
    return %arg0, %arg1, %c0_i32, %c0_i32_0 : i32, i32, i32, i32
  }
  func.func @transform_2(%arg0: i32, %arg1: i32) -> (i32, i32) {
    %c0_i32 = arith.constant 0 : i32
    %c0_i32_0 = arith.constant 0 : i32
    %c0_i32_1 = arith.constant 0 : i32
    return %c0_i32, %c0_i32_0 : i32, i32
  }
  func.func @transform_3(%arg0: i32, %arg1: i32) -> (i32, i32) {
    %c0_i32 = arith.constant 0 : i32
    %c0_i32_0 = arith.constant 0 : i32
    %c0_i32_1 = arith.constant 0 : i32
    return %c0_i32, %c0_i32_0 : i32, i32
  }
  func.func @transform_4(%arg0: i32, %arg1: i32) -> (i32, i32) {
    %c0_i32 = arith.constant 0 : i32
    %c0_i32_0 = arith.constant 0 : i32
    %c0_i32_1 = arith.constant 0 : i32
    return %c0_i32, %c0_i32_0 : i32, i32
  }
  func.func @transform_5(%arg0: i32, %arg1: i32) -> (i32, i32) {
    %c0_i32 = arith.constant 0 : i32
    %c0_i32_0 = arith.constant 0 : i32
    %c0_i32_1 = arith.constant 0 : i32
    return %c0_i32, %c0_i32_0 : i32, i32
  }
  func.func @transform_6(%arg0: i32, %arg1: i32) -> (i32, i32) {
    %c0_i32 = arith.constant 0 : i32
    %c0_i32_0 = arith.constant 0 : i32
    %c0_i32_1 = arith.constant 0 : i32
    return %c0_i32, %c0_i32_0 : i32, i32
  }
  func.func @transform_7(%arg0: i32, %arg1: i32) -> (i32, i32) {
    %c0_i32 = arith.constant 0 : i32
    %c0_i32_0 = arith.constant 0 : i32
    %c0_i32_1 = arith.constant 0 : i32
    return %c0_i32, %c0_i32_0 : i32, i32
  }
  func.func @transform_8(%arg0: i32, %arg1: i32) -> (i32, i32, i32, i32) {
    %c0_i32 = arith.constant 0 : i32
    %c0_i32_0 = arith.constant 0 : i32
    %c0_i32_1 = arith.constant 0 : i32
    return %arg0, %arg1, %c0_i32, %c0_i32_0 : i32, i32, i32, i32
  }
}

</mosaic_0001>

<llo_original>
// kernel: tpu_custom_call.1
$region0: #{tpu_custom_call.1}
  #allocation0 [shape = 'u32[]', space=smem, size = 0x4, offset = 0x4, fixed_abs, tag = 'smem constant byte address 0x4 - core index']
  #allocation1 [shape = 'u32[72,128]{1,0:T(1,128)}', space=vmem, size = 0x9000, scoped, tag = 'internal scratch']
  #allocation2 [shape = 'f32[14,24,128]{2,1,0:T(8,128)}', space=vmem, size = 0x2a000, scoped, tag = 'scratch operand']
  #allocation3 [shape = 's32[2]{0}', space=sflag, size = 0x8, scoped, tag = 'scratch operand']
  #allocation11 [shape = 's32[]', space=sflag, size = 0x4, offset = 0, fixed_abs, tag = 'sflag constant byte address 0x0 - dummy sync flag']
  #allocation12 [shape = 's32[]', space=sflag, size = 0x4, offset = 0, fixed_abs, tag = 'sflag constant byte address 0x0 - dummy sync flag']
  %s0 = inlined_call_operand.hbm [shape: f32[2,16,16,128], index: 0, kind: input, shape index: {}]
  %s1 = inlined_call_operand.hbm [shape: f32[2,16,16,128], index: 1, kind: input, shape index: {}]
  %s2 = inlined_call_operand.hbm [shape: f32[1152,128], index: 2, kind: input, shape index: {}]
  %s3 = inlined_call_operand.vmem [shape: f32[1,128], index: 3, kind: input, shape index: {}]
  %s4 = inlined_call_operand.vmem [shape: f32[1,128], index: 4, kind: input, shape index: {}]
  %s5 = inlined_call_operand.hbm [shape: f32[1152,128], index: 5, kind: input, shape index: {}]
  %s6 = inlined_call_operand.vmem [shape: f32[1,128], index: 6, kind: input, shape index: {}]
  %s7 = inlined_call_operand.vmem [shape: f32[1,128], index: 7, kind: input, shape index: {}]
  %s8 = inlined_call_operand.hbm [shape: f32[2,16,16,128], index: 8, kind: output, shape index: {}]
  %s9 = sld [smem:[#allocation0]]
  $region81: #{tpu_custom_call.1} parent=0
    _
  %s11 = ssub.s32 1, %s9
  %s12 = scalar_select 0, %s11, %s9
  $region1: #{tpu_custom_call.1} parent=0
    #allocation4 [shape = 'u8[131072]{0}', space=vmem, size = 0x20000, scoped, tag = 'input window, operand 0']
    #allocation5 [shape = 's32[2]{0}', space=sflag, size = 0x8, scoped, tag = 'scoped memory for tpu_custom_call.1']
    #allocation6 [shape = 's32[2]{0}', space=sflag, size = 0x8, scoped, tag = 'scoped memory for tpu_custom_call.1']
    #allocation7 [shape = 'u8[589824]{0}', space=vmem, size = 0x90000, scoped, tag = 'input window, operand 2, single buffered']
    #allocation8 [shape = 's32[1]{0}', space=sflag, size = 0x4, scoped, tag = 'scoped memory for tpu_custom_call.1']
    #allocation9 [shape = 'u8[589824]{0}', space=vmem, size = 0x90000, scoped, tag = 'input window, operand 5, single buffered']
    #allocation10 [shape = 'u8[131072]{0}', space=vmem, size = 0x20000, scoped, tag = 'output window, operand 0']
    %13 = vsyncpa [#allocation5], 0
    %s14 = scalar_lea.sflag [#allocation5], 1
    %15 = vsyncpa %s14, 0
    %16 = vsyncpa [#allocation8], 0
    %17 = vsyncpa [#allocation6], 0
    %s18 = scalar_lea.sflag [#allocation6], 1
    %19 = vsyncpa %s18, 0
    loop: start=0, step=1, limit=6
    $region2: #{tpu_custom_call.1} parent=1 // loop_pre_header
      _
    $region3: #{tpu_custom_call.1} parent=1 // loop_header
      %s21 = sphi 0, %s25
      %p22 = scmp.ge.s32.totalorder %s21, 6
      %s28 = sphi 0, %s40
      %s29 = sphi 0, %s36
      %s30 = sphi 0, %s28
      %s31 = sphi 0, %s29
      %s32 = sphi 0, %s30
      %s33 = sphi 0, %s31
      %s45 = sphi 0, %s47
      %s48 = sphi 0, %s45
      %s49 = sphi 0, %s48
      %s65 = sphi 0, %s49
      %s69 = sphi 0, %s69
      %s71 = sphi 0, %s69
      %s72 = sphi 0, %s71
      %s86 = sphi 0, %s72
      %s90 = sphi 0, %s90
      %s92 = sphi 0, %s90
      %s93 = sphi 0, %s92
      %s107 = sphi 0, %s93
      %s111 = sphi 0, %s111
      %s113 = sphi 0, %s111
      %s114 = sphi 0, %s113
      %s128 = sphi 0, %s114
      %s132 = sphi 0, %s132
      %s134 = sphi 0, %s132
      %s135 = sphi 0, %s134
      %s149 = sphi 0, %s135
      %s153 = sphi 0, %s153
      %s155 = sphi 0, %s153
      %s156 = sphi 0, %s155
      %s170 = sphi 0, %s156
      %s174 = sphi 0, %s174
      %s176 = sphi 0, %s174
      %s177 = sphi 0, %s176
      %s191 = sphi 0, %s177
      %s199 = sphi 0, %s201
      %s202 = sphi 0, %s199
      %s203 = sphi 0, %s202
      %s219 = sphi 0, %s203
    $region4: #{tpu_custom_call.1} parent=1 // loop_header_branch
      %24 = sbr.rel (%p22) target = $region8
    $region5: #{tpu_custom_call.1} parent=1 // loop_body
      %s26 = ssub.s32 %s21, 1
      %s27 = ssub.s32 %s21, 2
      %s34 = sadd.s32 1, %s29
      %p35 = scmp.ge.s32.totalorder %s34, 2
      %s36 = scalar_select %p35, 0, %s34
      %s37 = sadd.s32 1, %s28
      %s38 = scalar_select %p35, %s37, %s28
      %p39 = scmp.ge.s32.totalorder %s38, 2
      %s40 = scalar_select %p39, 0, %s38
      %s41 = ssub.s32 %s28, %s40
      %s42 = ssub.s32 %s29, %s36
      %s43 = sor.u32 %s41, %s42
      %p44 = scmp.eq.s32.totalorder %s43, 0
      %s46 = sadd.s32 %s45, 1
      %s47 = scalar_select %p44, %s45, %s46
      %p50 = pneg %p44
      %p51 = scmp.eq.s32.totalorder %s21, 3
      %p52 = por %p50, %p51
      %p53 = scmp.ne.s32.totalorder %s45, %s48
      %p54 = scmp.eq.s32.totalorder %s21, 0
      %p55 = por %p53, %p54
      %p56 = scmp.ne.s32.totalorder %s45, %s48
      %p57 = scmp.eq.s32.totalorder %s26, 3
      %p58 = por %p56, %p57
      %p59 = scmp.ne.s32.totalorder %s48, %s49
      %p60 = scmp.eq.s32.totalorder %s26, 0
      %p61 = por %p59, %p60
      %p62 = scmp.ne.s32.totalorder %s48, %s49
      %p63 = scmp.eq.s32.totalorder %s27, 3
      %p64 = por %p62, %p63
      %p66 = scmp.ne.s32.totalorder %s49, %s65
      %p67 = scmp.eq.s32.totalorder %s27, 0
      %p68 = por %p66, %p67
      %s70 = sadd.s32 %s69, 1
      %p73 = scmp.eq.s32.totalorder %s21, 3
      %p74 = scmp.ne.s32.totalorder %s69, %s71
      %p75 = scmp.eq.s32.totalorder %s21, 0
      %p76 = por %p74, %p75
      %p77 = scmp.ne.s32.totalorder %s69, %s71
      %p78 = scmp.eq.s32.totalorder %s26, 3
      %p79 = por %p77, %p78
      %p80 = scmp.ne.s32.totalorder %s71, %s72
      %p81 = scmp.eq.s32.totalorder %s26, 0
      %p82 = por %p80, %p81
      %p83 = scmp.ne.s32.totalorder %s71, %s72
      %p84 = scmp.eq.s32.totalorder %s27, 3
      %p85 = por %p83, %p84
      %p87 = scmp.ne.s32.totalorder %s72, %s86
      %p88 = scmp.eq.s32.totalorder %s27, 0
      %p89 = por %p87, %p88
      %s91 = sadd.s32 %s90, 1
      %p94 = scmp.eq.s32.totalorder %s21, 3
      %p95 = scmp.ne.s32.totalorder %s90, %s92
      %p96 = scmp.eq.s32.totalorder %s21, 0
      %p97 = por %p95, %p96
      %p98 = scmp.ne.s32.totalorder %s90, %s92
      %p99 = scmp.eq.s32.totalorder %s26, 3
      %p100 = por %p98, %p99
      %p101 = scmp.ne.s32.totalorder %s92, %s93
      %p102 = scmp.eq.s32.totalorder %s26, 0
      %p103 = por %p101, %p102
      %p104 = scmp.ne.s32.totalorder %s92, %s93
      %p105 = scmp.eq.s32.totalorder %s27, 3
      %p106 = por %p104, %p105
      %p108 = scmp.ne.s32.totalorder %s93, %s107
      %p109 = scmp.eq.s32.totalorder %s27, 0
      %p110 = por %p108, %p109
      %s112 = sadd.s32 %s111, 1
      %p115 = scmp.eq.s32.totalorder %s21, 3
      %p116 = scmp.ne.s32.totalorder %s111, %s113
      %p117 = scmp.eq.s32.totalorder %s21, 0
      %p118 = por %p116, %p117
      %p119 = scmp.ne.s32.totalorder %s111, %s113
      %p120 = scmp.eq.s32.totalorder %s26, 3
      %p121 = por %p119, %p120
      %p122 = scmp.ne.s32.totalorder %s113, %s114
      %p123 = scmp.eq.s32.totalorder %s26, 0
      %p124 = por %p122, %p123
      %p125 = scmp.ne.s32.totalorder %s113, %s114
      %p126 = scmp.eq.s32.totalorder %s27, 3
      %p127 = por %p125, %p126
      %p129 = scmp.ne.s32.totalorder %s114, %s128
      %p130 = scmp.eq.s32.totalorder %s27, 0
      %p131 = por %p129, %p130
      %s133 = sadd.s32 %s132, 1
      %p136 = scmp.eq.s32.totalorder %s21, 3
      %p137 = scmp.ne.s32.totalorder %s132, %s134
      %p138 = scmp.eq.s32.totalorder %s21, 0
      %p139 = por %p137, %p138
      %p140 = scmp.ne.s32.totalorder %s132, %s134
      %p141 = scmp.eq.s32.totalorder %s26, 3
      %p142 = por %p140, %p141
      %p143 = scmp.ne.s32.totalorder %s134, %s135
      %p144 = scmp.eq.s32.totalorder %s26, 0
      %p145 = por %p143, %p144
      %p146 = scmp.ne.s32.totalorder %s134, %s135
      %p147 = scmp.eq.s32.totalorder %s27, 3
      %p148 = por %p146, %p147
      %p150 = scmp.ne.s32.totalorder %s135, %s149
      %p151 = scmp.eq.s32.totalorder %s27, 0
      %p152 = por %p150, %p151
      %s154 = sadd.s32 %s153, 1
      %p157 = scmp.eq.s32.totalorder %s21, 3
      %p158 = scmp.ne.s32.totalorder %s153, %s155
      %p159 = scmp.eq.s32.totalorder %s21, 0
      %p160 = por %p158, %p159
      %p161 = scmp.ne.s32.totalorder %s153, %s155
      %p162 = scmp.eq.s32.totalorder %s26, 3
      %p163 = por %p161, %p162
      %p164 = scmp.ne.s32.totalorder %s155, %s156
      %p165 = scmp.eq.s32.totalorder %s26, 0
      %p166 = por %p164, %p165
      %p167 = scmp.ne.s32.totalorder %s155, %s156
      %p168 = scmp.eq.s32.totalorder %s27, 3
      %p169 = por %p167, %p168
      %p171 = scmp.ne.s32.totalorder %s156, %s170
      %p172 = scmp.eq.s32.totalorder %s27, 0
      %p173 = por %p171, %p172
      %s175 = sadd.s32 %s174, 1
      %p178 = scmp.eq.s32.totalorder %s21, 3
      %p179 = scmp.ne.s32.totalorder %s174, %s176
      %p180 = scmp.eq.s32.totalorder %s21, 0
      %p181 = por %p179, %p180
      %p182 = scmp.ne.s32.totalorder %s174, %s176
      %p183 = scmp.eq.s32.totalorder %s26, 3
      %p184 = por %p182, %p183
      %p185 = scmp.ne.s32.totalorder %s176, %s177
      %p186 = scmp.eq.s32.totalorder %s26, 0
      %p187 = por %p185, %p186
      %p188 = scmp.ne.s32.totalorder %s176, %s177
      %p189 = scmp.eq.s32.totalorder %s27, 3
      %p190 = por %p188, %p189
      %p192 = scmp.ne.s32.totalorder %s177, %s191
      %p193 = scmp.eq.s32.totalorder %s27, 0
      %p194 = por %p192, %p193
      %s195 = ssub.s32 %s28, %s40
      %s196 = ssub.s32 %s29, %s36
      %s197 = sor.u32 %s195, %s196
      %p198 = scmp.eq.s32.totalorder %s197, 0
      %s200 = sadd.s32 %s199, 1
      %s201 = scalar_select %p198, %s199, %s200
      %p204 = pneg %p198
      %p205 = scmp.eq.s32.totalorder %s21, 3
      %p206 = por %p204, %p205
      %p207 = scmp.ne.s32.totalorder %s199, %s202
      %p208 = scmp.eq.s32.totalorder %s21, 0
      %p209 = por %p207, %p208
      %p210 = scmp.ne.s32.totalorder %s199, %s202
      %p211 = scmp.eq.s32.totalorder %s26, 3
      %p212 = por %p210, %p211
      %p213 = scmp.ne.s32.totalorder %s202, %s203
      %p214 = scmp.eq.s32.totalorder %s26, 0
      %p215 = por %p213, %p214
      %p216 = scmp.ne.s32.totalorder %s202, %s203
      %p217 = scmp.eq.s32.totalorder %s27, 3
      %p218 = por %p216, %p217
      %p220 = scmp.ne.s32.totalorder %s203, %s219
      %p221 = scmp.eq.s32.totalorder %s27, 0
      %p222 = por %p220, %p221
      %p223 = scmp.le.s32.totalorder 1, %s21
      %p224 = scmp.lt.s32.totalorder %s21, 5
      %p225 = pnand %p223, %p224
      %p226 = pneg %p225
      // Predicated region
      $region9: #{tpu_custom_call.1} parent=5 // pred_check
        _
      $region10: #{tpu_custom_call.1} parent=5 // pred_check_branch
        %228 = sbr.rel (%p225) target = $region12
      $region11: #{tpu_custom_call.1} parent=5 // pred_region
        %s229 = ssub.s32 %s21, 1
        // Predicated region
        $region13: #{tpu_custom_call.1} parent=11 // pred_check
          %p230 = pneg %p82
        $region14: #{tpu_custom_call.1} parent=11 // pred_check_branch
          %232 = sbr.rel (%p230) target = $region16
        $region15: #{tpu_custom_call.1} parent=11 // pred_region
          %234 = vsyncadd [#allocation8], 0
          %s235 = sshll.u32 %s2, 4
          %s236 = int_to_ptr.hbm [resolvable:$true] %s235
          %s237 = sshll.u32 [#allocation7], 4
          %s238 = int_to_ptr.vmem [resolvable:$true] %s237
          %243 = dma.hbm_to_vmem [thread:$0]  %s236, 18432, %s238, [#allocation8], 128, 128, 8
        $region16: #{tpu_custom_call.1} parent=11 // pred_fallthru
          _
        // Predicated region
        $region17: #{tpu_custom_call.1} parent=11 // pred_check
          %p244 = pneg %p103
        $region18: #{tpu_custom_call.1} parent=11 // pred_check_branch
          %246 = sbr.rel (%p244) target = $region20
        $region19: #{tpu_custom_call.1} parent=11 // pred_region
          _
        $region20: #{tpu_custom_call.1} parent=11 // pred_fallthru
          _
        // Predicated region
        $region21: #{tpu_custom_call.1} parent=11 // pred_check
          %p247 = pneg %p124
        $region22: #{tpu_custom_call.1} parent=11 // pred_check_branch
          %249 = sbr.rel (%p247) target = $region24
        $region23: #{tpu_custom_call.1} parent=11 // pred_region
          _
        $region24: #{tpu_custom_call.1} parent=11 // pred_fallthru
          _
        // Predicated region
        $region25: #{tpu_custom_call.1} parent=11 // pred_check
          %p250 = pneg %p145
        $region26: #{tpu_custom_call.1} parent=11 // pred_check_branch
          %252 = sbr.rel (%p250) target = $region28
        $region27: #{tpu_custom_call.1} parent=11 // pred_region
          %254 = vsyncadd [#allocation8], 0
          %s255 = sshll.u32 %s5, 4
          %s256 = int_to_ptr.hbm [resolvable:$true] %s255
          %s257 = sshll.u32 [#allocation9], 4
          %s258 = int_to_ptr.vmem [resolvable:$true] %s257
          %263 = dma.hbm_to_vmem [thread:$0]  %s256, 18432, %s258, [#allocation8], 128, 128, 8
        $region28: #{tpu_custom_call.1} parent=11 // pred_fallthru
          _
        // Predicated region
        $region29: #{tpu_custom_call.1} parent=11 // pred_check
          %p264 = pneg %p166
        $region30: #{tpu_custom_call.1} parent=11 // pred_check_branch
          %266 = sbr.rel (%p264) target = $region32
        $region31: #{tpu_custom_call.1} parent=11 // pred_region
          _
        $region32: #{tpu_custom_call.1} parent=11 // pred_fallthru
          _
        // Predicated region
        $region33: #{tpu_custom_call.1} parent=11 // pred_check
          %p267 = pneg %p187
        $region34: #{tpu_custom_call.1} parent=11 // pred_check_branch
          %269 = sbr.rel (%p267) target = $region36
        $region35: #{tpu_custom_call.1} parent=11 // pred_region
          _
        $region36: #{tpu_custom_call.1} parent=11 // pred_fallthru
          _
      $region12: #{tpu_custom_call.1} parent=5 // pred_fallthru
        _
      %p270 = scmp.lt.s32.totalorder %s21, 4
      // Predicated region
      $region37: #{tpu_custom_call.1} parent=5 // pred_check
        %p271 = pneg %p270
      $region38: #{tpu_custom_call.1} parent=5 // pred_check_branch
        %273 = sbr.rel (%p271) target = $region40
      $region39: #{tpu_custom_call.1} parent=5 // pred_region
        // Predicated region
        $region41: #{tpu_custom_call.1} parent=39 // pred_check
          %p274 = pneg %p55
        $region42: #{tpu_custom_call.1} parent=39 // pred_check_branch
          %276 = sbr.rel (%p274) target = $region44
        $region43: #{tpu_custom_call.1} parent=39 // pred_region
          %s277 = sand.u32 %s45, 1
          %s278 = scalar_lea.sflag [#allocation5], %s277
          %s279 = sand.u32 %s45, 1
          %s280 = smul.addr %s279, 128
          %s281 = scalar_lea.vmem [#allocation4], %s280
          %s282 = smul.u32 8, %s29
          %284 = vsyncadd %s278, 0
          %s285 = smul.addr %s282, 2
          %s286 = smul.addr %s28, 32
          %s287 = sadd.s32 %s285, %s286
          %s288 = smul.addr %s287, 8
          %s289 = scalar_lea.hbm %s0, %s288
          %s290 = sshll.u32 %s289, 4
          %s291 = int_to_ptr.hbm [resolvable:$true] %s290
          %s292 = sshll.u32 %s281, 4
          %s293 = int_to_ptr.vmem [resolvable:$true] %s292
          %298 = dma.hbm_to_vmem [thread:$0]  %s291, 2048, %s293, %s278, 128, 128, 8
        $region44: #{tpu_custom_call.1} parent=39 // pred_fallthru
          _
      $region40: #{tpu_custom_call.1} parent=5 // pred_fallthru
        _
      %p299 = scmp.le.s32.totalorder 1, %s21
      %p300 = scmp.lt.s32.totalorder %s21, 5
      %p301 = pnand %p299, %p300
      %p302 = pneg %p301
      // Predicated region
      $region45: #{tpu_custom_call.1} parent=5 // pred_check
        _
      $region46: #{tpu_custom_call.1} parent=5 // pred_check_branch
        %304 = sbr.rel (%p301) target = $region48
      $region47: #{tpu_custom_call.1} parent=5 // pred_region
        %s305 = ssub.s32 %s21, 1
        %s306 = sand.u32 %s48, 1
        %s307 = scalar_lea.sflag [#allocation5], %s306
        %s308 = sand.u32 %s48, 1
        %s309 = smul.addr %s308, 128
        %s310 = scalar_lea.vmem [#allocation4], %s309
        // Predicated region
        $region49: #{tpu_custom_call.1} parent=47 // pred_check
          %p311 = pneg %p61
        $region50: #{tpu_custom_call.1} parent=47 // pred_check_branch
          %313 = sbr.rel (%p311) target = $region52
        $region51: #{tpu_custom_call.1} parent=47 // pred_region
          %315 = dma.done %s307, 2048
        $region52: #{tpu_custom_call.1} parent=47 // pred_fallthru
          _
        // Predicated region
        $region53: #{tpu_custom_call.1} parent=47 // pred_check
          %p316 = pneg %p82
        $region54: #{tpu_custom_call.1} parent=47 // pred_check_branch
          %318 = sbr.rel (%p316) target = $region56
        $region55: #{tpu_custom_call.1} parent=47 // pred_region
          %320 = dma.done [#allocation8], 18432
        $region56: #{tpu_custom_call.1} parent=47 // pred_fallthru
          _
        // Predicated region
        $region57: #{tpu_custom_call.1} parent=47 // pred_check
          %p321 = pneg %p145
        $region58: #{tpu_custom_call.1} parent=47 // pred_check_branch
          %323 = sbr.rel (%p321) target = $region60
        $region59: #{tpu_custom_call.1} parent=47 // pred_region
          %325 = dma.done [#allocation8], 18432
        $region60: #{tpu_custom_call.1} parent=47 // pred_fallthru
          _
        %s326 = sand.u32 %s48, 1
        %s327 = scalar_lea.sflag [#allocation5], %s326
        %s328 = sand.u32 %s48, 1
        %s329 = smul.addr %s328, 128
        %s330 = scalar_lea.vmem [#allocation4], %s329
        %p331 = pneg %p61
        %p332 = pneg %p58
        %p333 = pneg %p82
        %p334 = pneg %p79
        %p335 = pneg %p103
        %p336 = pneg %p100
        %p337 = pneg %p124
        %p338 = pneg %p121
        %p339 = pneg %p145
        %p340 = pneg %p142
        %p341 = pneg %p166
        %p342 = pneg %p163
        %p343 = pneg %p187
        %p344 = pneg %p184
        %p345 = pneg %p215
        %p346 = pneg %p212
        %s347 = sand.u32 %s202, 1
        %s348 = scalar_lea.sflag [#allocation6], %s347
        %s349 = sand.u32 %s202, 1
        %s350 = smul.addr %s349, 128
        %s351 = scalar_lea.vmem [#allocation10], %s350
        %s352 = smul.u32 8, %s31
        %s353 = smul.u32 8, %s31
        %s354 = smul.u32 %s31, 8
        %355 = vst [vmem:[#allocation2] sm:$0xff] 0.0
        %356 = vst [vmem:[#allocation2 + $0x8] sm:$0xff] 0.0
        %357 = vst [vmem:[#allocation2 + $0x10] sm:$0xff] 0.0
        %s358 = scalar_lea.vmem [#allocation2], 312
        %359 = vst [vmem:[%s358] sm:$0xff] 0.0
        %360 = vst [vmem:[%s358 + $0x8] sm:$0xff] 0.0
        %361 = vst [vmem:[%s358 + $0x10] sm:$0xff] 0.0
        %362 = vst [vmem:[#allocation2 + $0x10] sm:$0xff] 0.0
        %363 = vst [vmem:[#allocation2 + $0x28] sm:$0xff] 0.0
        %364 = vst [vmem:[#allocation2 + $0x40] sm:$0xff] 0.0
        %365 = vst [vmem:[#allocation2 + $0x58] sm:$0xff] 0.0
        %366 = vst [vmem:[#allocation2 + $0x70] sm:$0xff] 0.0
        %367 = vst [vmem:[#allocation2 + $0x88] sm:$0xff] 0.0
        %368 = vst [vmem:[#allocation2 + $0xa0] sm:$0xff] 0.0
        %369 = vst [vmem:[#allocation2 + $0xb8] sm:$0xff] 0.0
        %370 = vst [vmem:[#allocation2 + $0xd0] sm:$0xff] 0.0
        %371 = vst [vmem:[#allocation2 + $0xe8] sm:$0xff] 0.0
        %372 = vst [vmem:[#allocation2 + $0x100] sm:$0xff] 0.0
        %373 = vst [vmem:[#allocation2 + $0x118] sm:$0xff] 0.0
        %374 = vst [vmem:[#allocation2 + $0x130] sm:$0xff] 0.0
        %375 = vst [vmem:[#allocation2 + $0x148] sm:$0xff] 0.0
        %s376 = ssub.s32 %s354, 2
        %p377 = scmp.gt.s32.totalorder %s376, 0
        %s378 = scalar_select %p377, %s376, 0
        %s379 = sadd.s32 %s354, 8
        %p380 = scmp.lt.s32.totalorder %s379, 14
        %s381 = scalar_select %p380, %s379, 14
        %s382 = smul.u32 %s378, 16
        %s383 = smul.u32 %s30, 256
        %s384 = sadd.s32 %s382, %s383
        %s385 = scalar_lea.hbm %s1, %s384
        %s386 = scalar_lea.vmem [#allocation2], 24
        %s387 = sshll.u32 %s385, 4
        %s388 = int_to_ptr.hbm [resolvable:$true] %s387
        %s389 = sshll.u32 %s386, 4
        %s390 = int_to_ptr.vmem [resolvable:$true] %s389
        %394 = dma.hbm_to_vmem [thread:$0]  %s388, 512, %s390, [#allocation3], 256, 384, 16
        %s395 = smul.u32 %s381, 16
        %s396 = sadd.s32 %s395, %s383
        %s397 = scalar_lea.hbm %s1, %s396
        %s398 = scalar_lea.vmem [#allocation2], 264
        %s399 = scalar_lea.sflag [#allocation3], 1
        %s400 = sshll.u32 %s397, 4
        %s401 = int_to_ptr.hbm [resolvable:$true] %s400
        %s402 = sshll.u32 %s398, 4
        %s403 = int_to_ptr.vmem [resolvable:$true] %s402
        %407 = dma.hbm_to_vmem [thread:$0]  %s401, 512, %s403, %s399, 256, 384, 16
        %v408 = vld [vmem:[%s310] sm:$0xff]
        %v409 = vld [vmem:[%s310 + $0x8] sm:$0xff]
        %v410 = vld [vmem:[%s310 + $0x10] sm:$0xff]
        %v411 = vld [vmem:[%s310 + $0x18] sm:$0xff]
        %v412 = vld [vmem:[%s310 + $0x20] sm:$0xff]
        %v413 = vld [vmem:[%s310 + $0x28] sm:$0xff]
        %v414 = vld [vmem:[%s310 + $0x30] sm:$0xff]
        %v415 = vld [vmem:[%s310 + $0x38] sm:$0xff]
        %v416 = vld [vmem:[%s310 + $0x40] sm:$0xff]
        %v417 = vld [vmem:[%s310 + $0x48] sm:$0xff]
        %v418 = vld [vmem:[%s310 + $0x50] sm:$0xff]
        %v419 = vld [vmem:[%s310 + $0x58] sm:$0xff]
        %v420 = vld [vmem:[%s310 + $0x60] sm:$0xff]
        %v421 = vld [vmem:[%s310 + $0x68] sm:$0xff]
        %v422 = vld [vmem:[%s310 + $0x70] sm:$0xff]
        %v423 = vld [vmem:[%s310 + $0x78] sm:$0xff]
        %s424 = scalar_lea.vmem [#allocation2], 72
        %425 = vst [vmem:[%s424] sm:$0xff] %v408
        %426 = vst [vmem:[%s424 + $0x8] sm:$0xff] %v409
        %427 = vst [vmem:[%s424 + $0x18] sm:$0xff] %v410
        %428 = vst [vmem:[%s424 + $0x20] sm:$0xff] %v411
        %429 = vst [vmem:[%s424 + $0x30] sm:$0xff] %v412
        %430 = vst [vmem:[%s424 + $0x38] sm:$0xff] %v413
        %431 = vst [vmem:[%s424 + $0x48] sm:$0xff] %v414
        %432 = vst [vmem:[%s424 + $0x50] sm:$0xff] %v415
        %433 = vst [vmem:[%s424 + $0x60] sm:$0xff] %v416
        %434 = vst [vmem:[%s424 + $0x68] sm:$0xff] %v417
        %435 = vst [vmem:[%s424 + $0x78] sm:$0xff] %v418
        %436 = vst [vmem:[%s424 + $0x80] sm:$0xff] %v419
        %437 = vst [vmem:[%s424 + $0x90] sm:$0xff] %v420
        %438 = vst [vmem:[%s424 + $0x98] sm:$0xff] %v421
        %439 = vst [vmem:[%s424 + $0xa8] sm:$0xff] %v422
        %440 = vst [vmem:[%s424 + $0xb0] sm:$0xff] %v423
        %s441 = smul.u32 2, 16
        %s442 = smul.u32 %s441, 1
        %s443 = sshll.u32 %s442, 4
        %444 = dma.done [#allocation3], %s443
        %s445 = sshll.u32 %s442, 4
        %446 = dma.done %s399, %s445
        %p447 = scmp.eq.s32.totalorder %s31, 0
        // Predicated region
        $region61: #{tpu_custom_call.1} parent=47 // pred_check
          %p448 = pneg %p447
        $region62: #{tpu_custom_call.1} parent=47 // pred_check_branch
          %450 = sbr.rel (%p448) target = $region64
        $region63: #{tpu_custom_call.1} parent=47 // pred_region
          %451 = vst [vmem:[%s386] sm:$0xff] 0.0
          %452 = vst [vmem:[%s386 + $0x8] sm:$0xff] 0.0
          %453 = vst [vmem:[%s386 + $0x10] sm:$0xff] 0.0
          %454 = vst [vmem:[%s386 + $0x18] sm:$0xff] 0.0
          %455 = vst [vmem:[%s386 + $0x20] sm:$0xff] 0.0
          %456 = vst [vmem:[%s386 + $0x28] sm:$0xff] 0.0
        $region64: #{tpu_custom_call.1} parent=47 // pred_fallthru
          _
        %p457 = scmp.eq.s32.totalorder %s31, 1
        // Predicated region
        $region65: #{tpu_custom_call.1} parent=47 // pred_check
          %p458 = pneg %p457
        $region66: #{tpu_custom_call.1} parent=47 // pred_check_branch
          %460 = sbr.rel (%p458) target = $region68
        $region67: #{tpu_custom_call.1} parent=47 // pred_region
          %461 = vst [vmem:[%s398] sm:$0xff] 0.0
          %462 = vst [vmem:[%s398 + $0x8] sm:$0xff] 0.0
          %463 = vst [vmem:[%s398 + $0x10] sm:$0xff] 0.0
          %464 = vst [vmem:[%s398 + $0x18] sm:$0xff] 0.0
          %465 = vst [vmem:[%s398 + $0x20] sm:$0xff] 0.0
          %466 = vst [vmem:[%s398 + $0x28] sm:$0xff] 0.0
        $region68: #{tpu_custom_call.1} parent=47 // pred_fallthru
          _
        %v467 = vld [vmem:[#allocation2 + $0x10] sm:$0xff]
        %v468 = vld [vmem:[#allocation2 + $0x18] sm:$0xff]
        %v469 = vld [vmem:[#allocation2 + $0x20] sm:$0xff]
        %v470 = vld [vmem:[#allocation2 + $0x28] sm:$0xff]
        %v471 = vld [vmem:[#allocation2 + $0x30] sm:$0xff]
        %v472 = vld [vmem:[#allocation2 + $0x38] sm:$0xff]
        %v473 = vld [vmem:[#allocation2 + $0x40] sm:$0xff]
        %v474 = vld [vmem:[#allocation2 + $0x48] sm:$0xff]
        %v475 = vld [vmem:[#allocation2 + $0x50] sm:$0xff]
        %v476 = vld [vmem:[#allocation2 + $0x58] sm:$0xff]
        %v477 = vld [vmem:[#allocation2 + $0x60] sm:$0xff]
        %v478 = vld [vmem:[#allocation2 + $0x68] sm:$0xff]
        %v479 = vld [vmem:[#allocation2 + $0x70] sm:$0xff]
        %v480 = vld [vmem:[#allocation2 + $0x78] sm:$0xff]
        %v481 = vld [vmem:[#allocation2 + $0x80] sm:$0xff]
        %v482 = vld [vmem:[#allocation2 + $0x88] sm:$0xff]
        %v483 = vld [vmem:[#allocation2 + $0x90] sm:$0xff]
        %v484 = vld [vmem:[#allocation2 + $0x98] sm:$0xff]
        %v485 = vld [vmem:[#allocation2 + $0xa0] sm:$0xff]
        %v486 = vld [vmem:[#allocation2 + $0xa8] sm:$0xff]
        %v487 = vld [vmem:[#allocation2 + $0xb0] sm:$0xff]
        %v488 = vld [vmem:[#allocation2 + $0xb8] sm:$0xff]
        %v489 = vld [vmem:[#allocation2 + $0xc0] sm:$0xff]
        %v490 = vld [vmem:[#allocation2 + $0xc8] sm:$0xff]
        %v491 = vld [vmem:[#allocation2 + $0xd0] sm:$0xff]
        %v492 = vld [vmem:[#allocation2 + $0xd8] sm:$0xff]
        %v493 = vld [vmem:[#allocation2 + $0xe0] sm:$0xff]
        %v494 = vld [vmem:[#allocation2 + $0xe8] sm:$0xff]
        %v495 = vld [vmem:[#allocation2 + $0xf0] sm:$0xff]
        %v496 = vld [vmem:[#allocation2 + $0xf8] sm:$0xff]
        %v497 = vld [vmem:[#allocation2 + $0x100] sm:$0xff]
        %v498 = vld [vmem:[#allocation2 + $0x108] sm:$0xff]
        %v499 = vld [vmem:[#allocation2 + $0x110] sm:$0xff]
        %v500 = vld [vmem:[#allocation2 + $0x118] sm:$0xff]
        %v501 = vld [vmem:[#allocation2 + $0x120] sm:$0xff]
        %v502 = vld [vmem:[#allocation2 + $0x128] sm:$0xff]
        %v503 = vld [vmem:[#allocation2 + $0x130] sm:$0xff]
        %v504 = vld [vmem:[#allocation2 + $0x138] sm:$0xff]
        %vm535 = vcmask 1046528
        %v536 = vrot.slane %v468, 1
        %v537 = vrot.slane %v469, 1
        %v538 = vsel %vm535, %v536, %v537
        %v539 = vrot.slane %v470, 1
        %v540 = vsel %vm535, %v537, %v539
        %v541 = vrot.slane %v471, 1
        %v542 = vsel %vm535, %v539, %v541
        %v543 = vrot.slane %v472, 1
        %v544 = vsel %vm535, %v541, %v543
        %v545 = vrot.slane %v473, 1
        %v546 = vsel %vm535, %v543, %v545
        %v547 = vrot.slane %v474, 1
        %v548 = vsel %vm535, %v545, %v547
        %v549 = vrot.slane %v475, 1
        %v550 = vsel %vm535, %v547, %v549
        %v551 = vrot.slane %v476, 1
        %v552 = vsel %vm535, %v549, %v551
        %v553 = vrot.slane %v477, 1
        %v554 = vsel %vm535, %v551, %v553
        %v555 = vrot.slane %v478, 1
        %v556 = vsel %vm535, %v553, %v555
        %v557 = vrot.slane %v479, 1
        %v558 = vsel %vm535, %v555, %v557
        %v559 = vrot.slane %v480, 1
        %v560 = vsel %vm535, %v557, %v559
        %v561 = vrot.slane %v481, 1
        %v562 = vsel %vm535, %v559, %v561
        %v563 = vrot.slane %v482, 1
        %v564 = vsel %vm535, %v561, %v563
        %v565 = vrot.slane %v483, 1
        %v566 = vsel %vm535, %v563, %v565
        %v567 = vrot.slane %v484, 1
        %v568 = vsel %vm535, %v565, %v567
        %v569 = vrot.slane %v485, 1
        %v570 = vsel %vm535, %v567, %v569
        %v571 = vrot.slane %v486, 1
        %v572 = vsel %vm535, %v569, %v571
        %v573 = vrot.slane %v487, 1
        %v574 = vsel %vm535, %v571, %v573
        %v575 = vrot.slane %v488, 1
        %v576 = vsel %vm535, %v573, %v575
        %v577 = vrot.slane %v489, 1
        %v578 = vsel %vm535, %v575, %v577
        %v579 = vrot.slane %v490, 1
        %v580 = vsel %vm535, %v577, %v579
        %v581 = vrot.slane %v491, 1
        %v582 = vsel %vm535, %v579, %v581
        %v583 = vrot.slane %v492, 1
        %v584 = vsel %vm535, %v581, %v583
        %v585 = vrot.slane %v493, 1
        %v586 = vsel %vm535, %v583, %v585
        %v587 = vrot.slane %v494, 1
        %v588 = vsel %vm535, %v585, %v587
        %v589 = vrot.slane %v495, 1
        %v590 = vsel %vm535, %v587, %v589
        %v591 = vrot.slane %v496, 1
        %v592 = vsel %vm535, %v589, %v591
        %v593 = vrot.slane %v497, 1
        %v594 = vsel %vm535, %v591, %v593
        %vm596 = vcmask 1045504
        %v597 = vrot.slane %v468, 2
        %v598 = vrot.slane %v469, 2
        %v599 = vsel %vm596, %v597, %v598
        %v600 = vrot.slane %v470, 2
        %v601 = vsel %vm596, %v598, %v600
        %v602 = vrot.slane %v471, 2
        %v603 = vsel %vm596, %v600, %v602
        %v604 = vrot.slane %v472, 2
        %v605 = vsel %vm596, %v602, %v604
        %v606 = vrot.slane %v473, 2
        %v607 = vsel %vm596, %v604, %v606
        %v608 = vrot.slane %v474, 2
        %v609 = vsel %vm596, %v606, %v608
        %v610 = vrot.slane %v475, 2
        %v611 = vsel %vm596, %v608, %v610
        %v612 = vrot.slane %v476, 2
        %v613 = vsel %vm596, %v610, %v612
        %v614 = vrot.slane %v477, 2
        %v615 = vsel %vm596, %v612, %v614
        %v616 = vrot.slane %v478, 2
        %v617 = vsel %vm596, %v614, %v616
        %v618 = vrot.slane %v479, 2
        %v619 = vsel %vm596, %v616, %v618
        %v620 = vrot.slane %v480, 2
        %v621 = vsel %vm596, %v618, %v620
        %v622 = vrot.slane %v481, 2
        %v623 = vsel %vm596, %v620, %v622
        %v624 = vrot.slane %v482, 2
        %v625 = vsel %vm596, %v622, %v624
        %v626 = vrot.slane %v483, 2
        %v627 = vsel %vm596, %v624, %v626
        %v628 = vrot.slane %v484, 2
        %v629 = vsel %vm596, %v626, %v628
        %v630 = vrot.slane %v485, 2
        %v631 = vsel %vm596, %v628, %v630
        %v632 = vrot.slane %v486, 2
        %v633 = vsel %vm596, %v630, %v632
        %v634 = vrot.slane %v487, 2
        %v635 = vsel %vm596, %v632, %v634
        %v636 = vrot.slane %v488, 2
        %v637 = vsel %vm596, %v634, %v636
        %v638 = vrot.slane %v489, 2
        %v639 = vsel %vm596, %v636, %v638
        %v640 = vrot.slane %v490, 2
        %v641 = vsel %vm596, %v638, %v640
        %v642 = vrot.slane %v491, 2
        %v643 = vsel %vm596, %v640, %v642
        %v644 = vrot.slane %v492, 2
        %v645 = vsel %vm596, %v642, %v644
        %v646 = vrot.slane %v493, 2
        %v647 = vsel %vm596, %v644, %v646
        %v648 = vrot.slane %v494, 2
        %v649 = vsel %vm596, %v646, %v648
        %v650 = vrot.slane %v495, 2
        %v651 = vsel %vm596, %v648, %v650
        %v652 = vrot.slane %v496, 2
        %v653 = vsel %vm596, %v650, %v652
        %v654 = vrot.slane %v497, 2
        %v655 = vsel %vm596, %v652, %v654
        %v656 = vrot.slane %v498, 2
        %v657 = vsel %vm596, %v654, %v656
        %v660 = vrot.slane %v498, 1
        %v661 = vsel %vm535, %v593, %v660
        %v662 = vrot.slane %v499, 1
        %v663 = vsel %vm535, %v660, %v662
        %v664 = vrot.slane %v500, 1
        %v665 = vsel %vm535, %v662, %v664
        %v667 = vrot.slane %v499, 2
        %v668 = vsel %vm596, %v656, %v667
        %v669 = vrot.slane %v500, 2
        %v670 = vsel %vm596, %v667, %v669
        %v671 = vrot.slane %v501, 2
        %v672 = vsel %vm596, %v669, %v671
        %v675 = vrot.slane %v501, 1
        %v676 = vsel %vm535, %v664, %v675
        %v677 = vrot.slane %v502, 1
        %v678 = vsel %vm535, %v675, %v677
        %v679 = vrot.slane %v503, 1
        %v680 = vsel %vm535, %v677, %v679
        %v682 = vrot.slane %v502, 2
        %v683 = vsel %vm596, %v671, %v682
        %v684 = vrot.slane %v503, 2
        %v685 = vsel %vm596, %v682, %v684
        %v686 = vrot.slane %v504, 2
        %v687 = vsel %vm596, %v684, %v686
        %v688 = vld [vmem:[#allocation7] sm:$0xff]
        %v689 = vld [vmem:[#allocation7 + $0x8] sm:$0xff]
        %v690 = vld [vmem:[#allocation7 + $0x10] sm:$0xff]
        %v691 = vld [vmem:[#allocation7 + $0x18] sm:$0xff]
        %v692 = vld [vmem:[#allocation7 + $0x20] sm:$0xff]
        %v693 = vld [vmem:[#allocation7 + $0x28] sm:$0xff]
        %v694 = vld [vmem:[#allocation7 + $0x30] sm:$0xff]
        %v695 = vld [vmem:[#allocation7 + $0x38] sm:$0xff]
        %v696 = vld [vmem:[#allocation7 + $0x40] sm:$0xff]
        %v697 = vld [vmem:[#allocation7 + $0x48] sm:$0xff]
        %v698 = vld [vmem:[#allocation7 + $0x50] sm:$0xff]
        %v699 = vld [vmem:[#allocation7 + $0x58] sm:$0xff]
        %v700 = vld [vmem:[#allocation7 + $0x60] sm:$0xff]
        %v701 = vld [vmem:[#allocation7 + $0x68] sm:$0xff]
        %v702 = vld [vmem:[#allocation7 + $0x70] sm:$0xff]
        %v703 = vld [vmem:[#allocation7 + $0x78] sm:$0xff]
        %v704 = vld [vmem:[#allocation7 + $0x80] sm:$0xff]
        %v705 = vld [vmem:[#allocation7 + $0x88] sm:$0xff]
        %v706 = vld [vmem:[#allocation7 + $0x90] sm:$0xff]
        %v707 = vld [vmem:[#allocation7 + $0x98] sm:$0xff]
        %v708 = vld [vmem:[#allocation7 + $0xa0] sm:$0xff]
        %v709 = vld [vmem:[#allocation7 + $0xa8] sm:$0xff]
        %v710 = vld [vmem:[#allocation7 + $0xb0] sm:$0xff]
        %v711 = vld [vmem:[#allocation7 + $0xb8] sm:$0xff]
        %v712 = vld [vmem:[#allocation7 + $0xc0] sm:$0xff]
        %v713 = vld [vmem:[#allocation7 + $0xc8] sm:$0xff]
        %v714 = vld [vmem:[#allocation7 + $0xd0] sm:$0xff]
        %v715 = vld [vmem:[#allocation7 + $0xd8] sm:$0xff]
        %v716 = vld [vmem:[#allocation7 + $0xe0] sm:$0xff]
        %v717 = vld [vmem:[#allocation7 + $0xe8] sm:$0xff]
        %v718 = vld [vmem:[#allocation7 + $0xf0] sm:$0xff]
        %v719 = vld [vmem:[#allocation7 + $0xf8] sm:$0xff]
        %v720 = vld [vmem:[#allocation7 + $0x100] sm:$0xff]
        %v721 = vld [vmem:[#allocation7 + $0x108] sm:$0xff]
        %v722 = vld [vmem:[#allocation7 + $0x110] sm:$0xff]
        %v723 = vld [vmem:[#allocation7 + $0x118] sm:$0xff]
        %v724 = vld [vmem:[#allocation7 + $0x120] sm:$0xff]
        %v725 = vld [vmem:[#allocation7 + $0x128] sm:$0xff]
        %v726 = vld [vmem:[#allocation7 + $0x130] sm:$0xff]
        %v727 = vld [vmem:[#allocation7 + $0x138] sm:$0xff]
        %v728 = vld [vmem:[#allocation7 + $0x140] sm:$0xff]
        %v729 = vld [vmem:[#allocation7 + $0x148] sm:$0xff]
        %v730 = vld [vmem:[#allocation7 + $0x150] sm:$0xff]
        %v731 = vld [vmem:[#allocation7 + $0x158] sm:$0xff]
        %v732 = vld [vmem:[#allocation7 + $0x160] sm:$0xff]
        %v733 = vld [vmem:[#allocation7 + $0x168] sm:$0xff]
        %v734 = vld [vmem:[#allocation7 + $0x170] sm:$0xff]
        %v735 = vld [vmem:[#allocation7 + $0x178] sm:$0xff]
        %v736 = vld [vmem:[#allocation7 + $0x180] sm:$0xff]
        %v737 = vld [vmem:[#allocation7 + $0x188] sm:$0xff]
        %v738 = vld [vmem:[#allocation7 + $0x190] sm:$0xff]
        %v739 = vld [vmem:[#allocation7 + $0x198] sm:$0xff]
        %v740 = vld [vmem:[#allocation7 + $0x1a0] sm:$0xff]
        %v741 = vld [vmem:[#allocation7 + $0x1a8] sm:$0xff]
        %v742 = vld [vmem:[#allocation7 + $0x1b0] sm:$0xff]
        %v743 = vld [vmem:[#allocation7 + $0x1b8] sm:$0xff]
        %v744 = vld [vmem:[#allocation7 + $0x1c0] sm:$0xff]
        %v745 = vld [vmem:[#allocation7 + $0x1c8] sm:$0xff]
        %v746 = vld [vmem:[#allocation7 + $0x1d0] sm:$0xff]
        %v747 = vld [vmem:[#allocation7 + $0x1d8] sm:$0xff]
        %v748 = vld [vmem:[#allocation7 + $0x1e0] sm:$0xff]
        %v749 = vld [vmem:[#allocation7 + $0x1e8] sm:$0xff]
        %v750 = vld [vmem:[#allocation7 + $0x1f0] sm:$0xff]
        %v751 = vld [vmem:[#allocation7 + $0x1f8] sm:$0xff]
        %v752 = vld [vmem:[#allocation7 + $0x200] sm:$0xff]
        %v753 = vld [vmem:[#allocation7 + $0x208] sm:$0xff]
        %v754 = vld [vmem:[#allocation7 + $0x210] sm:$0xff]
        %v755 = vld [vmem:[#allocation7 + $0x218] sm:$0xff]
        %v756 = vld [vmem:[#allocation7 + $0x220] sm:$0xff]
        %v757 = vld [vmem:[#allocation7 + $0x228] sm:$0xff]
        %v758 = vld [vmem:[#allocation7 + $0x230] sm:$0xff]
        %v759 = vld [vmem:[#allocation7 + $0x238] sm:$0xff]
        %v760 = vld [vmem:[#allocation7 + $0x240] sm:$0xff]
        %v761 = vld [vmem:[#allocation7 + $0x248] sm:$0xff]
        %v762 = vld [vmem:[#allocation7 + $0x250] sm:$0xff]
        %v763 = vld [vmem:[#allocation7 + $0x258] sm:$0xff]
        %v764 = vld [vmem:[#allocation7 + $0x260] sm:$0xff]
        %v765 = vld [vmem:[#allocation7 + $0x268] sm:$0xff]
        %v766 = vld [vmem:[#allocation7 + $0x270] sm:$0xff]
        %v767 = vld [vmem:[#allocation7 + $0x278] sm:$0xff]
        %v768 = vld [vmem:[#allocation7 + $0x280] sm:$0xff]
        %v769 = vld [vmem:[#allocation7 + $0x288] sm:$0xff]
        %v770 = vld [vmem:[#allocation7 + $0x290] sm:$0xff]
        %v771 = vld [vmem:[#allocation7 + $0x298] sm:$0xff]
        %v772 = vld [vmem:[#allocation7 + $0x2a0] sm:$0xff]
        %v773 = vld [vmem:[#allocation7 + $0x2a8] sm:$0xff]
        %v774 = vld [vmem:[#allocation7 + $0x2b0] sm:$0xff]
        %v775 = vld [vmem:[#allocation7 + $0x2b8] sm:$0xff]
        %v776 = vld [vmem:[#allocation7 + $0x2c0] sm:$0xff]
        %v777 = vld [vmem:[#allocation7 + $0x2c8] sm:$0xff]
        %v778 = vld [vmem:[#allocation7 + $0x2d0] sm:$0xff]
        %v779 = vld [vmem:[#allocation7 + $0x2d8] sm:$0xff]
        %v780 = vld [vmem:[#allocation7 + $0x2e0] sm:$0xff]
        %v781 = vld [vmem:[#allocation7 + $0x2e8] sm:$0xff]
        %v782 = vld [vmem:[#allocation7 + $0x2f0] sm:$0xff]
        %v783 = vld [vmem:[#allocation7 + $0x2f8] sm:$0xff]
        %v784 = vld [vmem:[#allocation7 + $0x300] sm:$0xff]
        %v785 = vld [vmem:[#allocation7 + $0x308] sm:$0xff]
        %v786 = vld [vmem:[#allocation7 + $0x310] sm:$0xff]
        %v787 = vld [vmem:[#allocation7 + $0x318] sm:$0xff]
        %v788 = vld [vmem:[#allocation7 + $0x320] sm:$0xff]
        %v789 = vld [vmem:[#allocation7 + $0x328] sm:$0xff]
        %v790 = vld [vmem:[#allocation7 + $0x330] sm:$0xff]
        %v791 = vld [vmem:[#allocation7 + $0x338] sm:$0xff]
        %v792 = vld [vmem:[#allocation7 + $0x340] sm:$0xff]
        %v793 = vld [vmem:[#allocation7 + $0x348] sm:$0xff]
        %v794 = vld [vmem:[#allocation7 + $0x350] sm:$0xff]
        %v795 = vld [vmem:[#allocation7 + $0x358] sm:$0xff]
        %v796 = vld [vmem:[#allocation7 + $0x360] sm:$0xff]
        %v797 = vld [vmem:[#allocation7 + $0x368] sm:$0xff]
        %v798 = vld [vmem:[#allocation7 + $0x370] sm:$0xff]
        %v799 = vld [vmem:[#allocation7 + $0x378] sm:$0xff]
        %v800 = vld [vmem:[#allocation7 + $0x380] sm:$0xff]
        %v801 = vld [vmem:[#allocation7 + $0x388] sm:$0xff]
        %v802 = vld [vmem:[#allocation7 + $0x390] sm:$0xff]
        %v803 = vld [vmem:[#allocation7 + $0x398] sm:$0xff]
        %v804 = vld [vmem:[#allocation7 + $0x3a0] sm:$0xff]
        %v805 = vld [vmem:[#allocation7 + $0x3a8] sm:$0xff]
        %v806 = vld [vmem:[#allocation7 + $0x3b0] sm:$0xff]
        %v807 = vld [vmem:[#allocation7 + $0x3b8] sm:$0xff]
        %v808 = vld [vmem:[#allocation7 + $0x3c0] sm:$0xff]
        %v809 = vld [vmem:[#allocation7 + $0x3c8] sm:$0xff]
        %v810 = vld [vmem:[#allocation7 + $0x3d0] sm:$0xff]
        %v811 = vld [vmem:[#allocation7 + $0x3d8] sm:$0xff]
        %v812 = vld [vmem:[#allocation7 + $0x3e0] sm:$0xff]
        %v813 = vld [vmem:[#allocation7 + $0x3e8] sm:$0xff]
        %v814 = vld [vmem:[#allocation7 + $0x3f0] sm:$0xff]
        %v815 = vld [vmem:[#allocation7 + $0x3f8] sm:$0xff]
        %v816 = vld [vmem:[#allocation7 + $0x400] sm:$0xff]
        %v817 = vld [vmem:[#allocation7 + $0x408] sm:$0xff]
        %v818 = vld [vmem:[#allocation7 + $0x410] sm:$0xff]
        %v819 = vld [vmem:[#allocation7 + $0x418] sm:$0xff]
        %v820 = vld [vmem:[#allocation7 + $0x420] sm:$0xff]
        %v821 = vld [vmem:[#allocation7 + $0x428] sm:$0xff]
        %v822 = vld [vmem:[#allocation7 + $0x430] sm:$0xff]
        %v823 = vld [vmem:[#allocation7 + $0x438] sm:$0xff]
        %v824 = vld [vmem:[#allocation7 + $0x440] sm:$0xff]
        %v825 = vld [vmem:[#allocation7 + $0x448] sm:$0xff]
        %v826 = vld [vmem:[#allocation7 + $0x450] sm:$0xff]
        %v827 = vld [vmem:[#allocation7 + $0x458] sm:$0xff]
        %v828 = vld [vmem:[#allocation7 + $0x460] sm:$0xff]
        %v829 = vld [vmem:[#allocation7 + $0x468] sm:$0xff]
        %v830 = vld [vmem:[#allocation7 + $0x470] sm:$0xff]
        %v831 = vld [vmem:[#allocation7 + $0x478] sm:$0xff]
        %vm833 = vcmask 1040384
        %v834 = vrot.slane %v467, 7
        %v835 = vrot.slane %v468, 7
        %v836 = vsel %vm833, %v834, %v835
        %v837 = vrot.slane %v536, 7
        %v838 = vrot.slane %v538, 7
        %v839 = vsel %vm833, %v837, %v838
        %v840 = vrot.slane %v597, 7
        %v841 = vrot.slane %v599, 7
        %v842 = vsel %vm833, %v840, %v841
        %v843 = vrot.slane %v470, 7
        %v844 = vrot.slane %v471, 7
        %v845 = vsel %vm833, %v843, %v844
        %v846 = vrot.slane %v541, 7
        %v847 = vrot.slane %v544, 7
        %v848 = vsel %vm833, %v846, %v847
        %v849 = vrot.slane %v602, 7
        %v850 = vrot.slane %v605, 7
        %v851 = vsel %vm833, %v849, %v850
        %v852 = vrot.slane %v473, 7
        %v853 = vrot.slane %v474, 7
        %v854 = vsel %vm833, %v852, %v853
        %v855 = vrot.slane %v547, 7
        %v856 = vrot.slane %v550, 7
        %v857 = vsel %vm833, %v855, %v856
        %v858 = vrot.slane %v608, 7
        %v859 = vrot.slane %v611, 7
        %v860 = vsel %vm833, %v858, %v859
        %v861 = vrot.slane %v469, 7
        %v862 = vsel %vm833, %v835, %v861
        %v863 = vrot.slane %v540, 7
        %v864 = vsel %vm833, %v838, %v863
        %v865 = vrot.slane %v601, 7
        %v866 = vsel %vm833, %v841, %v865
        %v867 = vrot.slane %v472, 7
        %v868 = vsel %vm833, %v844, %v867
        %v869 = vrot.slane %v546, 7
        %v870 = vsel %vm833, %v847, %v869
        %v871 = vrot.slane %v607, 7
        %v872 = vsel %vm833, %v850, %v871
        %v873 = vrot.slane %v475, 7
        %v874 = vsel %vm833, %v853, %v873
        %v875 = vrot.slane %v552, 7
        %v876 = vsel %vm833, %v856, %v875
        %v877 = vrot.slane %v613, 7
        %v878 = vsel %vm833, %v859, %v877
        %v879 = vsel %vm833, %v861, %v843
        %v880 = vrot.slane %v542, 7
        %v881 = vsel %vm833, %v863, %v880
        %v882 = vrot.slane %v603, 7
        %v883 = vsel %vm833, %v865, %v882
        %v884 = vsel %vm833, %v867, %v852
        %v885 = vrot.slane %v548, 7
        %v886 = vsel %vm833, %v869, %v885
        %v887 = vrot.slane %v609, 7
        %v888 = vsel %vm833, %v871, %v887
        %v889 = vrot.slane %v476, 7
        %v890 = vsel %vm833, %v873, %v889
        %v891 = vrot.slane %v554, 7
        %v892 = vsel %vm833, %v875, %v891
        %v893 = vrot.slane %v615, 7
        %v894 = vsel %vm833, %v877, %v893
        %v895 = vsel %vm833, %v880, %v847
        %v896 = vsel %vm833, %v882, %v850
        %v897 = vsel %vm833, %v885, %v856
        %v898 = vsel %vm833, %v887, %v859
        %v899 = vrot.slane %v477, 7
        %v900 = vsel %vm833, %v889, %v899
        %v901 = vrot.slane %v556, 7
        %v902 = vsel %vm833, %v891, %v901
        %v903 = vrot.slane %v617, 7
        %v904 = vsel %vm833, %v893, %v903
        %v905 = vrot.slane %v478, 7
        %v906 = vsel %vm833, %v899, %v905
        %v907 = vrot.slane %v558, 7
        %v908 = vsel %vm833, %v901, %v907
        %v909 = vrot.slane %v619, 7
        %v910 = vsel %vm833, %v903, %v909
        %v911 = vrot.slane %v479, 7
        %v912 = vsel %vm833, %v905, %v911
        %v913 = vrot.slane %v560, 7
        %v914 = vsel %vm833, %v907, %v913
        %v915 = vrot.slane %v621, 7
        %v916 = vsel %vm833, %v909, %v915
        %v917 = vrot.slane %v480, 7
        %v918 = vsel %vm833, %v911, %v917
        %v919 = vrot.slane %v562, 7
        %v920 = vsel %vm833, %v913, %v919
        %v921 = vrot.slane %v623, 7
        %v922 = vsel %vm833, %v915, %v921
        %v923 = vrot.slane %v481, 7
        %v924 = vsel %vm833, %v917, %v923
        %v925 = vrot.slane %v564, 7
        %v926 = vsel %vm833, %v919, %v925
        %v927 = vrot.slane %v625, 7
        %v928 = vsel %vm833, %v921, %v927
        %v929 = vrot.slane %v482, 7
        %v930 = vsel %vm833, %v923, %v929
        %v931 = vrot.slane %v566, 7
        %v932 = vsel %vm833, %v925, %v931
        %v933 = vrot.slane %v627, 7
        %v934 = vsel %vm833, %v927, %v933
        %v935 = vrot.slane %v483, 7
        %v936 = vsel %vm833, %v929, %v935
        %v937 = vrot.slane %v568, 7
        %v938 = vsel %vm833, %v931, %v937
        %v939 = vrot.slane %v629, 7
        %v940 = vsel %vm833, %v933, %v939
        %v941 = vrot.slane %v484, 7
        %v942 = vsel %vm833, %v935, %v941
        %v943 = vrot.slane %v570, 7
        %v944 = vsel %vm833, %v937, %v943
        %v945 = vrot.slane %v631, 7
        %v946 = vsel %vm833, %v939, %v945
        %v947 = vrot.slane %v485, 7
        %v948 = vsel %vm833, %v941, %v947
        %v949 = vrot.slane %v572, 7
        %v950 = vsel %vm833, %v943, %v949
        %v951 = vrot.slane %v633, 7
        %v952 = vsel %vm833, %v945, %v951
        %v953 = vrot.slane %v486, 7
        %v954 = vsel %vm833, %v947, %v953
        %v955 = vrot.slane %v574, 7
        %v956 = vsel %vm833, %v949, %v955
        %v957 = vrot.slane %v635, 7
        %v958 = vsel %vm833, %v951, %v957
        %v959 = vrot.slane %v487, 7
        %v960 = vsel %vm833, %v953, %v959
        %v961 = vrot.slane %v576, 7
        %v962 = vsel %vm833, %v955, %v961
        %v963 = vrot.slane %v637, 7
        %v964 = vsel %vm833, %v957, %v963
        %v965 = vrot.slane %v488, 7
        %v966 = vsel %vm833, %v959, %v965
        %v967 = vrot.slane %v578, 7
        %v968 = vsel %vm833, %v961, %v967
        %v969 = vrot.slane %v639, 7
        %v970 = vsel %vm833, %v963, %v969
        %v971 = vrot.slane %v489, 7
        %v972 = vsel %vm833, %v965, %v971
        %v973 = vrot.slane %v580, 7
        %v974 = vsel %vm833, %v967, %v973
        %v975 = vrot.slane %v641, 7
        %v976 = vsel %vm833, %v969, %v975
        %v977 = vrot.slane %v490, 7
        %v978 = vsel %vm833, %v971, %v977
        %v979 = vrot.slane %v582, 7
        %v980 = vsel %vm833, %v973, %v979
        %v981 = vrot.slane %v643, 7
        %v982 = vsel %vm833, %v975, %v981
        %v983 = vrot.slane %v491, 7
        %v984 = vsel %vm833, %v977, %v983
        %v985 = vrot.slane %v584, 7
        %v986 = vsel %vm833, %v979, %v985
        %v987 = vrot.slane %v645, 7
        %v988 = vsel %vm833, %v981, %v987
        %v989 = vrot.slane %v492, 7
        %v990 = vsel %vm833, %v983, %v989
        %v991 = vrot.slane %v586, 7
        %v992 = vsel %vm833, %v985, %v991
        %v993 = vrot.slane %v647, 7
        %v994 = vsel %vm833, %v987, %v993
        %v995 = vrot.slane %v493, 7
        %v996 = vsel %vm833, %v989, %v995
        %v997 = vrot.slane %v588, 7
        %v998 = vsel %vm833, %v991, %v997
        %v999 = vrot.slane %v649, 7
        %v1000 = vsel %vm833, %v993, %v999
        %v1001 = vrot.slane %v494, 7
        %v1002 = vsel %vm833, %v995, %v1001
        %v1003 = vrot.slane %v590, 7
        %v1004 = vsel %vm833, %v997, %v1003
        %v1005 = vrot.slane %v651, 7
        %v1006 = vsel %vm833, %v999, %v1005
        %v1007 = vrot.slane %v495, 7
        %v1008 = vsel %vm833, %v1001, %v1007
        %v1009 = vrot.slane %v592, 7
        %v1010 = vsel %vm833, %v1003, %v1009
        %v1011 = vrot.slane %v653, 7
        %v1012 = vsel %vm833, %v1005, %v1011
        %v1013 = vrot.slane %v496, 7
        %v1014 = vsel %vm833, %v1007, %v1013
        %v1015 = vrot.slane %v594, 7
        %v1016 = vsel %vm833, %v1009, %v1015
        %v1017 = vrot.slane %v655, 7
        %v1018 = vsel %vm833, %v1011, %v1017
        %v1019 = vrot.slane %v497, 7
        %v1020 = vsel %vm833, %v1013, %v1019
        %v1021 = vrot.slane %v661, 7
        %v1022 = vsel %vm833, %v1015, %v1021
        %v1023 = vrot.slane %v657, 7
        %v1024 = vsel %vm833, %v1017, %v1023
        %v1025 = vrot.slane %v498, 7
        %v1026 = vsel %vm833, %v1019, %v1025
        %v1027 = vrot.slane %v663, 7
        %v1028 = vsel %vm833, %v1021, %v1027
        %v1029 = vrot.slane %v668, 7
        %v1030 = vsel %vm833, %v1023, %v1029
        %v1031 = vrot.slane %v499, 7
        %v1032 = vsel %vm833, %v1025, %v1031
        %v1033 = vrot.slane %v665, 7
        %v1034 = vsel %vm833, %v1027, %v1033
        %v1035 = vrot.slane %v670, 7
        %v1036 = vsel %vm833, %v1029, %v1035
        %v1037 = vrot.slane %v500, 7
        %v1038 = vsel %vm833, %v1031, %v1037
        %v1039 = vrot.slane %v676, 7
        %v1040 = vsel %vm833, %v1033, %v1039
        %v1041 = vrot.slane %v672, 7
        %v1042 = vsel %vm833, %v1035, %v1041
        %v1043 = vrot.slane %v501, 7
        %v1044 = vsel %vm833, %v1037, %v1043
        %v1045 = vrot.slane %v678, 7
        %v1046 = vsel %vm833, %v1039, %v1045
        %v1047 = vrot.slane %v683, 7
        %v1048 = vsel %vm833, %v1041, %v1047
        %v1049 = vrot.slane %v502, 7
        %v1050 = vsel %vm833, %v1043, %v1049
        %v1051 = vrot.slane %v680, 7
        %v1052 = vsel %vm833, %v1045, %v1051
        %v1053 = vrot.slane %v685, 7
        %v1054 = vsel %vm833, %v1047, %v1053
        %v1055 = vrot.slane %v593, 7
        %v1056 = vsel %vm833, %v1015, %v1055
        %v1057 = vrot.slane %v664, 7
        %v1058 = vsel %vm833, %v1033, %v1057
        %v1059 = vrot.slane %v503, 7
        %v1060 = vsel %vm833, %v1049, %v1059
        %v1061 = vrot.slane %v679, 7
        %v1062 = vsel %vm833, %v1051, %v1061
        %v1063 = vrot.slane %v687, 7
        %v1064 = vsel %vm833, %v1053, %v1063
        %1179 = vmatpush.msra.mxu0 %v703
        %1180 = vmatpush.msra.mxu0 %v702
        %1181 = vmatpush.msra.mxu0 %v701
        %1182 = vmatpush.msra.mxu0 %v700
        %1183 = vmatpush.msra.mxu0 %v699
        %1184 = vmatpush.msra.mxu0 %v698
        %1185 = vmatpush.msra.mxu0 %v697
        %1186 = vmatpush.msra.mxu0 %v696
        %1187 = vmatpush.msra.mxu0 %v695
        %1188 = vmatpush.msra.mxu0 %v694
        %1189 = vmatpush.msra.mxu0 %v693
        %1190 = vmatpush.msra.mxu0 %v692
        %1191 = vmatpush.msra.mxu0 %v691
        %1192 = vmatpush.msra.mxu0 %v690
        %1193 = vmatpush.msra.mxu0 %v689
        %1194 = vmatpush.msra.mxu0 %v688
        %1195 = vmatmul.f32.gmra.mxu0 %v836
        %v1196 = vpop.f32.mrf.mxu0
        %v1197 = vadd.f32 0.0, %v1196
        %1198 = vmatmul.f32.gmra.mxu0 %v862
        %v1199 = vpop.f32.mrf.mxu0
        %v1200 = vadd.f32 0.0, %v1199
        %1201 = vmatmul.f32.gmra.mxu0 %v879
        %v1202 = vpop.f32.mrf.mxu0
        %v1203 = vadd.f32 0.0, %v1202
        %1204 = vmatmul.f32.gmra.mxu0 %v845
        %v1205 = vpop.f32.mrf.mxu0
        %v1206 = vadd.f32 0.0, %v1205
        %1207 = vmatmul.f32.gmra.mxu0 %v868
        %v1208 = vpop.f32.mrf.mxu0
        %v1209 = vadd.f32 0.0, %v1208
        %1210 = vmatmul.f32.gmra.mxu0 %v884
        %v1211 = vpop.f32.mrf.mxu0
        %v1212 = vadd.f32 0.0, %v1211
        %1213 = vmatmul.f32.gmra.mxu0 %v854
        %v1214 = vpop.f32.mrf.mxu0
        %v1215 = vadd.f32 0.0, %v1214
        %1216 = vmatmul.f32.gmra.mxu0 %v874
        %v1217 = vpop.f32.mrf.mxu0
        %v1218 = vadd.f32 0.0, %v1217
        %1219 = vmatmul.f32.gmra.mxu0 %v890
        %v1220 = vpop.f32.mrf.mxu0
        %v1221 = vadd.f32 0.0, %v1220
        %1222 = vmatmul.f32.gmra.mxu0 %v900
        %v1223 = vpop.f32.mrf.mxu0
        %v1224 = vadd.f32 0.0, %v1223
        %1225 = vmatmul.f32.gmra.mxu0 %v906
        %v1226 = vpop.f32.mrf.mxu0
        %v1227 = vadd.f32 0.0, %v1226
        %1228 = vmatmul.f32.gmra.mxu0 %v912
        %v1229 = vpop.f32.mrf.mxu0
        %v1230 = vadd.f32 0.0, %v1229
        %1231 = vmatmul.f32.gmra.mxu0 %v918
        %v1232 = vpop.f32.mrf.mxu0
        %v1233 = vadd.f32 0.0, %v1232
        %1234 = vmatmul.f32.gmra.mxu0 %v924
        %v1235 = vpop.f32.mrf.mxu0
        %v1236 = vadd.f32 0.0, %v1235
        %1237 = vmatmul.f32.gmra.mxu0 %v930
        %v1238 = vpop.f32.mrf.mxu0
        %v1239 = vadd.f32 0.0, %v1238
        %1240 = vmatmul.f32.gmra.mxu0 %v936
        %v1241 = vpop.f32.mrf.mxu0
        %v1242 = vadd.f32 0.0, %v1241
        %1243 = vmatmul.f32.gmra.mxu0 %v942
        %v1244 = vpop.f32.mrf.mxu0
        %v1245 = vadd.f32 0.0, %v1244
        %1246 = vmatmul.f32.gmra.mxu0 %v948
        %v1247 = vpop.f32.mrf.mxu0
        %v1248 = vadd.f32 0.0, %v1247
        %1249 = vmatmul.f32.gmra.mxu0 %v954
        %v1250 = vpop.f32.mrf.mxu0
        %v1251 = vadd.f32 0.0, %v1250
        %1252 = vmatmul.f32.gmra.mxu0 %v960
        %v1253 = vpop.f32.mrf.mxu0
        %v1254 = vadd.f32 0.0, %v1253
        %1255 = vmatmul.f32.gmra.mxu0 %v966
        %v1256 = vpop.f32.mrf.mxu0
        %v1257 = vadd.f32 0.0, %v1256
        %1258 = vmatmul.f32.gmra.mxu0 %v972
        %v1259 = vpop.f32.mrf.mxu0
        %v1260 = vadd.f32 0.0, %v1259
        %1261 = vmatmul.f32.gmra.mxu0 %v978
        %v1262 = vpop.f32.mrf.mxu0
        %v1263 = vadd.f32 0.0, %v1262
        %1264 = vmatmul.f32.gmra.mxu0 %v984
        %v1265 = vpop.f32.mrf.mxu0
        %v1266 = vadd.f32 0.0, %v1265
        %1267 = vmatmul.f32.gmra.mxu0 %v990
        %v1268 = vpop.f32.mrf.mxu0
        %v1269 = vadd.f32 0.0, %v1268
        %1270 = vmatmul.f32.gmra.mxu0 %v996
        %v1271 = vpop.f32.mrf.mxu0
        %v1272 = vadd.f32 0.0, %v1271
        %1273 = vmatmul.f32.gmra.mxu0 %v1002
        %v1274 = vpop.f32.mrf.mxu0
        %v1275 = vadd.f32 0.0, %v1274
        %1276 = vmatmul.f32.gmra.mxu0 %v1008
        %v1277 = vpop.f32.mrf.mxu0
        %v1278 = vadd.f32 0.0, %v1277
        %1279 = vmatmul.f32.gmra.mxu0 %v1014
        %v1280 = vpop.f32.mrf.mxu0
        %v1281 = vadd.f32 0.0, %v1280
        %1282 = vmatmul.f32.gmra.mxu0 %v1020
        %v1283 = vpop.f32.mrf.mxu0
        %v1284 = vadd.f32 0.0, %v1283
        %1285 = vdwg.mxu0
        %1286 = vmatpush.msra.mxu0 %v719
        %1287 = vmatpush.msra.mxu0 %v718
        %1288 = vmatpush.msra.mxu0 %v717
        %1289 = vmatpush.msra.mxu0 %v716
        %1290 = vmatpush.msra.mxu0 %v715
        %1291 = vmatpush.msra.mxu0 %v714
        %1292 = vmatpush.msra.mxu0 %v713
        %1293 = vmatpush.msra.mxu0 %v712
        %1294 = vmatpush.msra.mxu0 %v711
        %1295 = vmatpush.msra.mxu0 %v710
        %1296 = vmatpush.msra.mxu0 %v709
        %1297 = vmatpush.msra.mxu0 %v708
        %1298 = vmatpush.msra.mxu0 %v707
        %1299 = vmatpush.msra.mxu0 %v706
        %1300 = vmatpush.msra.mxu0 %v705
        %1301 = vmatpush.msra.mxu0 %v704
        %1302 = vmatmul.f32.gmra.mxu0 %v839
        %v1303 = vpop.f32.mrf.mxu0
        %v1304 = vadd.f32 %v1197, %v1303
        %1305 = vmatmul.f32.gmra.mxu0 %v864
        %v1306 = vpop.f32.mrf.mxu0
        %v1307 = vadd.f32 %v1200, %v1306
        %1308 = vmatmul.f32.gmra.mxu0 %v881
        %v1309 = vpop.f32.mrf.mxu0
        %v1310 = vadd.f32 %v1203, %v1309
        %1311 = vmatmul.f32.gmra.mxu0 %v895
        %v1312 = vpop.f32.mrf.mxu0
        %v1313 = vadd.f32 %v1206, %v1312
        %1314 = vmatmul.f32.gmra.mxu0 %v870
        %v1315 = vpop.f32.mrf.mxu0
        %v1316 = vadd.f32 %v1209, %v1315
        %1317 = vmatmul.f32.gmra.mxu0 %v886
        %v1318 = vpop.f32.mrf.mxu0
        %v1319 = vadd.f32 %v1212, %v1318
        %1320 = vmatmul.f32.gmra.mxu0 %v897
        %v1321 = vpop.f32.mrf.mxu0
        %v1322 = vadd.f32 %v1215, %v1321
        %1323 = vmatmul.f32.gmra.mxu0 %v876
        %v1324 = vpop.f32.mrf.mxu0
        %v1325 = vadd.f32 %v1218, %v1324
        %1326 = vmatmul.f32.gmra.mxu0 %v892
        %v1327 = vpop.f32.mrf.mxu0
        %v1328 = vadd.f32 %v1221, %v1327
        %1329 = vmatmul.f32.gmra.mxu0 %v902
        %v1330 = vpop.f32.mrf.mxu0
        %v1331 = vadd.f32 %v1224, %v1330
        %1332 = vmatmul.f32.gmra.mxu0 %v908
        %v1333 = vpop.f32.mrf.mxu0
        %v1334 = vadd.f32 %v1227, %v1333
        %1335 = vmatmul.f32.gmra.mxu0 %v914
        %v1336 = vpop.f32.mrf.mxu0
        %v1337 = vadd.f32 %v1230, %v1336
        %1338 = vmatmul.f32.gmra.mxu0 %v920
        %v1339 = vpop.f32.mrf.mxu0
        %v1340 = vadd.f32 %v1233, %v1339
        %1341 = vmatmul.f32.gmra.mxu0 %v926
        %v1342 = vpop.f32.mrf.mxu0
        %v1343 = vadd.f32 %v1236, %v1342
        %1344 = vmatmul.f32.gmra.mxu0 %v932
        %v1345 = vpop.f32.mrf.mxu0
        %v1346 = vadd.f32 %v1239, %v1345
        %1347 = vmatmul.f32.gmra.mxu0 %v938
        %v1348 = vpop.f32.mrf.mxu0
        %v1349 = vadd.f32 %v1242, %v1348
        %1350 = vmatmul.f32.gmra.mxu0 %v944
        %v1351 = vpop.f32.mrf.mxu0
        %v1352 = vadd.f32 %v1245, %v1351
        %1353 = vmatmul.f32.gmra.mxu0 %v950
        %v1354 = vpop.f32.mrf.mxu0
        %v1355 = vadd.f32 %v1248, %v1354
        %1356 = vmatmul.f32.gmra.mxu0 %v956
        %v1357 = vpop.f32.mrf.mxu0
        %v1358 = vadd.f32 %v1251, %v1357
        %1359 = vmatmul.f32.gmra.mxu0 %v962
        %v1360 = vpop.f32.mrf.mxu0
        %v1361 = vadd.f32 %v1254, %v1360
        %1362 = vmatmul.f32.gmra.mxu0 %v968
        %v1363 = vpop.f32.mrf.mxu0
        %v1364 = vadd.f32 %v1257, %v1363
        %1365 = vmatmul.f32.gmra.mxu0 %v974
        %v1366 = vpop.f32.mrf.mxu0
        %v1367 = vadd.f32 %v1260, %v1366
        %1368 = vmatmul.f32.gmra.mxu0 %v980
        %v1369 = vpop.f32.mrf.mxu0
        %v1370 = vadd.f32 %v1263, %v1369
        %1371 = vmatmul.f32.gmra.mxu0 %v986
        %v1372 = vpop.f32.mrf.mxu0
        %v1373 = vadd.f32 %v1266, %v1372
        %1374 = vmatmul.f32.gmra.mxu0 %v992
        %v1375 = vpop.f32.mrf.mxu0
        %v1376 = vadd.f32 %v1269, %v1375
        %1377 = vmatmul.f32.gmra.mxu0 %v998
        %v1378 = vpop.f32.mrf.mxu0
        %v1379 = vadd.f32 %v1272, %v1378
        %1380 = vmatmul.f32.gmra.mxu0 %v1004
        %v1381 = vpop.f32.mrf.mxu0
        %v1382 = vadd.f32 %v1275, %v1381
        %1383 = vmatmul.f32.gmra.mxu0 %v1010
        %v1384 = vpop.f32.mrf.mxu0
        %v1385 = vadd.f32 %v1278, %v1384
        %1386 = vmatmul.f32.gmra.mxu0 %v1016
        %v1387 = vpop.f32.mrf.mxu0
        %v1388 = vadd.f32 %v1281, %v1387
        %1389 = vmatmul.f32.gmra.mxu0 %v1056
        %v1390 = vpop.f32.mrf.mxu0
        %v1391 = vadd.f32 %v1284, %v1390
        %1392 = vdwg.mxu0
        %1393 = vmatpush.msra.mxu0 %v735
        %1394 = vmatpush.msra.mxu0 %v734
        %1395 = vmatpush.msra.mxu0 %v733
        %1396 = vmatpush.msra.mxu0 %v732
        %1397 = vmatpush.msra.mxu0 %v731
        %1398 = vmatpush.msra.mxu0 %v730
        %1399 = vmatpush.msra.mxu0 %v729
        %1400 = vmatpush.msra.mxu0 %v728
        %1401 = vmatpush.msra.mxu0 %v727
        %1402 = vmatpush.msra.mxu0 %v726
        %1403 = vmatpush.msra.mxu0 %v725
        %1404 = vmatpush.msra.mxu0 %v724
        %1405 = vmatpush.msra.mxu0 %v723
        %1406 = vmatpush.msra.mxu0 %v722
        %1407 = vmatpush.msra.mxu0 %v721
        %1408 = vmatpush.msra.mxu0 %v720
        %1409 = vmatmul.f32.gmra.mxu0 %v842
        %v1410 = vpop.f32.mrf.mxu0
        %v1411 = vadd.f32 %v1304, %v1410
        %1412 = vmatmul.f32.gmra.mxu0 %v866
        %v1413 = vpop.f32.mrf.mxu0
        %v1414 = vadd.f32 %v1307, %v1413
        %1415 = vmatmul.f32.gmra.mxu0 %v883
        %v1416 = vpop.f32.mrf.mxu0
        %v1417 = vadd.f32 %v1310, %v1416
        %1418 = vmatmul.f32.gmra.mxu0 %v896
        %v1419 = vpop.f32.mrf.mxu0
        %v1420 = vadd.f32 %v1313, %v1419
        %1421 = vmatmul.f32.gmra.mxu0 %v872
        %v1422 = vpop.f32.mrf.mxu0
        %v1423 = vadd.f32 %v1316, %v1422
        %1424 = vmatmul.f32.gmra.mxu0 %v888
        %v1425 = vpop.f32.mrf.mxu0
        %v1426 = vadd.f32 %v1319, %v1425
        %1427 = vmatmul.f32.gmra.mxu0 %v898
        %v1428 = vpop.f32.mrf.mxu0
        %v1429 = vadd.f32 %v1322, %v1428
        %1430 = vmatmul.f32.gmra.mxu0 %v878
        %v1431 = vpop.f32.mrf.mxu0
        %v1432 = vadd.f32 %v1325, %v1431
        %1433 = vmatmul.f32.gmra.mxu0 %v894
        %v1434 = vpop.f32.mrf.mxu0
        %v1435 = vadd.f32 %v1328, %v1434
        %1436 = vmatmul.f32.gmra.mxu0 %v904
        %v1437 = vpop.f32.mrf.mxu0
        %v1438 = vadd.f32 %v1331, %v1437
        %1439 = vmatmul.f32.gmra.mxu0 %v910
        %v1440 = vpop.f32.mrf.mxu0
        %v1441 = vadd.f32 %v1334, %v1440
        %1442 = vmatmul.f32.gmra.mxu0 %v916
        %v1443 = vpop.f32.mrf.mxu0
        %v1444 = vadd.f32 %v1337, %v1443
        %1445 = vmatmul.f32.gmra.mxu0 %v922
        %v1446 = vpop.f32.mrf.mxu0
        %v1447 = vadd.f32 %v1340, %v1446
        %1448 = vmatmul.f32.gmra.mxu0 %v928
        %v1449 = vpop.f32.mrf.mxu0
        %v1450 = vadd.f32 %v1343, %v1449
        %1451 = vmatmul.f32.gmra.mxu0 %v934
        %v1452 = vpop.f32.mrf.mxu0
        %v1453 = vadd.f32 %v1346, %v1452
        %1454 = vmatmul.f32.gmra.mxu0 %v940
        %v1455 = vpop.f32.mrf.mxu0
        %v1456 = vadd.f32 %v1349, %v1455
        %1457 = vmatmul.f32.gmra.mxu0 %v946
        %v1458 = vpop.f32.mrf.mxu0
        %v1459 = vadd.f32 %v1352, %v1458
        %1460 = vmatmul.f32.gmra.mxu0 %v952
        %v1461 = vpop.f32.mrf.mxu0
        %v1462 = vadd.f32 %v1355, %v1461
        %1463 = vmatmul.f32.gmra.mxu0 %v958
        %v1464 = vpop.f32.mrf.mxu0
        %v1465 = vadd.f32 %v1358, %v1464
        %1466 = vmatmul.f32.gmra.mxu0 %v964
        %v1467 = vpop.f32.mrf.mxu0
        %v1468 = vadd.f32 %v1361, %v1467
        %1469 = vmatmul.f32.gmra.mxu0 %v970
        %v1470 = vpop.f32.mrf.mxu0
        %v1471 = vadd.f32 %v1364, %v1470
        %1472 = vmatmul.f32.gmra.mxu0 %v976
        %v1473 = vpop.f32.mrf.mxu0
        %v1474 = vadd.f32 %v1367, %v1473
        %1475 = vmatmul.f32.gmra.mxu0 %v982
        %v1476 = vpop.f32.mrf.mxu0
        %v1477 = vadd.f32 %v1370, %v1476
        %1478 = vmatmul.f32.gmra.mxu0 %v988
        %v1479 = vpop.f32.mrf.mxu0
        %v1480 = vadd.f32 %v1373, %v1479
        %1481 = vmatmul.f32.gmra.mxu0 %v994
        %v1482 = vpop.f32.mrf.mxu0
        %v1483 = vadd.f32 %v1376, %v1482
        %1484 = vmatmul.f32.gmra.mxu0 %v1000
        %v1485 = vpop.f32.mrf.mxu0
        %v1486 = vadd.f32 %v1379, %v1485
        %1487 = vmatmul.f32.gmra.mxu0 %v1006
        %v1488 = vpop.f32.mrf.mxu0
        %v1489 = vadd.f32 %v1382, %v1488
        %1490 = vmatmul.f32.gmra.mxu0 %v1012
        %v1491 = vpop.f32.mrf.mxu0
        %v1492 = vadd.f32 %v1385, %v1491
        %1493 = vmatmul.f32.gmra.mxu0 %v1018
        %v1494 = vpop.f32.mrf.mxu0
        %v1495 = vadd.f32 %v1388, %v1494
        %1496 = vmatmul.f32.gmra.mxu0 %v1024
        %v1497 = vpop.f32.mrf.mxu0
        %v1498 = vadd.f32 %v1391, %v1497
        %1499 = vdwg.mxu0
        %1500 = vmatpush.msra.mxu0 %v751
        %1501 = vmatpush.msra.mxu0 %v750
        %1502 = vmatpush.msra.mxu0 %v749
        %1503 = vmatpush.msra.mxu0 %v748
        %1504 = vmatpush.msra.mxu0 %v747
        %1505 = vmatpush.msra.mxu0 %v746
        %1506 = vmatpush.msra.mxu0 %v745
        %1507 = vmatpush.msra.mxu0 %v744
        %1508 = vmatpush.msra.mxu0 %v743
        %1509 = vmatpush.msra.mxu0 %v742
        %1510 = vmatpush.msra.mxu0 %v741
        %1511 = vmatpush.msra.mxu0 %v740
        %1512 = vmatpush.msra.mxu0 %v739
        %1513 = vmatpush.msra.mxu0 %v738
        %1514 = vmatpush.msra.mxu0 %v737
        %1515 = vmatpush.msra.mxu0 %v736
        %1516 = vmatmul.f32.gmra.mxu0 %v845
        %v1517 = vpop.f32.mrf.mxu0
        %v1518 = vadd.f32 %v1411, %v1517
        %1519 = vmatmul.f32.gmra.mxu0 %v868
        %v1520 = vpop.f32.mrf.mxu0
        %v1521 = vadd.f32 %v1414, %v1520
        %1522 = vmatmul.f32.gmra.mxu0 %v884
        %v1523 = vpop.f32.mrf.mxu0
        %v1524 = vadd.f32 %v1417, %v1523
        %1525 = vmatmul.f32.gmra.mxu0 %v854
        %v1526 = vpop.f32.mrf.mxu0
        %v1527 = vadd.f32 %v1420, %v1526
        %1528 = vmatmul.f32.gmra.mxu0 %v874
        %v1529 = vpop.f32.mrf.mxu0
        %v1530 = vadd.f32 %v1423, %v1529
        %1531 = vmatmul.f32.gmra.mxu0 %v890
        %v1532 = vpop.f32.mrf.mxu0
        %v1533 = vadd.f32 %v1426, %v1532
        %1534 = vmatmul.f32.gmra.mxu0 %v900
        %v1535 = vpop.f32.mrf.mxu0
        %v1536 = vadd.f32 %v1429, %v1535
        %1537 = vmatmul.f32.gmra.mxu0 %v906
        %v1538 = vpop.f32.mrf.mxu0
        %v1539 = vadd.f32 %v1432, %v1538
        %1540 = vmatmul.f32.gmra.mxu0 %v912
        %v1541 = vpop.f32.mrf.mxu0
        %v1542 = vadd.f32 %v1435, %v1541
        %1543 = vmatmul.f32.gmra.mxu0 %v918
        %v1544 = vpop.f32.mrf.mxu0
        %v1545 = vadd.f32 %v1438, %v1544
        %1546 = vmatmul.f32.gmra.mxu0 %v924
        %v1547 = vpop.f32.mrf.mxu0
        %v1548 = vadd.f32 %v1441, %v1547
        %1549 = vmatmul.f32.gmra.mxu0 %v930
        %v1550 = vpop.f32.mrf.mxu0
        %v1551 = vadd.f32 %v1444, %v1550
        %1552 = vmatmul.f32.gmra.mxu0 %v936
        %v1553 = vpop.f32.mrf.mxu0
        %v1554 = vadd.f32 %v1447, %v1553
        %1555 = vmatmul.f32.gmra.mxu0 %v942
        %v1556 = vpop.f32.mrf.mxu0
        %v1557 = vadd.f32 %v1450, %v1556
        %1558 = vmatmul.f32.gmra.mxu0 %v948
        %v1559 = vpop.f32.mrf.mxu0
        %v1560 = vadd.f32 %v1453, %v1559
        %1561 = vmatmul.f32.gmra.mxu0 %v954
        %v1562 = vpop.f32.mrf.mxu0
        %v1563 = vadd.f32 %v1456, %v1562
        %1564 = vmatmul.f32.gmra.mxu0 %v960
        %v1565 = vpop.f32.mrf.mxu0
        %v1566 = vadd.f32 %v1459, %v1565
        %1567 = vmatmul.f32.gmra.mxu0 %v966
        %v1568 = vpop.f32.mrf.mxu0
        %v1569 = vadd.f32 %v1462, %v1568
        %1570 = vmatmul.f32.gmra.mxu0 %v972
        %v1571 = vpop.f32.mrf.mxu0
        %v1572 = vadd.f32 %v1465, %v1571
        %1573 = vmatmul.f32.gmra.mxu0 %v978
        %v1574 = vpop.f32.mrf.mxu0
        %v1575 = vadd.f32 %v1468, %v1574
        %1576 = vmatmul.f32.gmra.mxu0 %v984
        %v1577 = vpop.f32.mrf.mxu0
        %v1578 = vadd.f32 %v1471, %v1577
        %1579 = vmatmul.f32.gmra.mxu0 %v990
        %v1580 = vpop.f32.mrf.mxu0
        %v1581 = vadd.f32 %v1474, %v1580
        %1582 = vmatmul.f32.gmra.mxu0 %v996
        %v1583 = vpop.f32.mrf.mxu0
        %v1584 = vadd.f32 %v1477, %v1583
        %1585 = vmatmul.f32.gmra.mxu0 %v1002
        %v1586 = vpop.f32.mrf.mxu0
        %v1587 = vadd.f32 %v1480, %v1586
        %1588 = vmatmul.f32.gmra.mxu0 %v1008
        %v1589 = vpop.f32.mrf.mxu0
        %v1590 = vadd.f32 %v1483, %v1589
        %1591 = vmatmul.f32.gmra.mxu0 %v1014
        %v1592 = vpop.f32.mrf.mxu0
        %v1593 = vadd.f32 %v1486, %v1592
        %1594 = vmatmul.f32.gmra.mxu0 %v1020
        %v1595 = vpop.f32.mrf.mxu0
        %v1596 = vadd.f32 %v1489, %v1595
        %1597 = vmatmul.f32.gmra.mxu0 %v1026
        %v1598 = vpop.f32.mrf.mxu0
        %v1599 = vadd.f32 %v1492, %v1598
        %1600 = vmatmul.f32.gmra.mxu0 %v1032
        %v1601 = vpop.f32.mrf.mxu0
        %v1602 = vadd.f32 %v1495, %v1601
        %1603 = vmatmul.f32.gmra.mxu0 %v1038
        %v1604 = vpop.f32.mrf.mxu0
        %v1605 = vadd.f32 %v1498, %v1604
        %1606 = vdwg.mxu0
        %1607 = vmatpush.msra.mxu0 %v767
        %1608 = vmatpush.msra.mxu0 %v766
        %1609 = vmatpush.msra.mxu0 %v765
        %1610 = vmatpush.msra.mxu0 %v764
        %1611 = vmatpush.msra.mxu0 %v763
        %1612 = vmatpush.msra.mxu0 %v762
        %1613 = vmatpush.msra.mxu0 %v761
        %1614 = vmatpush.msra.mxu0 %v760
        %1615 = vmatpush.msra.mxu0 %v759
        %1616 = vmatpush.msra.mxu0 %v758
        %1617 = vmatpush.msra.mxu0 %v757
        %1618 = vmatpush.msra.mxu0 %v756
        %1619 = vmatpush.msra.mxu0 %v755
        %1620 = vmatpush.msra.mxu0 %v754
        %1621 = vmatpush.msra.mxu0 %v753
        %1622 = vmatpush.msra.mxu0 %v752
        %1623 = vmatmul.f32.gmra.mxu0 %v848
        %v1624 = vpop.f32.mrf.mxu0
        %v1625 = vadd.f32 %v1518, %v1624
        %1626 = vmatmul.f32.gmra.mxu0 %v870
        %v1627 = vpop.f32.mrf.mxu0
        %v1628 = vadd.f32 %v1521, %v1627
        %1629 = vmatmul.f32.gmra.mxu0 %v886
        %v1630 = vpop.f32.mrf.mxu0
        %v1631 = vadd.f32 %v1524, %v1630
        %1632 = vmatmul.f32.gmra.mxu0 %v897
        %v1633 = vpop.f32.mrf.mxu0
        %v1634 = vadd.f32 %v1527, %v1633
        %1635 = vmatmul.f32.gmra.mxu0 %v876
        %v1636 = vpop.f32.mrf.mxu0
        %v1637 = vadd.f32 %v1530, %v1636
        %1638 = vmatmul.f32.gmra.mxu0 %v892
        %v1639 = vpop.f32.mrf.mxu0
        %v1640 = vadd.f32 %v1533, %v1639
        %1641 = vmatmul.f32.gmra.mxu0 %v902
        %v1642 = vpop.f32.mrf.mxu0
        %v1643 = vadd.f32 %v1536, %v1642
        %1644 = vmatmul.f32.gmra.mxu0 %v908
        %v1645 = vpop.f32.mrf.mxu0
        %v1646 = vadd.f32 %v1539, %v1645
        %1647 = vmatmul.f32.gmra.mxu0 %v914
        %v1648 = vpop.f32.mrf.mxu0
        %v1649 = vadd.f32 %v1542, %v1648
        %1650 = vmatmul.f32.gmra.mxu0 %v920
        %v1651 = vpop.f32.mrf.mxu0
        %v1652 = vadd.f32 %v1545, %v1651
        %1653 = vmatmul.f32.gmra.mxu0 %v926
        %v1654 = vpop.f32.mrf.mxu0
        %v1655 = vadd.f32 %v1548, %v1654
        %1656 = vmatmul.f32.gmra.mxu0 %v932
        %v1657 = vpop.f32.mrf.mxu0
        %v1658 = vadd.f32 %v1551, %v1657
        %1659 = vmatmul.f32.gmra.mxu0 %v938
        %v1660 = vpop.f32.mrf.mxu0
        %v1661 = vadd.f32 %v1554, %v1660
        %1662 = vmatmul.f32.gmra.mxu0 %v944
        %v1663 = vpop.f32.mrf.mxu0
        %v1664 = vadd.f32 %v1557, %v1663
        %1665 = vmatmul.f32.gmra.mxu0 %v950
        %v1666 = vpop.f32.mrf.mxu0
        %v1667 = vadd.f32 %v1560, %v1666
        %1668 = vmatmul.f32.gmra.mxu0 %v956
        %v1669 = vpop.f32.mrf.mxu0
        %v1670 = vadd.f32 %v1563, %v1669
        %1671 = vmatmul.f32.gmra.mxu0 %v962
        %v1672 = vpop.f32.mrf.mxu0
        %v1673 = vadd.f32 %v1566, %v1672
        %1674 = vmatmul.f32.gmra.mxu0 %v968
        %v1675 = vpop.f32.mrf.mxu0
        %v1676 = vadd.f32 %v1569, %v1675
        %1677 = vmatmul.f32.gmra.mxu0 %v974
        %v1678 = vpop.f32.mrf.mxu0
        %v1679 = vadd.f32 %v1572, %v1678
        %1680 = vmatmul.f32.gmra.mxu0 %v980
        %v1681 = vpop.f32.mrf.mxu0
        %v1682 = vadd.f32 %v1575, %v1681
        %1683 = vmatmul.f32.gmra.mxu0 %v986
        %v1684 = vpop.f32.mrf.mxu0
        %v1685 = vadd.f32 %v1578, %v1684
        %1686 = vmatmul.f32.gmra.mxu0 %v992
        %v1687 = vpop.f32.mrf.mxu0
        %v1688 = vadd.f32 %v1581, %v1687
        %1689 = vmatmul.f32.gmra.mxu0 %v998
        %v1690 = vpop.f32.mrf.mxu0
        %v1691 = vadd.f32 %v1584, %v1690
        %1692 = vmatmul.f32.gmra.mxu0 %v1004
        %v1693 = vpop.f32.mrf.mxu0
        %v1694 = vadd.f32 %v1587, %v1693
        %1695 = vmatmul.f32.gmra.mxu0 %v1010
        %v1696 = vpop.f32.mrf.mxu0
        %v1697 = vadd.f32 %v1590, %v1696
        %1698 = vmatmul.f32.gmra.mxu0 %v1016
        %v1699 = vpop.f32.mrf.mxu0
        %v1700 = vadd.f32 %v1593, %v1699
        %1701 = vmatmul.f32.gmra.mxu0 %v1022
        %v1702 = vpop.f32.mrf.mxu0
        %v1703 = vadd.f32 %v1596, %v1702
        %1704 = vmatmul.f32.gmra.mxu0 %v1028
        %v1705 = vpop.f32.mrf.mxu0
        %v1706 = vadd.f32 %v1599, %v1705
        %1707 = vmatmul.f32.gmra.mxu0 %v1034
        %v1708 = vpop.f32.mrf.mxu0
        %v1709 = vadd.f32 %v1602, %v1708
        %1710 = vmatmul.f32.gmra.mxu0 %v1058
        %v1711 = vpop.f32.mrf.mxu0
        %v1712 = vadd.f32 %v1605, %v1711
        %1713 = vdwg.mxu0
        %1714 = vmatpush.msra.mxu0 %v783
        %1715 = vmatpush.msra.mxu0 %v782
        %1716 = vmatpush.msra.mxu0 %v781
        %1717 = vmatpush.msra.mxu0 %v780
        %1718 = vmatpush.msra.mxu0 %v779
        %1719 = vmatpush.msra.mxu0 %v778
        %1720 = vmatpush.msra.mxu0 %v777
        %1721 = vmatpush.msra.mxu0 %v776
        %1722 = vmatpush.msra.mxu0 %v775
        %1723 = vmatpush.msra.mxu0 %v774
        %1724 = vmatpush.msra.mxu0 %v773
        %1725 = vmatpush.msra.mxu0 %v772
        %1726 = vmatpush.msra.mxu0 %v771
        %1727 = vmatpush.msra.mxu0 %v770
        %1728 = vmatpush.msra.mxu0 %v769
        %1729 = vmatpush.msra.mxu0 %v768
        %1730 = vmatmul.f32.gmra.mxu0 %v851
        %v1731 = vpop.f32.mrf.mxu0
        %v1732 = vadd.f32 %v1625, %v1731
        %1733 = vmatmul.f32.gmra.mxu0 %v872
        %v1734 = vpop.f32.mrf.mxu0
        %v1735 = vadd.f32 %v1628, %v1734
        %1736 = vmatmul.f32.gmra.mxu0 %v888
        %v1737 = vpop.f32.mrf.mxu0
        %v1738 = vadd.f32 %v1631, %v1737
        %1739 = vmatmul.f32.gmra.mxu0 %v898
        %v1740 = vpop.f32.mrf.mxu0
        %v1741 = vadd.f32 %v1634, %v1740
        %1742 = vmatmul.f32.gmra.mxu0 %v878
        %v1743 = vpop.f32.mrf.mxu0
        %v1744 = vadd.f32 %v1637, %v1743
        %1745 = vmatmul.f32.gmra.mxu0 %v894
        %v1746 = vpop.f32.mrf.mxu0
        %v1747 = vadd.f32 %v1640, %v1746
        %1748 = vmatmul.f32.gmra.mxu0 %v904
        %v1749 = vpop.f32.mrf.mxu0
        %v1750 = vadd.f32 %v1643, %v1749
        %1751 = vmatmul.f32.gmra.mxu0 %v910
        %v1752 = vpop.f32.mrf.mxu0
        %v1753 = vadd.f32 %v1646, %v1752
        %1754 = vmatmul.f32.gmra.mxu0 %v916
        %v1755 = vpop.f32.mrf.mxu0
        %v1756 = vadd.f32 %v1649, %v1755
        %1757 = vmatmul.f32.gmra.mxu0 %v922
        %v1758 = vpop.f32.mrf.mxu0
        %v1759 = vadd.f32 %v1652, %v1758
        %1760 = vmatmul.f32.gmra.mxu0 %v928
        %v1761 = vpop.f32.mrf.mxu0
        %v1762 = vadd.f32 %v1655, %v1761
        %1763 = vmatmul.f32.gmra.mxu0 %v934
        %v1764 = vpop.f32.mrf.mxu0
        %v1765 = vadd.f32 %v1658, %v1764
        %1766 = vmatmul.f32.gmra.mxu0 %v940
        %v1767 = vpop.f32.mrf.mxu0
        %v1768 = vadd.f32 %v1661, %v1767
        %1769 = vmatmul.f32.gmra.mxu0 %v946
        %v1770 = vpop.f32.mrf.mxu0
        %v1771 = vadd.f32 %v1664, %v1770
        %1772 = vmatmul.f32.gmra.mxu0 %v952
        %v1773 = vpop.f32.mrf.mxu0
        %v1774 = vadd.f32 %v1667, %v1773
        %1775 = vmatmul.f32.gmra.mxu0 %v958
        %v1776 = vpop.f32.mrf.mxu0
        %v1777 = vadd.f32 %v1670, %v1776
        %1778 = vmatmul.f32.gmra.mxu0 %v964
        %v1779 = vpop.f32.mrf.mxu0
        %v1780 = vadd.f32 %v1673, %v1779
        %1781 = vmatmul.f32.gmra.mxu0 %v970
        %v1782 = vpop.f32.mrf.mxu0
        %v1783 = vadd.f32 %v1676, %v1782
        %1784 = vmatmul.f32.gmra.mxu0 %v976
        %v1785 = vpop.f32.mrf.mxu0
        %v1786 = vadd.f32 %v1679, %v1785
        %1787 = vmatmul.f32.gmra.mxu0 %v982
        %v1788 = vpop.f32.mrf.mxu0
        %v1789 = vadd.f32 %v1682, %v1788
        %1790 = vmatmul.f32.gmra.mxu0 %v988
        %v1791 = vpop.f32.mrf.mxu0
        %v1792 = vadd.f32 %v1685, %v1791
        %1793 = vmatmul.f32.gmra.mxu0 %v994
        %v1794 = vpop.f32.mrf.mxu0
        %v1795 = vadd.f32 %v1688, %v1794
        %1796 = vmatmul.f32.gmra.mxu0 %v1000
        %v1797 = vpop.f32.mrf.mxu0
        %v1798 = vadd.f32 %v1691, %v1797
        %1799 = vmatmul.f32.gmra.mxu0 %v1006
        %v1800 = vpop.f32.mrf.mxu0
        %v1801 = vadd.f32 %v1694, %v1800
        %1802 = vmatmul.f32.gmra.mxu0 %v1012
        %v1803 = vpop.f32.mrf.mxu0
        %v1804 = vadd.f32 %v1697, %v1803
        %1805 = vmatmul.f32.gmra.mxu0 %v1018
        %v1806 = vpop.f32.mrf.mxu0
        %v1807 = vadd.f32 %v1700, %v1806
        %1808 = vmatmul.f32.gmra.mxu0 %v1024
        %v1809 = vpop.f32.mrf.mxu0
        %v1810 = vadd.f32 %v1703, %v1809
        %1811 = vmatmul.f32.gmra.mxu0 %v1030
        %v1812 = vpop.f32.mrf.mxu0
        %v1813 = vadd.f32 %v1706, %v1812
        %1814 = vmatmul.f32.gmra.mxu0 %v1036
        %v1815 = vpop.f32.mrf.mxu0
        %v1816 = vadd.f32 %v1709, %v1815
        %1817 = vmatmul.f32.gmra.mxu0 %v1042
        %v1818 = vpop.f32.mrf.mxu0
        %v1819 = vadd.f32 %v1712, %v1818
        %1820 = vdwg.mxu0
        %1821 = vmatpush.msra.mxu0 %v799
        %1822 = vmatpush.msra.mxu0 %v798
        %1823 = vmatpush.msra.mxu0 %v797
        %1824 = vmatpush.msra.mxu0 %v796
        %1825 = vmatpush.msra.mxu0 %v795
        %1826 = vmatpush.msra.mxu0 %v794
        %1827 = vmatpush.msra.mxu0 %v793
        %1828 = vmatpush.msra.mxu0 %v792
        %1829 = vmatpush.msra.mxu0 %v791
        %1830 = vmatpush.msra.mxu0 %v790
        %1831 = vmatpush.msra.mxu0 %v789
        %1832 = vmatpush.msra.mxu0 %v788
        %1833 = vmatpush.msra.mxu0 %v787
        %1834 = vmatpush.msra.mxu0 %v786
        %1835 = vmatpush.msra.mxu0 %v785
        %1836 = vmatpush.msra.mxu0 %v784
        %1837 = vmatmul.f32.gmra.mxu0 %v854
        %v1838 = vpop.f32.mrf.mxu0
        %v1839 = vadd.f32 %v1732, %v1838
        %1840 = vmatmul.f32.gmra.mxu0 %v874
        %v1841 = vpop.f32.mrf.mxu0
        %v1842 = vadd.f32 %v1735, %v1841
        %1843 = vmatmul.f32.gmra.mxu0 %v890
        %v1844 = vpop.f32.mrf.mxu0
        %v1845 = vadd.f32 %v1738, %v1844
        %1846 = vmatmul.f32.gmra.mxu0 %v900
        %v1847 = vpop.f32.mrf.mxu0
        %v1848 = vadd.f32 %v1741, %v1847
        %1849 = vmatmul.f32.gmra.mxu0 %v906
        %v1850 = vpop.f32.mrf.mxu0
        %v1851 = vadd.f32 %v1744, %v1850
        %1852 = vmatmul.f32.gmra.mxu0 %v912
        %v1853 = vpop.f32.mrf.mxu0
        %v1854 = vadd.f32 %v1747, %v1853
        %1855 = vmatmul.f32.gmra.mxu0 %v918
        %v1856 = vpop.f32.mrf.mxu0
        %v1857 = vadd.f32 %v1750, %v1856
        %1858 = vmatmul.f32.gmra.mxu0 %v924
        %v1859 = vpop.f32.mrf.mxu0
        %v1860 = vadd.f32 %v1753, %v1859
        %1861 = vmatmul.f32.gmra.mxu0 %v930
        %v1862 = vpop.f32.mrf.mxu0
        %v1863 = vadd.f32 %v1756, %v1862
        %1864 = vmatmul.f32.gmra.mxu0 %v936
        %v1865 = vpop.f32.mrf.mxu0
        %v1866 = vadd.f32 %v1759, %v1865
        %1867 = vmatmul.f32.gmra.mxu0 %v942
        %v1868 = vpop.f32.mrf.mxu0
        %v1869 = vadd.f32 %v1762, %v1868
        %1870 = vmatmul.f32.gmra.mxu0 %v948
        %v1871 = vpop.f32.mrf.mxu0
        %v1872 = vadd.f32 %v1765, %v1871
        %1873 = vmatmul.f32.gmra.mxu0 %v954
        %v1874 = vpop.f32.mrf.mxu0
        %v1875 = vadd.f32 %v1768, %v1874
        %1876 = vmatmul.f32.gmra.mxu0 %v960
        %v1877 = vpop.f32.mrf.mxu0
        %v1878 = vadd.f32 %v1771, %v1877
        %1879 = vmatmul.f32.gmra.mxu0 %v966
        %v1880 = vpop.f32.mrf.mxu0
        %v1881 = vadd.f32 %v1774, %v1880
        %1882 = vmatmul.f32.gmra.mxu0 %v972
        %v1883 = vpop.f32.mrf.mxu0
        %v1884 = vadd.f32 %v1777, %v1883
        %1885 = vmatmul.f32.gmra.mxu0 %v978
        %v1886 = vpop.f32.mrf.mxu0
        %v1887 = vadd.f32 %v1780, %v1886
        %1888 = vmatmul.f32.gmra.mxu0 %v984
        %v1889 = vpop.f32.mrf.mxu0
        %v1890 = vadd.f32 %v1783, %v1889
        %1891 = vmatmul.f32.gmra.mxu0 %v990
        %v1892 = vpop.f32.mrf.mxu0
        %v1893 = vadd.f32 %v1786, %v1892
        %1894 = vmatmul.f32.gmra.mxu0 %v996
        %v1895 = vpop.f32.mrf.mxu0
        %v1896 = vadd.f32 %v1789, %v1895
        %1897 = vmatmul.f32.gmra.mxu0 %v1002
        %v1898 = vpop.f32.mrf.mxu0
        %v1899 = vadd.f32 %v1792, %v1898
        %1900 = vmatmul.f32.gmra.mxu0 %v1008
        %v1901 = vpop.f32.mrf.mxu0
        %v1902 = vadd.f32 %v1795, %v1901
        %1903 = vmatmul.f32.gmra.mxu0 %v1014
        %v1904 = vpop.f32.mrf.mxu0
        %v1905 = vadd.f32 %v1798, %v1904
        %1906 = vmatmul.f32.gmra.mxu0 %v1020
        %v1907 = vpop.f32.mrf.mxu0
        %v1908 = vadd.f32 %v1801, %v1907
        %1909 = vmatmul.f32.gmra.mxu0 %v1026
        %v1910 = vpop.f32.mrf.mxu0
        %v1911 = vadd.f32 %v1804, %v1910
        %1912 = vmatmul.f32.gmra.mxu0 %v1032
        %v1913 = vpop.f32.mrf.mxu0
        %v1914 = vadd.f32 %v1807, %v1913
        %1915 = vmatmul.f32.gmra.mxu0 %v1038
        %v1916 = vpop.f32.mrf.mxu0
        %v1917 = vadd.f32 %v1810, %v1916
        %1918 = vmatmul.f32.gmra.mxu0 %v1044
        %v1919 = vpop.f32.mrf.mxu0
        %v1920 = vadd.f32 %v1813, %v1919
        %1921 = vmatmul.f32.gmra.mxu0 %v1050
        %v1922 = vpop.f32.mrf.mxu0
        %v1923 = vadd.f32 %v1816, %v1922
        %1924 = vmatmul.f32.gmra.mxu0 %v1060
        %v1925 = vpop.f32.mrf.mxu0
        %v1926 = vadd.f32 %v1819, %v1925
        %1927 = vdwg.mxu0
        %1928 = vmatpush.msra.mxu0 %v815
        %1929 = vmatpush.msra.mxu0 %v814
        %1930 = vmatpush.msra.mxu0 %v813
        %1931 = vmatpush.msra.mxu0 %v812
        %1932 = vmatpush.msra.mxu0 %v811
        %1933 = vmatpush.msra.mxu0 %v810
        %1934 = vmatpush.msra.mxu0 %v809
        %1935 = vmatpush.msra.mxu0 %v808
        %1936 = vmatpush.msra.mxu0 %v807
        %1937 = vmatpush.msra.mxu0 %v806
        %1938 = vmatpush.msra.mxu0 %v805
        %1939 = vmatpush.msra.mxu0 %v804
        %1940 = vmatpush.msra.mxu0 %v803
        %1941 = vmatpush.msra.mxu0 %v802
        %1942 = vmatpush.msra.mxu0 %v801
        %1943 = vmatpush.msra.mxu0 %v800
        %1944 = vmatmul.f32.gmra.mxu0 %v857
        %v1945 = vpop.f32.mrf.mxu0
        %v1946 = vadd.f32 %v1839, %v1945
        %1947 = vmatmul.f32.gmra.mxu0 %v876
        %v1948 = vpop.f32.mrf.mxu0
        %v1949 = vadd.f32 %v1842, %v1948
        %1950 = vmatmul.f32.gmra.mxu0 %v892
        %v1951 = vpop.f32.mrf.mxu0
        %v1952 = vadd.f32 %v1845, %v1951
        %1953 = vmatmul.f32.gmra.mxu0 %v902
        %v1954 = vpop.f32.mrf.mxu0
        %v1955 = vadd.f32 %v1848, %v1954
        %1956 = vmatmul.f32.gmra.mxu0 %v908
        %v1957 = vpop.f32.mrf.mxu0
        %v1958 = vadd.f32 %v1851, %v1957
        %1959 = vmatmul.f32.gmra.mxu0 %v914
        %v1960 = vpop.f32.mrf.mxu0
        %v1961 = vadd.f32 %v1854, %v1960
        %1962 = vmatmul.f32.gmra.mxu0 %v920
        %v1963 = vpop.f32.mrf.mxu0
        %v1964 = vadd.f32 %v1857, %v1963
        %1965 = vmatmul.f32.gmra.mxu0 %v926
        %v1966 = vpop.f32.mrf.mxu0
        %v1967 = vadd.f32 %v1860, %v1966
        %1968 = vmatmul.f32.gmra.mxu0 %v932
        %v1969 = vpop.f32.mrf.mxu0
        %v1970 = vadd.f32 %v1863, %v1969
        %1971 = vmatmul.f32.gmra.mxu0 %v938
        %v1972 = vpop.f32.mrf.mxu0
        %v1973 = vadd.f32 %v1866, %v1972
        %1974 = vmatmul.f32.gmra.mxu0 %v944
        %v1975 = vpop.f32.mrf.mxu0
        %v1976 = vadd.f32 %v1869, %v1975
        %1977 = vmatmul.f32.gmra.mxu0 %v950
        %v1978 = vpop.f32.mrf.mxu0
        %v1979 = vadd.f32 %v1872, %v1978
        %1980 = vmatmul.f32.gmra.mxu0 %v956
        %v1981 = vpop.f32.mrf.mxu0
        %v1982 = vadd.f32 %v1875, %v1981
        %1983 = vmatmul.f32.gmra.mxu0 %v962
        %v1984 = vpop.f32.mrf.mxu0
        %v1985 = vadd.f32 %v1878, %v1984
        %1986 = vmatmul.f32.gmra.mxu0 %v968
        %v1987 = vpop.f32.mrf.mxu0
        %v1988 = vadd.f32 %v1881, %v1987
        %1989 = vmatmul.f32.gmra.mxu0 %v974
        %v1990 = vpop.f32.mrf.mxu0
        %v1991 = vadd.f32 %v1884, %v1990
        %1992 = vmatmul.f32.gmra.mxu0 %v980
        %v1993 = vpop.f32.mrf.mxu0
        %v1994 = vadd.f32 %v1887, %v1993
        %1995 = vmatmul.f32.gmra.mxu0 %v986
        %v1996 = vpop.f32.mrf.mxu0
        %v1997 = vadd.f32 %v1890, %v1996
        %1998 = vmatmul.f32.gmra.mxu0 %v992
        %v1999 = vpop.f32.mrf.mxu0
        %v2000 = vadd.f32 %v1893, %v1999
        %2001 = vmatmul.f32.gmra.mxu0 %v998
        %v2002 = vpop.f32.mrf.mxu0
        %v2003 = vadd.f32 %v1896, %v2002
        %2004 = vmatmul.f32.gmra.mxu0 %v1004
        %v2005 = vpop.f32.mrf.mxu0
        %v2006 = vadd.f32 %v1899, %v2005
        %2007 = vmatmul.f32.gmra.mxu0 %v1010
        %v2008 = vpop.f32.mrf.mxu0
        %v2009 = vadd.f32 %v1902, %v2008
        %2010 = vmatmul.f32.gmra.mxu0 %v1016
        %v2011 = vpop.f32.mrf.mxu0
        %v2012 = vadd.f32 %v1905, %v2011
        %2013 = vmatmul.f32.gmra.mxu0 %v1022
        %v2014 = vpop.f32.mrf.mxu0
        %v2015 = vadd.f32 %v1908, %v2014
        %2016 = vmatmul.f32.gmra.mxu0 %v1028
        %v2017 = vpop.f32.mrf.mxu0
        %v2018 = vadd.f32 %v1911, %v2017
        %2019 = vmatmul.f32.gmra.mxu0 %v1034
        %v2020 = vpop.f32.mrf.mxu0
        %v2021 = vadd.f32 %v1914, %v2020
        %2022 = vmatmul.f32.gmra.mxu0 %v1040
        %v2023 = vpop.f32.mrf.mxu0
        %v2024 = vadd.f32 %v1917, %v2023
        %2025 = vmatmul.f32.gmra.mxu0 %v1046
        %v2026 = vpop.f32.mrf.mxu0
        %v2027 = vadd.f32 %v1920, %v2026
        %2028 = vmatmul.f32.gmra.mxu0 %v1052
        %v2029 = vpop.f32.mrf.mxu0
        %v2030 = vadd.f32 %v1923, %v2029
        %2031 = vmatmul.f32.gmra.mxu0 %v1062
        %v2032 = vpop.f32.mrf.mxu0
        %v2033 = vadd.f32 %v1926, %v2032
        %2034 = vdwg.mxu0
        %2035 = vmatpush.msra.mxu0 %v831
        %2036 = vmatpush.msra.mxu0 %v830
        %2037 = vmatpush.msra.mxu0 %v829
        %2038 = vmatpush.msra.mxu0 %v828
        %2039 = vmatpush.msra.mxu0 %v827
        %2040 = vmatpush.msra.mxu0 %v826
        %2041 = vmatpush.msra.mxu0 %v825
        %2042 = vmatpush.msra.mxu0 %v824
        %2043 = vmatpush.msra.mxu0 %v823
        %2044 = vmatpush.msra.mxu0 %v822
        %2045 = vmatpush.msra.mxu0 %v821
        %2046 = vmatpush.msra.mxu0 %v820
        %2047 = vmatpush.msra.mxu0 %v819
        %2048 = vmatpush.msra.mxu0 %v818
        %2049 = vmatpush.msra.mxu0 %v817
        %2050 = vmatpush.msra.mxu0 %v816
        %2051 = vmatmul.f32.gmra.mxu0 %v860
        %v2052 = vpop.f32.mrf.mxu0
        %v2053 = vadd.f32 %v1946, %v2052
        %2054 = vmatmul.f32.gmra.mxu0 %v878
        %v2055 = vpop.f32.mrf.mxu0
        %v2056 = vadd.f32 %v1949, %v2055
        %2057 = vmatmul.f32.gmra.mxu0 %v894
        %v2058 = vpop.f32.mrf.mxu0
        %v2059 = vadd.f32 %v1952, %v2058
        %2060 = vmatmul.f32.gmra.mxu0 %v904
        %v2061 = vpop.f32.mrf.mxu0
        %v2062 = vadd.f32 %v1955, %v2061
        %2063 = vmatmul.f32.gmra.mxu0 %v910
        %v2064 = vpop.f32.mrf.mxu0
        %v2065 = vadd.f32 %v1958, %v2064
        %2066 = vmatmul.f32.gmra.mxu0 %v916
        %v2067 = vpop.f32.mrf.mxu0
        %v2068 = vadd.f32 %v1961, %v2067
        %2069 = vmatmul.f32.gmra.mxu0 %v922
        %v2070 = vpop.f32.mrf.mxu0
        %v2071 = vadd.f32 %v1964, %v2070
        %2072 = vmatmul.f32.gmra.mxu0 %v928
        %v2073 = vpop.f32.mrf.mxu0
        %v2074 = vadd.f32 %v1967, %v2073
        %2075 = vmatmul.f32.gmra.mxu0 %v934
        %v2076 = vpop.f32.mrf.mxu0
        %v2077 = vadd.f32 %v1970, %v2076
        %2078 = vmatmul.f32.gmra.mxu0 %v940
        %v2079 = vpop.f32.mrf.mxu0
        %v2080 = vadd.f32 %v1973, %v2079
        %2081 = vmatmul.f32.gmra.mxu0 %v946
        %v2082 = vpop.f32.mrf.mxu0
        %v2083 = vadd.f32 %v1976, %v2082
        %2084 = vmatmul.f32.gmra.mxu0 %v952
        %v2085 = vpop.f32.mrf.mxu0
        %v2086 = vadd.f32 %v1979, %v2085
        %2087 = vmatmul.f32.gmra.mxu0 %v958
        %v2088 = vpop.f32.mrf.mxu0
        %v2089 = vadd.f32 %v1982, %v2088
        %2090 = vmatmul.f32.gmra.mxu0 %v964
        %v2091 = vpop.f32.mrf.mxu0
        %v2092 = vadd.f32 %v1985, %v2091
        %2093 = vmatmul.f32.gmra.mxu0 %v970
        %v2094 = vpop.f32.mrf.mxu0
        %v2095 = vadd.f32 %v1988, %v2094
        %2096 = vmatmul.f32.gmra.mxu0 %v976
        %v2097 = vpop.f32.mrf.mxu0
        %v2098 = vadd.f32 %v1991, %v2097
        %2099 = vmatmul.f32.gmra.mxu0 %v982
        %v2100 = vpop.f32.mrf.mxu0
        %v2101 = vadd.f32 %v1994, %v2100
        %2102 = vmatmul.f32.gmra.mxu0 %v988
        %v2103 = vpop.f32.mrf.mxu0
        %v2104 = vadd.f32 %v1997, %v2103
        %2105 = vmatmul.f32.gmra.mxu0 %v994
        %v2106 = vpop.f32.mrf.mxu0
        %v2107 = vadd.f32 %v2000, %v2106
        %2108 = vmatmul.f32.gmra.mxu0 %v1000
        %v2109 = vpop.f32.mrf.mxu0
        %v2110 = vadd.f32 %v2003, %v2109
        %2111 = vmatmul.f32.gmra.mxu0 %v1006
        %v2112 = vpop.f32.mrf.mxu0
        %v2113 = vadd.f32 %v2006, %v2112
        %2114 = vmatmul.f32.gmra.mxu0 %v1012
        %v2115 = vpop.f32.mrf.mxu0
        %v2116 = vadd.f32 %v2009, %v2115
        %2117 = vmatmul.f32.gmra.mxu0 %v1018
        %v2118 = vpop.f32.mrf.mxu0
        %v2119 = vadd.f32 %v2012, %v2118
        %2120 = vmatmul.f32.gmra.mxu0 %v1024
        %v2121 = vpop.f32.mrf.mxu0
        %v2122 = vadd.f32 %v2015, %v2121
        %2123 = vmatmul.f32.gmra.mxu0 %v1030
        %v2124 = vpop.f32.mrf.mxu0
        %v2125 = vadd.f32 %v2018, %v2124
        %2126 = vmatmul.f32.gmra.mxu0 %v1036
        %v2127 = vpop.f32.mrf.mxu0
        %v2128 = vadd.f32 %v2021, %v2127
        %2129 = vmatmul.f32.gmra.mxu0 %v1042
        %v2130 = vpop.f32.mrf.mxu0
        %v2131 = vadd.f32 %v2024, %v2130
        %2132 = vmatmul.f32.gmra.mxu0 %v1048
        %v2133 = vpop.f32.mrf.mxu0
        %v2134 = vadd.f32 %v2027, %v2133
        %2135 = vmatmul.f32.gmra.mxu0 %v1054
        %v2136 = vpop.f32.mrf.mxu0
        %v2137 = vadd.f32 %v2030, %v2136
        %2138 = vmatmul.f32.gmra.mxu0 %v1064
        %v2139 = vpop.f32.mrf.mxu0
        %v2140 = vadd.f32 %v2033, %v2139
        %2141 = vdwg.mxu0
        %v2142 = vld [vmem:[%s3] sm:$0x1]
        %v2144 = vperm.slane %v2142, 0
        %v2146 = vmul.f32 %v2053, %v2144
        %v2147 = vmul.f32 %v2056, %v2144
        %v2148 = vmul.f32 %v2059, %v2144
        %v2149 = vmul.f32 %v2062, %v2144
        %v2150 = vmul.f32 %v2065, %v2144
        %v2151 = vmul.f32 %v2068, %v2144
        %v2152 = vmul.f32 %v2071, %v2144
        %v2153 = vmul.f32 %v2074, %v2144
        %v2154 = vmul.f32 %v2077, %v2144
        %v2155 = vmul.f32 %v2080, %v2144
        %v2156 = vmul.f32 %v2083, %v2144
        %v2157 = vmul.f32 %v2086, %v2144
        %v2158 = vmul.f32 %v2089, %v2144
        %v2159 = vmul.f32 %v2092, %v2144
        %v2160 = vmul.f32 %v2095, %v2144
        %v2161 = vmul.f32 %v2098, %v2144
        %v2162 = vmul.f32 %v2101, %v2144
        %v2163 = vmul.f32 %v2104, %v2144
        %v2164 = vmul.f32 %v2107, %v2144
        %v2165 = vmul.f32 %v2110, %v2144
        %v2166 = vmul.f32 %v2113, %v2144
        %v2167 = vmul.f32 %v2116, %v2144
        %v2168 = vmul.f32 %v2119, %v2144
        %v2169 = vmul.f32 %v2122, %v2144
        %v2170 = vmul.f32 %v2125, %v2144
        %v2171 = vmul.f32 %v2128, %v2144
        %v2172 = vmul.f32 %v2131, %v2144
        %v2173 = vmul.f32 %v2134, %v2144
        %v2174 = vmul.f32 %v2137, %v2144
        %v2175 = vmul.f32 %v2140, %v2144
        %v2176 = vld [vmem:[%s4] sm:$0x1]
        %v2178 = vperm.slane %v2176, 0
        %v2180 = vadd.f32 %v2146, %v2178
        %v2181 = vadd.f32 %v2147, %v2178
        %v2182 = vadd.f32 %v2148, %v2178
        %v2183 = vadd.f32 %v2149, %v2178
        %v2184 = vadd.f32 %v2150, %v2178
        %v2185 = vadd.f32 %v2151, %v2178
        %v2186 = vadd.f32 %v2152, %v2178
        %v2187 = vadd.f32 %v2153, %v2178
        %v2188 = vadd.f32 %v2154, %v2178
        %v2189 = vadd.f32 %v2155, %v2178
        %v2190 = vadd.f32 %v2156, %v2178
        %v2191 = vadd.f32 %v2157, %v2178
        %v2192 = vadd.f32 %v2158, %v2178
        %v2193 = vadd.f32 %v2159, %v2178
        %v2194 = vadd.f32 %v2160, %v2178
        %v2195 = vadd.f32 %v2161, %v2178
        %v2196 = vadd.f32 %v2162, %v2178
        %v2197 = vadd.f32 %v2163, %v2178
        %v2198 = vadd.f32 %v2164, %v2178
        %v2199 = vadd.f32 %v2165, %v2178
        %v2200 = vadd.f32 %v2166, %v2178
        %v2201 = vadd.f32 %v2167, %v2178
        %v2202 = vadd.f32 %v2168, %v2178
        %v2203 = vadd.f32 %v2169, %v2178
        %v2204 = vadd.f32 %v2170, %v2178
        %v2205 = vadd.f32 %v2171, %v2178
        %v2206 = vadd.f32 %v2172, %v2178
        %v2207 = vadd.f32 %v2173, %v2178
        %v2208 = vadd.f32 %v2174, %v2178
        %v2209 = vadd.f32 %v2175, %v2178
        %v2210 = vmax.f32 %v2180, 0.0
        %v2211 = vmax.f32 %v2181, 0.0
        %v2212 = vmax.f32 %v2182, 0.0
        %v2213 = vmax.f32 %v2183, 0.0
        %v2214 = vmax.f32 %v2184, 0.0
        %v2215 = vmax.f32 %v2185, 0.0
        %v2216 = vmax.f32 %v2186, 0.0
        %v2217 = vmax.f32 %v2187, 0.0
        %v2218 = vmax.f32 %v2188, 0.0
        %v2219 = vmax.f32 %v2189, 0.0
        %v2220 = vmax.f32 %v2190, 0.0
        %v2221 = vmax.f32 %v2191, 0.0
        %v2222 = vmax.f32 %v2192, 0.0
        %v2223 = vmax.f32 %v2193, 0.0
        %v2224 = vmax.f32 %v2194, 0.0
        %v2225 = vmax.f32 %v2195, 0.0
        %v2226 = vmax.f32 %v2196, 0.0
        %v2227 = vmax.f32 %v2197, 0.0
        %v2228 = vmax.f32 %v2198, 0.0
        %v2229 = vmax.f32 %v2199, 0.0
        %v2230 = vmax.f32 %v2200, 0.0
        %v2231 = vmax.f32 %v2201, 0.0
        %v2232 = vmax.f32 %v2202, 0.0
        %v2233 = vmax.f32 %v2203, 0.0
        %v2234 = vmax.f32 %v2204, 0.0
        %v2235 = vmax.f32 %v2205, 0.0
        %v2236 = vmax.f32 %v2206, 0.0
        %v2237 = vmax.f32 %v2207, 0.0
        %v2238 = vmax.f32 %v2208, 0.0
        %v2239 = vmax.f32 %v2209, 0.0
        %v2240 = vlaneseq
        %v2241 = vshrl.u32 %v2240, 7
        %v2242 = vadd.s32 %v2241, 8
        %v2243 = vadd.s32 %v2241, 16
        %vm2244 = vcmp.lt.s32.totalorder %v2241, 16
        %vm2245 = vcmp.lt.s32.totalorder %v2242, 16
        %vm2246 = vcmp.lt.s32.totalorder %v2243, 16
        %p2247 = scmp.gt.s32.totalorder %s31, 0
        %s2248 = scalar_select %p2247, 1, 0
        %v2249 = vstv %s2248
        %vm2250 = vcmp.eq.s32.totalorder %v2249, 1
        %vm2251 = vmand %vm2244, %vm2250
        %vm2252 = vmand %vm2245, %vm2250
        %vm2253 = vmand %vm2246, %vm2250
        %vm2254 = vmand %vm2244, 1
        %vm2255 = vmand %vm2245, 1
        %vm2256 = vmand %vm2246, 1
        %p2257 = scmp.lt.s32.totalorder %s31, 1
        %s2258 = scalar_select %p2257, 1, 0
        %v2259 = vstv %s2258
        %vm2260 = vcmp.eq.s32.totalorder %v2259, 1
        %vm2261 = vmand %vm2251, 1
        %vm2262 = vmand %vm2252, 1
        %vm2263 = vmand %vm2253, 1
        %vm2264 = vmand %vm2254, %vm2260
        %vm2265 = vmand %vm2255, %vm2260
        %vm2266 = vmand %vm2256, %vm2260
        %v2267 = vsel %vm2261, 1, 0
        %v2268 = vsel %vm2262, 1, 0
        %v2269 = vsel %vm2263, 1, 0
        %v2270 = vsel %vm2254, 1, 0
        %v2271 = vsel %vm2255, 1, 0
        %v2272 = vsel %vm2256, 1, 0
        %v2273 = vsel %vm2264, 1, 0
        %v2274 = vsel %vm2265, 1, 0
        %v2275 = vsel %vm2266, 1, 0
        %vm2276 = vcmp.eq.s32.totalorder %v2267, 1
        %vm2277 = vcmp.eq.s32.totalorder %v2268, 1
        %vm2278 = vcmp.eq.s32.totalorder %v2269, 1
        %vm2279 = vcmp.eq.s32.totalorder %v2270, 1
        %vm2280 = vcmp.eq.s32.totalorder %v2271, 1
        %vm2281 = vcmp.eq.s32.totalorder %v2272, 1
        %vm2282 = vcmp.eq.s32.totalorder %v2273, 1
        %vm2283 = vcmp.eq.s32.totalorder %v2274, 1
        %vm2284 = vcmp.eq.s32.totalorder %v2275, 1
        %v2285 = vsel %vm2276, %v2210, 0.0
        %v2286 = vsel %vm2277, %v2211, 0.0
        %v2287 = vsel %vm2278, %v2212, 0.0
        %v2288 = vsel %vm2279, %v2213, 0.0
        %v2289 = vsel %vm2280, %v2214, 0.0
        %v2290 = vsel %vm2281, %v2215, 0.0
        %v2291 = vsel %vm2279, %v2216, 0.0
        %v2292 = vsel %vm2280, %v2217, 0.0
        %v2293 = vsel %vm2281, %v2218, 0.0
        %v2294 = vsel %vm2279, %v2219, 0.0
        %v2295 = vsel %vm2280, %v2220, 0.0
        %v2296 = vsel %vm2281, %v2221, 0.0
        %v2297 = vsel %vm2279, %v2222, 0.0
        %v2298 = vsel %vm2280, %v2223, 0.0
        %v2299 = vsel %vm2281, %v2224, 0.0
        %v2300 = vsel %vm2279, %v2225, 0.0
        %v2301 = vsel %vm2280, %v2226, 0.0
        %v2302 = vsel %vm2281, %v2227, 0.0
        %v2303 = vsel %vm2279, %v2228, 0.0
        %v2304 = vsel %vm2280, %v2229, 0.0
        %v2305 = vsel %vm2281, %v2230, 0.0
        %v2306 = vsel %vm2279, %v2231, 0.0
        %v2307 = vsel %vm2280, %v2232, 0.0
        %v2308 = vsel %vm2281, %v2233, 0.0
        %v2309 = vsel %vm2279, %v2234, 0.0
        %v2310 = vsel %vm2280, %v2235, 0.0
        %v2311 = vsel %vm2281, %v2236, 0.0
        %v2312 = vsel %vm2282, %v2237, 0.0
        %v2313 = vsel %vm2283, %v2238, 0.0
        %v2314 = vsel %vm2284, %v2239, 0.0
        %v2339 = vrot.slane %v2285, 1
        %v2340 = vrot.slane %v2286, 1
        %v2341 = vsel %vm535, %v2339, %v2340
        %v2342 = vrot.slane %v2287, 1
        %v2343 = vsel %vm535, %v2340, %v2342
        %v2344 = vrot.slane %v2288, 1
        %v2345 = vsel %vm535, %v2342, %v2344
        %v2346 = vrot.slane %v2289, 1
        %v2347 = vsel %vm535, %v2344, %v2346
        %v2348 = vrot.slane %v2290, 1
        %v2349 = vsel %vm535, %v2346, %v2348
        %v2350 = vrot.slane %v2291, 1
        %v2351 = vsel %vm535, %v2348, %v2350
        %v2352 = vrot.slane %v2292, 1
        %v2353 = vsel %vm535, %v2350, %v2352
        %v2354 = vrot.slane %v2293, 1
        %v2355 = vsel %vm535, %v2352, %v2354
        %v2356 = vrot.slane %v2294, 1
        %v2357 = vsel %vm535, %v2354, %v2356
        %v2358 = vrot.slane %v2295, 1
        %v2359 = vsel %vm535, %v2356, %v2358
        %v2360 = vrot.slane %v2296, 1
        %v2361 = vsel %vm535, %v2358, %v2360
        %v2362 = vrot.slane %v2297, 1
        %v2363 = vsel %vm535, %v2360, %v2362
        %v2364 = vrot.slane %v2298, 1
        %v2365 = vsel %vm535, %v2362, %v2364
        %v2366 = vrot.slane %v2299, 1
        %v2367 = vsel %vm535, %v2364, %v2366
        %v2368 = vrot.slane %v2300, 1
        %v2369 = vsel %vm535, %v2366, %v2368
        %v2370 = vrot.slane %v2301, 1
        %v2371 = vsel %vm535, %v2368, %v2370
        %v2372 = vrot.slane %v2302, 1
        %v2373 = vsel %vm535, %v2370, %v2372
        %v2374 = vrot.slane %v2303, 1
        %v2375 = vsel %vm535, %v2372, %v2374
        %v2376 = vrot.slane %v2304, 1
        %v2377 = vsel %vm535, %v2374, %v2376
        %v2378 = vrot.slane %v2305, 1
        %v2379 = vsel %vm535, %v2376, %v2378
        %v2380 = vrot.slane %v2306, 1
        %v2381 = vsel %vm535, %v2378, %v2380
        %v2382 = vrot.slane %v2307, 1
        %v2383 = vsel %vm535, %v2380, %v2382
        %v2384 = vrot.slane %v2308, 1
        %v2385 = vsel %vm535, %v2382, %v2384
        %v2387 = vrot.slane %v2285, 2
        %v2388 = vrot.slane %v2286, 2
        %v2389 = vsel %vm596, %v2387, %v2388
        %v2390 = vrot.slane %v2287, 2
        %v2391 = vsel %vm596, %v2388, %v2390
        %v2392 = vrot.slane %v2288, 2
        %v2393 = vsel %vm596, %v2390, %v2392
        %v2394 = vrot.slane %v2289, 2
        %v2395 = vsel %vm596, %v2392, %v2394
        %v2396 = vrot.slane %v2290, 2
        %v2397 = vsel %vm596, %v2394, %v2396
        %v2398 = vrot.slane %v2291, 2
        %v2399 = vsel %vm596, %v2396, %v2398
        %v2400 = vrot.slane %v2292, 2
        %v2401 = vsel %vm596, %v2398, %v2400
        %v2402 = vrot.slane %v2293, 2
        %v2403 = vsel %vm596, %v2400, %v2402
        %v2404 = vrot.slane %v2294, 2
        %v2405 = vsel %vm596, %v2402, %v2404
        %v2406 = vrot.slane %v2295, 2
        %v2407 = vsel %vm596, %v2404, %v2406
        %v2408 = vrot.slane %v2296, 2
        %v2409 = vsel %vm596, %v2406, %v2408
        %v2410 = vrot.slane %v2297, 2
        %v2411 = vsel %vm596, %v2408, %v2410
        %v2412 = vrot.slane %v2298, 2
        %v2413 = vsel %vm596, %v2410, %v2412
        %v2414 = vrot.slane %v2299, 2
        %v2415 = vsel %vm596, %v2412, %v2414
        %v2416 = vrot.slane %v2300, 2
        %v2417 = vsel %vm596, %v2414, %v2416
        %v2418 = vrot.slane %v2301, 2
        %v2419 = vsel %vm596, %v2416, %v2418
        %v2420 = vrot.slane %v2302, 2
        %v2421 = vsel %vm596, %v2418, %v2420
        %v2422 = vrot.slane %v2303, 2
        %v2423 = vsel %vm596, %v2420, %v2422
        %v2424 = vrot.slane %v2304, 2
        %v2425 = vsel %vm596, %v2422, %v2424
        %v2426 = vrot.slane %v2305, 2
        %v2427 = vsel %vm596, %v2424, %v2426
        %v2428 = vrot.slane %v2306, 2
        %v2429 = vsel %vm596, %v2426, %v2428
        %v2430 = vrot.slane %v2307, 2
        %v2431 = vsel %vm596, %v2428, %v2430
        %v2432 = vrot.slane %v2308, 2
        %v2433 = vsel %vm596, %v2430, %v2432
        %v2434 = vrot.slane %v2309, 2
        %v2435 = vsel %vm596, %v2432, %v2434
        %v2438 = vrot.slane %v2309, 1
        %v2439 = vsel %vm535, %v2384, %v2438
        %v2440 = vrot.slane %v2310, 1
        %v2441 = vsel %vm535, %v2438, %v2440
        %v2442 = vrot.slane %v2311, 1
        %v2443 = vsel %vm535, %v2440, %v2442
        %v2445 = vrot.slane %v2310, 2
        %v2446 = vsel %vm596, %v2434, %v2445
        %v2447 = vrot.slane %v2311, 2
        %v2448 = vsel %vm596, %v2445, %v2447
        %v2449 = vrot.slane %v2312, 2
        %v2450 = vsel %vm596, %v2447, %v2449
        %v2453 = vrot.slane %v2312, 1
        %v2454 = vsel %vm535, %v2442, %v2453
        %v2455 = vrot.slane %v2313, 1
        %v2456 = vsel %vm535, %v2453, %v2455
        %v2457 = vrot.slane %v2314, 1
        %v2458 = vsel %vm535, %v2455, %v2457
        %v2460 = vrot.slane %v2313, 2
        %v2461 = vsel %vm596, %v2449, %v2460
        %v2462 = vrot.slane %v2314, 2
        %v2463 = vsel %vm596, %v2460, %v2462
        %v2464 = vrot.slane 0.0, 2
        %v2465 = vsel %vm596, %v2462, %v2464
        %v2466 = vld [vmem:[#allocation9] sm:$0xff]
        %v2467 = vld [vmem:[#allocation9 + $0x8] sm:$0xff]
        %v2468 = vld [vmem:[#allocation9 + $0x10] sm:$0xff]
        %v2469 = vld [vmem:[#allocation9 + $0x18] sm:$0xff]
        %v2470 = vld [vmem:[#allocation9 + $0x20] sm:$0xff]
        %v2471 = vld [vmem:[#allocation9 + $0x28] sm:$0xff]
        %v2472 = vld [vmem:[#allocation9 + $0x30] sm:$0xff]
        %v2473 = vld [vmem:[#allocation9 + $0x38] sm:$0xff]
        %v2474 = vld [vmem:[#allocation9 + $0x40] sm:$0xff]
        %v2475 = vld [vmem:[#allocation9 + $0x48] sm:$0xff]
        %v2476 = vld [vmem:[#allocation9 + $0x50] sm:$0xff]
        %v2477 = vld [vmem:[#allocation9 + $0x58] sm:$0xff]
        %v2478 = vld [vmem:[#allocation9 + $0x60] sm:$0xff]
        %v2479 = vld [vmem:[#allocation9 + $0x68] sm:$0xff]
        %v2480 = vld [vmem:[#allocation9 + $0x70] sm:$0xff]
        %v2481 = vld [vmem:[#allocation9 + $0x78] sm:$0xff]
        %v2482 = vld [vmem:[#allocation9 + $0x80] sm:$0xff]
        %v2483 = vld [vmem:[#allocation9 + $0x88] sm:$0xff]
        %v2484 = vld [vmem:[#allocation9 + $0x90] sm:$0xff]
        %v2485 = vld [vmem:[#allocation9 + $0x98] sm:$0xff]
        %v2486 = vld [vmem:[#allocation9 + $0xa0] sm:$0xff]
        %v2487 = vld [vmem:[#allocation9 + $0xa8] sm:$0xff]
        %v2488 = vld [vmem:[#allocation9 + $0xb0] sm:$0xff]
        %v2489 = vld [vmem:[#allocation9 + $0xb8] sm:$0xff]
        %v2490 = vld [vmem:[#allocation9 + $0xc0] sm:$0xff]
        %v2491 = vld [vmem:[#allocation9 + $0xc8] sm:$0xff]
        %v2492 = vld [vmem:[#allocation9 + $0xd0] sm:$0xff]
        %v2493 = vld [vmem:[#allocation9 + $0xd8] sm:$0xff]
        %v2494 = vld [vmem:[#allocation9 + $0xe0] sm:$0xff]
        %v2495 = vld [vmem:[#allocation9 + $0xe8] sm:$0xff]
        %v2496 = vld [vmem:[#allocation9 + $0xf0] sm:$0xff]
        %v2497 = vld [vmem:[#allocation9 + $0xf8] sm:$0xff]
        %v2498 = vld [vmem:[#allocation9 + $0x100] sm:$0xff]
        %v2499 = vld [vmem:[#allocation9 + $0x108] sm:$0xff]
        %v2500 = vld [vmem:[#allocation9 + $0x110] sm:$0xff]
        %v2501 = vld [vmem:[#allocation9 + $0x118] sm:$0xff]
        %v2502 = vld [vmem:[#allocation9 + $0x120] sm:$0xff]
        %v2503 = vld [vmem:[#allocation9 + $0x128] sm:$0xff]
        %v2504 = vld [vmem:[#allocation9 + $0x130] sm:$0xff]
        %v2505 = vld [vmem:[#allocation9 + $0x138] sm:$0xff]
        %v2506 = vld [vmem:[#allocation9 + $0x140] sm:$0xff]
        %v2507 = vld [vmem:[#allocation9 + $0x148] sm:$0xff]
        %v2508 = vld [vmem:[#allocation9 + $0x150] sm:$0xff]
        %v2509 = vld [vmem:[#allocation9 + $0x158] sm:$0xff]
        %v2510 = vld [vmem:[#allocation9 + $0x160] sm:$0xff]
        %v2511 = vld [vmem:[#allocation9 + $0x168] sm:$0xff]
        %v2512 = vld [vmem:[#allocation9 + $0x170] sm:$0xff]
        %v2513 = vld [vmem:[#allocation9 + $0x178] sm:$0xff]
        %v2514 = vld [vmem:[#allocation9 + $0x180] sm:$0xff]
        %v2515 = vld [vmem:[#allocation9 + $0x188] sm:$0xff]
        %v2516 = vld [vmem:[#allocation9 + $0x190] sm:$0xff]
        %v2517 = vld [vmem:[#allocation9 + $0x198] sm:$0xff]
        %v2518 = vld [vmem:[#allocation9 + $0x1a0] sm:$0xff]
        %v2519 = vld [vmem:[#allocation9 + $0x1a8] sm:$0xff]
        %v2520 = vld [vmem:[#allocation9 + $0x1b0] sm:$0xff]
        %v2521 = vld [vmem:[#allocation9 + $0x1b8] sm:$0xff]
        %v2522 = vld [vmem:[#allocation9 + $0x1c0] sm:$0xff]
        %v2523 = vld [vmem:[#allocation9 + $0x1c8] sm:$0xff]
        %v2524 = vld [vmem:[#allocation9 + $0x1d0] sm:$0xff]
        %v2525 = vld [vmem:[#allocation9 + $0x1d8] sm:$0xff]
        %v2526 = vld [vmem:[#allocation9 + $0x1e0] sm:$0xff]
        %v2527 = vld [vmem:[#allocation9 + $0x1e8] sm:$0xff]
        %v2528 = vld [vmem:[#allocation9 + $0x1f0] sm:$0xff]
        %v2529 = vld [vmem:[#allocation9 + $0x1f8] sm:$0xff]
        %v2530 = vld [vmem:[#allocation9 + $0x200] sm:$0xff]
        %v2531 = vld [vmem:[#allocation9 + $0x208] sm:$0xff]
        %v2532 = vld [vmem:[#allocation9 + $0x210] sm:$0xff]
        %v2533 = vld [vmem:[#allocation9 + $0x218] sm:$0xff]
        %v2534 = vld [vmem:[#allocation9 + $0x220] sm:$0xff]
        %v2535 = vld [vmem:[#allocation9 + $0x228] sm:$0xff]
        %v2536 = vld [vmem:[#allocation9 + $0x230] sm:$0xff]
        %v2537 = vld [vmem:[#allocation9 + $0x238] sm:$0xff]
        %v2538 = vld [vmem:[#allocation9 + $0x240] sm:$0xff]
        %v2539 = vld [vmem:[#allocation9 + $0x248] sm:$0xff]
        %v2540 = vld [vmem:[#allocation9 + $0x250] sm:$0xff]
        %v2541 = vld [vmem:[#allocation9 + $0x258] sm:$0xff]
        %v2542 = vld [vmem:[#allocation9 + $0x260] sm:$0xff]
        %v2543 = vld [vmem:[#allocation9 + $0x268] sm:$0xff]
        %v2544 = vld [vmem:[#allocation9 + $0x270] sm:$0xff]
        %v2545 = vld [vmem:[#allocation9 + $0x278] sm:$0xff]
        %v2546 = vld [vmem:[#allocation9 + $0x280] sm:$0xff]
        %v2547 = vld [vmem:[#allocation9 + $0x288] sm:$0xff]
        %v2548 = vld [vmem:[#allocation9 + $0x290] sm:$0xff]
        %v2549 = vld [vmem:[#allocation9 + $0x298] sm:$0xff]
        %v2550 = vld [vmem:[#allocation9 + $0x2a0] sm:$0xff]
        %v2551 = vld [vmem:[#allocation9 + $0x2a8] sm:$0xff]
        %v2552 = vld [vmem:[#allocation9 + $0x2b0] sm:$0xff]
        %v2553 = vld [vmem:[#allocation9 + $0x2b8] sm:$0xff]
        %v2554 = vld [vmem:[#allocation9 + $0x2c0] sm:$0xff]
        %v2555 = vld [vmem:[#allocation9 + $0x2c8] sm:$0xff]
        %v2556 = vld [vmem:[#allocation9 + $0x2d0] sm:$0xff]
        %v2557 = vld [vmem:[#allocation9 + $0x2d8] sm:$0xff]
        %v2558 = vld [vmem:[#allocation9 + $0x2e0] sm:$0xff]
        %v2559 = vld [vmem:[#allocation9 + $0x2e8] sm:$0xff]
        %v2560 = vld [vmem:[#allocation9 + $0x2f0] sm:$0xff]
        %v2561 = vld [vmem:[#allocation9 + $0x2f8] sm:$0xff]
        %v2562 = vld [vmem:[#allocation9 + $0x300] sm:$0xff]
        %v2563 = vld [vmem:[#allocation9 + $0x308] sm:$0xff]
        %v2564 = vld [vmem:[#allocation9 + $0x310] sm:$0xff]
        %v2565 = vld [vmem:[#allocation9 + $0x318] sm:$0xff]
        %v2566 = vld [vmem:[#allocation9 + $0x320] sm:$0xff]
        %v2567 = vld [vmem:[#allocation9 + $0x328] sm:$0xff]
        %v2568 = vld [vmem:[#allocation9 + $0x330] sm:$0xff]
        %v2569 = vld [vmem:[#allocation9 + $0x338] sm:$0xff]
        %v2570 = vld [vmem:[#allocation9 + $0x340] sm:$0xff]
        %v2571 = vld [vmem:[#allocation9 + $0x348] sm:$0xff]
        %v2572 = vld [vmem:[#allocation9 + $0x350] sm:$0xff]
        %v2573 = vld [vmem:[#allocation9 + $0x358] sm:$0xff]
        %v2574 = vld [vmem:[#allocation9 + $0x360] sm:$0xff]
        %v2575 = vld [vmem:[#allocation9 + $0x368] sm:$0xff]
        %v2576 = vld [vmem:[#allocation9 + $0x370] sm:$0xff]
        %v2577 = vld [vmem:[#allocation9 + $0x378] sm:$0xff]
        %v2578 = vld [vmem:[#allocation9 + $0x380] sm:$0xff]
        %v2579 = vld [vmem:[#allocation9 + $0x388] sm:$0xff]
        %v2580 = vld [vmem:[#allocation9 + $0x390] sm:$0xff]
        %v2581 = vld [vmem:[#allocation9 + $0x398] sm:$0xff]
        %v2582 = vld [vmem:[#allocation9 + $0x3a0] sm:$0xff]
        %v2583 = vld [vmem:[#allocation9 + $0x3a8] sm:$0xff]
        %v2584 = vld [vmem:[#allocation9 + $0x3b0] sm:$0xff]
        %v2585 = vld [vmem:[#allocation9 + $0x3b8] sm:$0xff]
        %v2586 = vld [vmem:[#allocation9 + $0x3c0] sm:$0xff]
        %v2587 = vld [vmem:[#allocation9 + $0x3c8] sm:$0xff]
        %v2588 = vld [vmem:[#allocation9 + $0x3d0] sm:$0xff]
        %v2589 = vld [vmem:[#allocation9 + $0x3d8] sm:$0xff]
        %v2590 = vld [vmem:[#allocation9 + $0x3e0] sm:$0xff]
        %v2591 = vld [vmem:[#allocation9 + $0x3e8] sm:$0xff]
        %v2592 = vld [vmem:[#allocation9 + $0x3f0] sm:$0xff]
        %v2593 = vld [vmem:[#allocation9 + $0x3f8] sm:$0xff]
        %v2594 = vld [vmem:[#allocation9 + $0x400] sm:$0xff]
        %v2595 = vld [vmem:[#allocation9 + $0x408] sm:$0xff]
        %v2596 = vld [vmem:[#allocation9 + $0x410] sm:$0xff]
        %v2597 = vld [vmem:[#allocation9 + $0x418] sm:$0xff]
        %v2598 = vld [vmem:[#allocation9 + $0x420] sm:$0xff]
        %v2599 = vld [vmem:[#allocation9 + $0x428] sm:$0xff]
        %v2600 = vld [vmem:[#allocation9 + $0x430] sm:$0xff]
        %v2601 = vld [vmem:[#allocation9 + $0x438] sm:$0xff]
        %v2602 = vld [vmem:[#allocation9 + $0x440] sm:$0xff]
        %v2603 = vld [vmem:[#allocation9 + $0x448] sm:$0xff]
        %v2604 = vld [vmem:[#allocation9 + $0x450] sm:$0xff]
        %v2605 = vld [vmem:[#allocation9 + $0x458] sm:$0xff]
        %v2606 = vld [vmem:[#allocation9 + $0x460] sm:$0xff]
        %v2607 = vld [vmem:[#allocation9 + $0x468] sm:$0xff]
        %v2608 = vld [vmem:[#allocation9 + $0x470] sm:$0xff]
        %v2609 = vld [vmem:[#allocation9 + $0x478] sm:$0xff]
        %v2610 = vrot.slane 0.0, 7
        %v2611 = vrot.slane %v2285, 7
        %v2612 = vsel %vm833, %v2610, %v2611
        %v2613 = vrot.slane %v2339, 7
        %v2614 = vrot.slane %v2341, 7
        %v2615 = vsel %vm833, %v2613, %v2614
        %v2616 = vrot.slane %v2387, 7
        %v2617 = vrot.slane %v2389, 7
        %v2618 = vsel %vm833, %v2616, %v2617
        %v2619 = vrot.slane %v2287, 7
        %v2620 = vrot.slane %v2288, 7
        %v2621 = vsel %vm833, %v2619, %v2620
        %v2622 = vrot.slane %v2344, 7
        %v2623 = vrot.slane %v2347, 7
        %v2624 = vsel %vm833, %v2622, %v2623
        %v2625 = vrot.slane %v2392, 7
        %v2626 = vrot.slane %v2395, 7
        %v2627 = vsel %vm833, %v2625, %v2626
        %v2628 = vrot.slane %v2290, 7
        %v2629 = vrot.slane %v2291, 7
        %v2630 = vsel %vm833, %v2628, %v2629
        %v2631 = vrot.slane %v2350, 7
        %v2632 = vrot.slane %v2353, 7
        %v2633 = vsel %vm833, %v2631, %v2632
        %v2634 = vrot.slane %v2398, 7
        %v2635 = vrot.slane %v2401, 7
        %v2636 = vsel %vm833, %v2634, %v2635
        %v2637 = vrot.slane %v2286, 7
        %v2638 = vsel %vm833, %v2611, %v2637
        %v2639 = vrot.slane %v2343, 7
        %v2640 = vsel %vm833, %v2614, %v2639
        %v2641 = vrot.slane %v2391, 7
        %v2642 = vsel %vm833, %v2617, %v2641
        %v2643 = vrot.slane %v2289, 7
        %v2644 = vsel %vm833, %v2620, %v2643
        %v2645 = vrot.slane %v2349, 7
        %v2646 = vsel %vm833, %v2623, %v2645
        %v2647 = vrot.slane %v2397, 7
        %v2648 = vsel %vm833, %v2626, %v2647
        %v2649 = vrot.slane %v2292, 7
        %v2650 = vsel %vm833, %v2629, %v2649
        %v2651 = vrot.slane %v2355, 7
        %v2652 = vsel %vm833, %v2632, %v2651
        %v2653 = vrot.slane %v2403, 7
        %v2654 = vsel %vm833, %v2635, %v2653
        %v2655 = vsel %vm833, %v2637, %v2619
        %v2656 = vrot.slane %v2345, 7
        %v2657 = vsel %vm833, %v2639, %v2656
        %v2658 = vrot.slane %v2393, 7
        %v2659 = vsel %vm833, %v2641, %v2658
        %v2660 = vsel %vm833, %v2643, %v2628
        %v2661 = vrot.slane %v2351, 7
        %v2662 = vsel %vm833, %v2645, %v2661
        %v2663 = vrot.slane %v2399, 7
        %v2664 = vsel %vm833, %v2647, %v2663
        %v2665 = vrot.slane %v2293, 7
        %v2666 = vsel %vm833, %v2649, %v2665
        %v2667 = vrot.slane %v2357, 7
        %v2668 = vsel %vm833, %v2651, %v2667
        %v2669 = vrot.slane %v2405, 7
        %v2670 = vsel %vm833, %v2653, %v2669
        %v2671 = vsel %vm833, %v2656, %v2623
        %v2672 = vsel %vm833, %v2658, %v2626
        %v2673 = vsel %vm833, %v2661, %v2632
        %v2674 = vsel %vm833, %v2663, %v2635
        %v2675 = vrot.slane %v2294, 7
        %v2676 = vsel %vm833, %v2665, %v2675
        %v2677 = vrot.slane %v2359, 7
        %v2678 = vsel %vm833, %v2667, %v2677
        %v2679 = vrot.slane %v2407, 7
        %v2680 = vsel %vm833, %v2669, %v2679
        %v2681 = vrot.slane %v2295, 7
        %v2682 = vsel %vm833, %v2675, %v2681
        %v2683 = vrot.slane %v2361, 7
        %v2684 = vsel %vm833, %v2677, %v2683
        %v2685 = vrot.slane %v2409, 7
        %v2686 = vsel %vm833, %v2679, %v2685
        %v2687 = vrot.slane %v2296, 7
        %v2688 = vsel %vm833, %v2681, %v2687
        %v2689 = vrot.slane %v2363, 7
        %v2690 = vsel %vm833, %v2683, %v2689
        %v2691 = vrot.slane %v2411, 7
        %v2692 = vsel %vm833, %v2685, %v2691
        %v2693 = vrot.slane %v2297, 7
        %v2694 = vsel %vm833, %v2687, %v2693
        %v2695 = vrot.slane %v2365, 7
        %v2696 = vsel %vm833, %v2689, %v2695
        %v2697 = vrot.slane %v2413, 7
        %v2698 = vsel %vm833, %v2691, %v2697
        %v2699 = vrot.slane %v2298, 7
        %v2700 = vsel %vm833, %v2693, %v2699
        %v2701 = vrot.slane %v2367, 7
        %v2702 = vsel %vm833, %v2695, %v2701
        %v2703 = vrot.slane %v2415, 7
        %v2704 = vsel %vm833, %v2697, %v2703
        %v2705 = vrot.slane %v2299, 7
        %v2706 = vsel %vm833, %v2699, %v2705
        %v2707 = vrot.slane %v2369, 7
        %v2708 = vsel %vm833, %v2701, %v2707
        %v2709 = vrot.slane %v2417, 7
        %v2710 = vsel %vm833, %v2703, %v2709
        %v2711 = vrot.slane %v2300, 7
        %v2712 = vsel %vm833, %v2705, %v2711
        %v2713 = vrot.slane %v2371, 7
        %v2714 = vsel %vm833, %v2707, %v2713
        %v2715 = vrot.slane %v2419, 7
        %v2716 = vsel %vm833, %v2709, %v2715
        %v2717 = vrot.slane %v2301, 7
        %v2718 = vsel %vm833, %v2711, %v2717
        %v2719 = vrot.slane %v2373, 7
        %v2720 = vsel %vm833, %v2713, %v2719
        %v2721 = vrot.slane %v2421, 7
        %v2722 = vsel %vm833, %v2715, %v2721
        %v2723 = vrot.slane %v2302, 7
        %v2724 = vsel %vm833, %v2717, %v2723
        %v2725 = vrot.slane %v2375, 7
        %v2726 = vsel %vm833, %v2719, %v2725
        %v2727 = vrot.slane %v2423, 7
        %v2728 = vsel %vm833, %v2721, %v2727
        %v2729 = vrot.slane %v2303, 7
        %v2730 = vsel %vm833, %v2723, %v2729
        %v2731 = vrot.slane %v2377, 7
        %v2732 = vsel %vm833, %v2725, %v2731
        %v2733 = vrot.slane %v2425, 7
        %v2734 = vsel %vm833, %v2727, %v2733
        %v2735 = vrot.slane %v2304, 7
        %v2736 = vsel %vm833, %v2729, %v2735
        %v2737 = vrot.slane %v2379, 7
        %v2738 = vsel %vm833, %v2731, %v2737
        %v2739 = vrot.slane %v2427, 7
        %v2740 = vsel %vm833, %v2733, %v2739
        %v2741 = vrot.slane %v2305, 7
        %v2742 = vsel %vm833, %v2735, %v2741
        %v2743 = vrot.slane %v2381, 7
        %v2744 = vsel %vm833, %v2737, %v2743
        %v2745 = vrot.slane %v2429, 7
        %v2746 = vsel %vm833, %v2739, %v2745
        %v2747 = vrot.slane %v2306, 7
        %v2748 = vsel %vm833, %v2741, %v2747
        %v2749 = vrot.slane %v2383, 7
        %v2750 = vsel %vm833, %v2743, %v2749
        %v2751 = vrot.slane %v2431, 7
        %v2752 = vsel %vm833, %v2745, %v2751
        %v2753 = vrot.slane %v2307, 7
        %v2754 = vsel %vm833, %v2747, %v2753
        %v2755 = vrot.slane %v2385, 7
        %v2756 = vsel %vm833, %v2749, %v2755
        %v2757 = vrot.slane %v2433, 7
        %v2758 = vsel %vm833, %v2751, %v2757
        %v2759 = vrot.slane %v2308, 7
        %v2760 = vsel %vm833, %v2753, %v2759
        %v2761 = vrot.slane %v2439, 7
        %v2762 = vsel %vm833, %v2755, %v2761
        %v2763 = vrot.slane %v2435, 7
        %v2764 = vsel %vm833, %v2757, %v2763
        %v2765 = vrot.slane %v2309, 7
        %v2766 = vsel %vm833, %v2759, %v2765
        %v2767 = vrot.slane %v2441, 7
        %v2768 = vsel %vm833, %v2761, %v2767
        %v2769 = vrot.slane %v2446, 7
        %v2770 = vsel %vm833, %v2763, %v2769
        %v2771 = vrot.slane %v2310, 7
        %v2772 = vsel %vm833, %v2765, %v2771
        %v2773 = vrot.slane %v2443, 7
        %v2774 = vsel %vm833, %v2767, %v2773
        %v2775 = vrot.slane %v2448, 7
        %v2776 = vsel %vm833, %v2769, %v2775
        %v2777 = vrot.slane %v2311, 7
        %v2778 = vsel %vm833, %v2771, %v2777
        %v2779 = vrot.slane %v2454, 7
        %v2780 = vsel %vm833, %v2773, %v2779
        %v2781 = vrot.slane %v2450, 7
        %v2782 = vsel %vm833, %v2775, %v2781
        %v2783 = vrot.slane %v2312, 7
        %v2784 = vsel %vm833, %v2777, %v2783
        %v2785 = vrot.slane %v2456, 7
        %v2786 = vsel %vm833, %v2779, %v2785
        %v2787 = vrot.slane %v2461, 7
        %v2788 = vsel %vm833, %v2781, %v2787
        %v2789 = vrot.slane %v2313, 7
        %v2790 = vsel %vm833, %v2783, %v2789
        %v2791 = vrot.slane %v2458, 7
        %v2792 = vsel %vm833, %v2785, %v2791
        %v2793 = vrot.slane %v2463, 7
        %v2794 = vsel %vm833, %v2787, %v2793
        %v2795 = vrot.slane %v2384, 7
        %v2796 = vsel %vm833, %v2755, %v2795
        %v2797 = vrot.slane %v2442, 7
        %v2798 = vsel %vm833, %v2773, %v2797
        %v2799 = vrot.slane %v2314, 7
        %v2800 = vsel %vm833, %v2789, %v2799
        %v2801 = vrot.slane %v2457, 7
        %v2802 = vsel %vm833, %v2791, %v2801
        %v2803 = vrot.slane %v2465, 7
        %v2804 = vsel %vm833, %v2793, %v2803
        %2901 = vmatpush.msra.mxu0 %v2481
        %2902 = vmatpush.msra.mxu0 %v2480
        %2903 = vmatpush.msra.mxu0 %v2479
        %2904 = vmatpush.msra.mxu0 %v2478
        %2905 = vmatpush.msra.mxu0 %v2477
        %2906 = vmatpush.msra.mxu0 %v2476
        %2907 = vmatpush.msra.mxu0 %v2475
        %2908 = vmatpush.msra.mxu0 %v2474
        %2909 = vmatpush.msra.mxu0 %v2473
        %2910 = vmatpush.msra.mxu0 %v2472
        %2911 = vmatpush.msra.mxu0 %v2471
        %2912 = vmatpush.msra.mxu0 %v2470
        %2913 = vmatpush.msra.mxu0 %v2469
        %2914 = vmatpush.msra.mxu0 %v2468
        %2915 = vmatpush.msra.mxu0 %v2467
        %2916 = vmatpush.msra.mxu0 %v2466
        %2917 = vmatmul.f32.gmra.mxu0 %v2612
        %v2918 = vpop.f32.mrf.mxu0
        %v2919 = vadd.f32 0.0, %v2918
        %2920 = vmatmul.f32.gmra.mxu0 %v2638
        %v2921 = vpop.f32.mrf.mxu0
        %v2922 = vadd.f32 0.0, %v2921
        %2923 = vmatmul.f32.gmra.mxu0 %v2655
        %v2924 = vpop.f32.mrf.mxu0
        %2925 = vmatmul.f32.gmra.mxu0 %v2621
        %v2926 = vpop.f32.mrf.mxu0
        %v2927 = vadd.f32 0.0, %v2926
        %2928 = vmatmul.f32.gmra.mxu0 %v2644
        %v2929 = vpop.f32.mrf.mxu0
        %v2930 = vadd.f32 0.0, %v2929
        %2931 = vmatmul.f32.gmra.mxu0 %v2660
        %v2932 = vpop.f32.mrf.mxu0
        %2933 = vmatmul.f32.gmra.mxu0 %v2630
        %v2934 = vpop.f32.mrf.mxu0
        %v2935 = vadd.f32 0.0, %v2934
        %2936 = vmatmul.f32.gmra.mxu0 %v2650
        %v2937 = vpop.f32.mrf.mxu0
        %v2938 = vadd.f32 0.0, %v2937
        %2939 = vmatmul.f32.gmra.mxu0 %v2666
        %v2940 = vpop.f32.mrf.mxu0
        %2941 = vmatmul.f32.gmra.mxu0 %v2676
        %v2942 = vpop.f32.mrf.mxu0
        %v2943 = vadd.f32 0.0, %v2942
        %2944 = vmatmul.f32.gmra.mxu0 %v2682
        %v2945 = vpop.f32.mrf.mxu0
        %v2946 = vadd.f32 0.0, %v2945
        %2947 = vmatmul.f32.gmra.mxu0 %v2688
        %v2948 = vpop.f32.mrf.mxu0
        %2949 = vmatmul.f32.gmra.mxu0 %v2694
        %v2950 = vpop.f32.mrf.mxu0
        %v2951 = vadd.f32 0.0, %v2950
        %2952 = vmatmul.f32.gmra.mxu0 %v2700
        %v2953 = vpop.f32.mrf.mxu0
        %v2954 = vadd.f32 0.0, %v2953
        %2955 = vmatmul.f32.gmra.mxu0 %v2706
        %v2956 = vpop.f32.mrf.mxu0
        %2957 = vmatmul.f32.gmra.mxu0 %v2712
        %v2958 = vpop.f32.mrf.mxu0
        %v2959 = vadd.f32 0.0, %v2958
        %2960 = vmatmul.f32.gmra.mxu0 %v2718
        %v2961 = vpop.f32.mrf.mxu0
        %v2962 = vadd.f32 0.0, %v2961
        %2963 = vmatmul.f32.gmra.mxu0 %v2724
        %v2964 = vpop.f32.mrf.mxu0
        %2965 = vmatmul.f32.gmra.mxu0 %v2730
        %v2966 = vpop.f32.mrf.mxu0
        %v2967 = vadd.f32 0.0, %v2966
        %2968 = vmatmul.f32.gmra.mxu0 %v2736
        %v2969 = vpop.f32.mrf.mxu0
        %v2970 = vadd.f32 0.0, %v2969
        %2971 = vmatmul.f32.gmra.mxu0 %v2742
        %v2972 = vpop.f32.mrf.mxu0
        %2973 = vmatmul.f32.gmra.mxu0 %v2748
        %v2974 = vpop.f32.mrf.mxu0
        %v2975 = vadd.f32 0.0, %v2974
        %2976 = vmatmul.f32.gmra.mxu0 %v2754
        %v2977 = vpop.f32.mrf.mxu0
        %v2978 = vadd.f32 0.0, %v2977
        %2979 = vmatmul.f32.gmra.mxu0 %v2760
        %v2980 = vpop.f32.mrf.mxu0
        %2981 = vdwg.mxu0
        %2982 = vmatpush.msra.mxu0 %v2497
        %2983 = vmatpush.msra.mxu0 %v2496
        %2984 = vmatpush.msra.mxu0 %v2495
        %2985 = vmatpush.msra.mxu0 %v2494
        %2986 = vmatpush.msra.mxu0 %v2493
        %2987 = vmatpush.msra.mxu0 %v2492
        %2988 = vmatpush.msra.mxu0 %v2491
        %2989 = vmatpush.msra.mxu0 %v2490
        %2990 = vmatpush.msra.mxu0 %v2489
        %2991 = vmatpush.msra.mxu0 %v2488
        %2992 = vmatpush.msra.mxu0 %v2487
        %2993 = vmatpush.msra.mxu0 %v2486
        %2994 = vmatpush.msra.mxu0 %v2485
        %2995 = vmatpush.msra.mxu0 %v2484
        %2996 = vmatpush.msra.mxu0 %v2483
        %2997 = vmatpush.msra.mxu0 %v2482
        %2998 = vmatmul.f32.gmra.mxu0 %v2615
        %v2999 = vpop.f32.mrf.mxu0
        %v3000 = vadd.f32 %v2919, %v2999
        %3001 = vmatmul.f32.gmra.mxu0 %v2640
        %v3002 = vpop.f32.mrf.mxu0
        %v3003 = vadd.f32 %v2922, %v3002
        %3004 = vmatmul.f32.gmra.mxu0 %v2657
        %v3005 = vpop.f32.mrf.mxu0
        %3006 = vmatmul.f32.gmra.mxu0 %v2671
        %v3007 = vpop.f32.mrf.mxu0
        %v3008 = vadd.f32 %v2927, %v3007
        %3009 = vmatmul.f32.gmra.mxu0 %v2646
        %v3010 = vpop.f32.mrf.mxu0
        %v3011 = vadd.f32 %v2930, %v3010
        %3012 = vmatmul.f32.gmra.mxu0 %v2662
        %v3013 = vpop.f32.mrf.mxu0
        %3014 = vmatmul.f32.gmra.mxu0 %v2673
        %v3015 = vpop.f32.mrf.mxu0
        %v3016 = vadd.f32 %v2935, %v3015
        %3017 = vmatmul.f32.gmra.mxu0 %v2652
        %v3018 = vpop.f32.mrf.mxu0
        %v3019 = vadd.f32 %v2938, %v3018
        %3020 = vmatmul.f32.gmra.mxu0 %v2668
        %v3021 = vpop.f32.mrf.mxu0
        %3022 = vmatmul.f32.gmra.mxu0 %v2678
        %v3023 = vpop.f32.mrf.mxu0
        %v3024 = vadd.f32 %v2943, %v3023
        %3025 = vmatmul.f32.gmra.mxu0 %v2684
        %v3026 = vpop.f32.mrf.mxu0
        %v3027 = vadd.f32 %v2946, %v3026
        %3028 = vmatmul.f32.gmra.mxu0 %v2690
        %v3029 = vpop.f32.mrf.mxu0
        %3030 = vmatmul.f32.gmra.mxu0 %v2696
        %v3031 = vpop.f32.mrf.mxu0
        %v3032 = vadd.f32 %v2951, %v3031
        %3033 = vmatmul.f32.gmra.mxu0 %v2702
        %v3034 = vpop.f32.mrf.mxu0
        %v3035 = vadd.f32 %v2954, %v3034
        %3036 = vmatmul.f32.gmra.mxu0 %v2708
        %v3037 = vpop.f32.mrf.mxu0
        %3038 = vmatmul.f32.gmra.mxu0 %v2714
        %v3039 = vpop.f32.mrf.mxu0
        %v3040 = vadd.f32 %v2959, %v3039
        %3041 = vmatmul.f32.gmra.mxu0 %v2720
        %v3042 = vpop.f32.mrf.mxu0
        %v3043 = vadd.f32 %v2962, %v3042
        %3044 = vmatmul.f32.gmra.mxu0 %v2726
        %v3045 = vpop.f32.mrf.mxu0
        %3046 = vmatmul.f32.gmra.mxu0 %v2732
        %v3047 = vpop.f32.mrf.mxu0
        %v3048 = vadd.f32 %v2967, %v3047
        %3049 = vmatmul.f32.gmra.mxu0 %v2738
        %v3050 = vpop.f32.mrf.mxu0
        %v3051 = vadd.f32 %v2970, %v3050
        %3052 = vmatmul.f32.gmra.mxu0 %v2744
        %v3053 = vpop.f32.mrf.mxu0
        %3054 = vmatmul.f32.gmra.mxu0 %v2750
        %v3055 = vpop.f32.mrf.mxu0
        %v3056 = vadd.f32 %v2975, %v3055
        %3057 = vmatmul.f32.gmra.mxu0 %v2756
        %v3058 = vpop.f32.mrf.mxu0
        %v3059 = vadd.f32 %v2978, %v3058
        %3060 = vmatmul.f32.gmra.mxu0 %v2796
        %v3061 = vpop.f32.mrf.mxu0
        %3062 = vdwg.mxu0
        %3063 = vmatpush.msra.mxu0 %v2513
        %3064 = vmatpush.msra.mxu0 %v2512
        %3065 = vmatpush.msra.mxu0 %v2511
        %3066 = vmatpush.msra.mxu0 %v2510
        %3067 = vmatpush.msra.mxu0 %v2509
        %3068 = vmatpush.msra.mxu0 %v2508
        %3069 = vmatpush.msra.mxu0 %v2507
        %3070 = vmatpush.msra.mxu0 %v2506
        %3071 = vmatpush.msra.mxu0 %v2505
        %3072 = vmatpush.msra.mxu0 %v2504
        %3073 = vmatpush.msra.mxu0 %v2503
        %3074 = vmatpush.msra.mxu0 %v2502
        %3075 = vmatpush.msra.mxu0 %v2501
        %3076 = vmatpush.msra.mxu0 %v2500
        %3077 = vmatpush.msra.mxu0 %v2499
        %3078 = vmatpush.msra.mxu0 %v2498
        %3079 = vmatmul.f32.gmra.mxu0 %v2618
        %v3080 = vpop.f32.mrf.mxu0
        %v3081 = vadd.f32 %v3000, %v3080
        %3082 = vmatmul.f32.gmra.mxu0 %v2642
        %v3083 = vpop.f32.mrf.mxu0
        %v3084 = vadd.f32 %v3003, %v3083
        %3085 = vmatmul.f32.gmra.mxu0 %v2659
        %v3086 = vpop.f32.mrf.mxu0
        %3087 = vmatmul.f32.gmra.mxu0 %v2672
        %v3088 = vpop.f32.mrf.mxu0
        %v3089 = vadd.f32 %v3008, %v3088
        %3090 = vmatmul.f32.gmra.mxu0 %v2648
        %v3091 = vpop.f32.mrf.mxu0
        %v3092 = vadd.f32 %v3011, %v3091
        %3093 = vmatmul.f32.gmra.mxu0 %v2664
        %v3094 = vpop.f32.mrf.mxu0
        %3095 = vmatmul.f32.gmra.mxu0 %v2674
        %v3096 = vpop.f32.mrf.mxu0
        %v3097 = vadd.f32 %v3016, %v3096
        %3098 = vmatmul.f32.gmra.mxu0 %v2654
        %v3099 = vpop.f32.mrf.mxu0
        %v3100 = vadd.f32 %v3019, %v3099
        %3101 = vmatmul.f32.gmra.mxu0 %v2670
        %v3102 = vpop.f32.mrf.mxu0
        %3103 = vmatmul.f32.gmra.mxu0 %v2680
        %v3104 = vpop.f32.mrf.mxu0
        %v3105 = vadd.f32 %v3024, %v3104
        %3106 = vmatmul.f32.gmra.mxu0 %v2686
        %v3107 = vpop.f32.mrf.mxu0
        %v3108 = vadd.f32 %v3027, %v3107
        %3109 = vmatmul.f32.gmra.mxu0 %v2692
        %v3110 = vpop.f32.mrf.mxu0
        %3111 = vmatmul.f32.gmra.mxu0 %v2698
        %v3112 = vpop.f32.mrf.mxu0
        %v3113 = vadd.f32 %v3032, %v3112
        %3114 = vmatmul.f32.gmra.mxu0 %v2704
        %v3115 = vpop.f32.mrf.mxu0
        %v3116 = vadd.f32 %v3035, %v3115
        %3117 = vmatmul.f32.gmra.mxu0 %v2710
        %v3118 = vpop.f32.mrf.mxu0
        %3119 = vmatmul.f32.gmra.mxu0 %v2716
        %v3120 = vpop.f32.mrf.mxu0
        %v3121 = vadd.f32 %v3040, %v3120
        %3122 = vmatmul.f32.gmra.mxu0 %v2722
        %v3123 = vpop.f32.mrf.mxu0
        %v3124 = vadd.f32 %v3043, %v3123
        %3125 = vmatmul.f32.gmra.mxu0 %v2728
        %v3126 = vpop.f32.mrf.mxu0
        %3127 = vmatmul.f32.gmra.mxu0 %v2734
        %v3128 = vpop.f32.mrf.mxu0
        %v3129 = vadd.f32 %v3048, %v3128
        %3130 = vmatmul.f32.gmra.mxu0 %v2740
        %v3131 = vpop.f32.mrf.mxu0
        %v3132 = vadd.f32 %v3051, %v3131
        %3133 = vmatmul.f32.gmra.mxu0 %v2746
        %v3134 = vpop.f32.mrf.mxu0
        %3135 = vmatmul.f32.gmra.mxu0 %v2752
        %v3136 = vpop.f32.mrf.mxu0
        %v3137 = vadd.f32 %v3056, %v3136
        %3138 = vmatmul.f32.gmra.mxu0 %v2758
        %v3139 = vpop.f32.mrf.mxu0
        %v3140 = vadd.f32 %v3059, %v3139
        %3141 = vmatmul.f32.gmra.mxu0 %v2764
        %v3142 = vpop.f32.mrf.mxu0
        %3143 = vdwg.mxu0
        %3144 = vmatpush.msra.mxu0 %v2529
        %3145 = vmatpush.msra.mxu0 %v2528
        %3146 = vmatpush.msra.mxu0 %v2527
        %3147 = vmatpush.msra.mxu0 %v2526
        %3148 = vmatpush.msra.mxu0 %v2525
        %3149 = vmatpush.msra.mxu0 %v2524
        %3150 = vmatpush.msra.mxu0 %v2523
        %3151 = vmatpush.msra.mxu0 %v2522
        %3152 = vmatpush.msra.mxu0 %v2521
        %3153 = vmatpush.msra.mxu0 %v2520
        %3154 = vmatpush.msra.mxu0 %v2519
        %3155 = vmatpush.msra.mxu0 %v2518
        %3156 = vmatpush.msra.mxu0 %v2517
        %3157 = vmatpush.msra.mxu0 %v2516
        %3158 = vmatpush.msra.mxu0 %v2515
        %3159 = vmatpush.msra.mxu0 %v2514
        %3160 = vmatmul.f32.gmra.mxu0 %v2621
        %v3161 = vpop.f32.mrf.mxu0
        %v3162 = vadd.f32 %v3081, %v3161
        %3163 = vmatmul.f32.gmra.mxu0 %v2644
        %v3164 = vpop.f32.mrf.mxu0
        %v3165 = vadd.f32 %v3084, %v3164
        %3166 = vmatmul.f32.gmra.mxu0 %v2660
        %v3167 = vpop.f32.mrf.mxu0
        %3168 = vmatmul.f32.gmra.mxu0 %v2630
        %v3169 = vpop.f32.mrf.mxu0
        %v3170 = vadd.f32 %v3089, %v3169
        %3171 = vmatmul.f32.gmra.mxu0 %v2650
        %v3172 = vpop.f32.mrf.mxu0
        %v3173 = vadd.f32 %v3092, %v3172
        %3174 = vmatmul.f32.gmra.mxu0 %v2666
        %v3175 = vpop.f32.mrf.mxu0
        %3176 = vmatmul.f32.gmra.mxu0 %v2676
        %v3177 = vpop.f32.mrf.mxu0
        %v3178 = vadd.f32 %v3097, %v3177
        %3179 = vmatmul.f32.gmra.mxu0 %v2682
        %v3180 = vpop.f32.mrf.mxu0
        %v3181 = vadd.f32 %v3100, %v3180
        %3182 = vmatmul.f32.gmra.mxu0 %v2688
        %v3183 = vpop.f32.mrf.mxu0
        %3184 = vmatmul.f32.gmra.mxu0 %v2694
        %v3185 = vpop.f32.mrf.mxu0
        %v3186 = vadd.f32 %v3105, %v3185
        %3187 = vmatmul.f32.gmra.mxu0 %v2700
        %v3188 = vpop.f32.mrf.mxu0
        %v3189 = vadd.f32 %v3108, %v3188
        %3190 = vmatmul.f32.gmra.mxu0 %v2706
        %v3191 = vpop.f32.mrf.mxu0
        %3192 = vmatmul.f32.gmra.mxu0 %v2712
        %v3193 = vpop.f32.mrf.mxu0
        %v3194 = vadd.f32 %v3113, %v3193
        %3195 = vmatmul.f32.gmra.mxu0 %v2718
        %v3196 = vpop.f32.mrf.mxu0
        %v3197 = vadd.f32 %v3116, %v3196
        %3198 = vmatmul.f32.gmra.mxu0 %v2724
        %v3199 = vpop.f32.mrf.mxu0
        %3200 = vmatmul.f32.gmra.mxu0 %v2730
        %v3201 = vpop.f32.mrf.mxu0
        %v3202 = vadd.f32 %v3121, %v3201
        %3203 = vmatmul.f32.gmra.mxu0 %v2736
        %v3204 = vpop.f32.mrf.mxu0
        %v3205 = vadd.f32 %v3124, %v3204
        %3206 = vmatmul.f32.gmra.mxu0 %v2742
        %v3207 = vpop.f32.mrf.mxu0
        %3208 = vmatmul.f32.gmra.mxu0 %v2748
        %v3209 = vpop.f32.mrf.mxu0
        %v3210 = vadd.f32 %v3129, %v3209
        %3211 = vmatmul.f32.gmra.mxu0 %v2754
        %v3212 = vpop.f32.mrf.mxu0
        %v3213 = vadd.f32 %v3132, %v3212
        %3214 = vmatmul.f32.gmra.mxu0 %v2760
        %v3215 = vpop.f32.mrf.mxu0
        %3216 = vmatmul.f32.gmra.mxu0 %v2766
        %v3217 = vpop.f32.mrf.mxu0
        %v3218 = vadd.f32 %v3137, %v3217
        %3219 = vmatmul.f32.gmra.mxu0 %v2772
        %v3220 = vpop.f32.mrf.mxu0
        %v3221 = vadd.f32 %v3140, %v3220
        %3222 = vmatmul.f32.gmra.mxu0 %v2778
        %v3223 = vpop.f32.mrf.mxu0
        %3224 = vdwg.mxu0
        %3225 = vmatpush.msra.mxu0 %v2545
        %3226 = vmatpush.msra.mxu0 %v2544
        %3227 = vmatpush.msra.mxu0 %v2543
        %3228 = vmatpush.msra.mxu0 %v2542
        %3229 = vmatpush.msra.mxu0 %v2541
        %3230 = vmatpush.msra.mxu0 %v2540
        %3231 = vmatpush.msra.mxu0 %v2539
        %3232 = vmatpush.msra.mxu0 %v2538
        %3233 = vmatpush.msra.mxu0 %v2537
        %3234 = vmatpush.msra.mxu0 %v2536
        %3235 = vmatpush.msra.mxu0 %v2535
        %3236 = vmatpush.msra.mxu0 %v2534
        %3237 = vmatpush.msra.mxu0 %v2533
        %3238 = vmatpush.msra.mxu0 %v2532
        %3239 = vmatpush.msra.mxu0 %v2531
        %3240 = vmatpush.msra.mxu0 %v2530
        %3241 = vmatmul.f32.gmra.mxu0 %v2624
        %v3242 = vpop.f32.mrf.mxu0
        %v3243 = vadd.f32 %v3162, %v3242
        %3244 = vmatmul.f32.gmra.mxu0 %v2646
        %v3245 = vpop.f32.mrf.mxu0
        %v3246 = vadd.f32 %v3165, %v3245
        %3247 = vmatmul.f32.gmra.mxu0 %v2662
        %v3248 = vpop.f32.mrf.mxu0
        %3249 = vmatmul.f32.gmra.mxu0 %v2673
        %v3250 = vpop.f32.mrf.mxu0
        %v3251 = vadd.f32 %v3170, %v3250
        %3252 = vmatmul.f32.gmra.mxu0 %v2652
        %v3253 = vpop.f32.mrf.mxu0
        %v3254 = vadd.f32 %v3173, %v3253
        %3255 = vmatmul.f32.gmra.mxu0 %v2668
        %v3256 = vpop.f32.mrf.mxu0
        %3257 = vmatmul.f32.gmra.mxu0 %v2678
        %v3258 = vpop.f32.mrf.mxu0
        %v3259 = vadd.f32 %v3178, %v3258
        %3260 = vmatmul.f32.gmra.mxu0 %v2684
        %v3261 = vpop.f32.mrf.mxu0
        %v3262 = vadd.f32 %v3181, %v3261
        %3263 = vmatmul.f32.gmra.mxu0 %v2690
        %v3264 = vpop.f32.mrf.mxu0
        %3265 = vmatmul.f32.gmra.mxu0 %v2696
        %v3266 = vpop.f32.mrf.mxu0
        %v3267 = vadd.f32 %v3186, %v3266
        %3268 = vmatmul.f32.gmra.mxu0 %v2702
        %v3269 = vpop.f32.mrf.mxu0
        %v3270 = vadd.f32 %v3189, %v3269
        %3271 = vmatmul.f32.gmra.mxu0 %v2708
        %v3272 = vpop.f32.mrf.mxu0
        %3273 = vmatmul.f32.gmra.mxu0 %v2714
        %v3274 = vpop.f32.mrf.mxu0
        %v3275 = vadd.f32 %v3194, %v3274
        %3276 = vmatmul.f32.gmra.mxu0 %v2720
        %v3277 = vpop.f32.mrf.mxu0
        %v3278 = vadd.f32 %v3197, %v3277
        %3279 = vmatmul.f32.gmra.mxu0 %v2726
        %v3280 = vpop.f32.mrf.mxu0
        %3281 = vmatmul.f32.gmra.mxu0 %v2732
        %v3282 = vpop.f32.mrf.mxu0
        %v3283 = vadd.f32 %v3202, %v3282
        %3284 = vmatmul.f32.gmra.mxu0 %v2738
        %v3285 = vpop.f32.mrf.mxu0
        %v3286 = vadd.f32 %v3205, %v3285
        %3287 = vmatmul.f32.gmra.mxu0 %v2744
        %v3288 = vpop.f32.mrf.mxu0
        %3289 = vmatmul.f32.gmra.mxu0 %v2750
        %v3290 = vpop.f32.mrf.mxu0
        %v3291 = vadd.f32 %v3210, %v3290
        %3292 = vmatmul.f32.gmra.mxu0 %v2756
        %v3293 = vpop.f32.mrf.mxu0
        %v3294 = vadd.f32 %v3213, %v3293
        %3295 = vmatmul.f32.gmra.mxu0 %v2762
        %v3296 = vpop.f32.mrf.mxu0
        %3297 = vmatmul.f32.gmra.mxu0 %v2768
        %v3298 = vpop.f32.mrf.mxu0
        %v3299 = vadd.f32 %v3218, %v3298
        %3300 = vmatmul.f32.gmra.mxu0 %v2774
        %v3301 = vpop.f32.mrf.mxu0
        %v3302 = vadd.f32 %v3221, %v3301
        %3303 = vmatmul.f32.gmra.mxu0 %v2798
        %v3304 = vpop.f32.mrf.mxu0
        %3305 = vdwg.mxu0
        %3306 = vmatpush.msra.mxu0 %v2561
        %3307 = vmatpush.msra.mxu0 %v2560
        %3308 = vmatpush.msra.mxu0 %v2559
        %3309 = vmatpush.msra.mxu0 %v2558
        %3310 = vmatpush.msra.mxu0 %v2557
        %3311 = vmatpush.msra.mxu0 %v2556
        %3312 = vmatpush.msra.mxu0 %v2555
        %3313 = vmatpush.msra.mxu0 %v2554
        %3314 = vmatpush.msra.mxu0 %v2553
        %3315 = vmatpush.msra.mxu0 %v2552
        %3316 = vmatpush.msra.mxu0 %v2551
        %3317 = vmatpush.msra.mxu0 %v2550
        %3318 = vmatpush.msra.mxu0 %v2549
        %3319 = vmatpush.msra.mxu0 %v2548
        %3320 = vmatpush.msra.mxu0 %v2547
        %3321 = vmatpush.msra.mxu0 %v2546
        %3322 = vmatmul.f32.gmra.mxu0 %v2627
        %v3323 = vpop.f32.mrf.mxu0
        %v3324 = vadd.f32 %v3243, %v3323
        %3325 = vmatmul.f32.gmra.mxu0 %v2648
        %v3326 = vpop.f32.mrf.mxu0
        %v3327 = vadd.f32 %v3246, %v3326
        %3328 = vmatmul.f32.gmra.mxu0 %v2664
        %v3329 = vpop.f32.mrf.mxu0
        %3330 = vmatmul.f32.gmra.mxu0 %v2674
        %v3331 = vpop.f32.mrf.mxu0
        %v3332 = vadd.f32 %v3251, %v3331
        %3333 = vmatmul.f32.gmra.mxu0 %v2654
        %v3334 = vpop.f32.mrf.mxu0
        %v3335 = vadd.f32 %v3254, %v3334
        %3336 = vmatmul.f32.gmra.mxu0 %v2670
        %v3337 = vpop.f32.mrf.mxu0
        %3338 = vmatmul.f32.gmra.mxu0 %v2680
        %v3339 = vpop.f32.mrf.mxu0
        %v3340 = vadd.f32 %v3259, %v3339
        %3341 = vmatmul.f32.gmra.mxu0 %v2686
        %v3342 = vpop.f32.mrf.mxu0
        %v3343 = vadd.f32 %v3262, %v3342
        %3344 = vmatmul.f32.gmra.mxu0 %v2692
        %v3345 = vpop.f32.mrf.mxu0
        %3346 = vmatmul.f32.gmra.mxu0 %v2698
        %v3347 = vpop.f32.mrf.mxu0
        %v3348 = vadd.f32 %v3267, %v3347
        %3349 = vmatmul.f32.gmra.mxu0 %v2704
        %v3350 = vpop.f32.mrf.mxu0
        %v3351 = vadd.f32 %v3270, %v3350
        %3352 = vmatmul.f32.gmra.mxu0 %v2710
        %v3353 = vpop.f32.mrf.mxu0
        %3354 = vmatmul.f32.gmra.mxu0 %v2716
        %v3355 = vpop.f32.mrf.mxu0
        %v3356 = vadd.f32 %v3275, %v3355
        %3357 = vmatmul.f32.gmra.mxu0 %v2722
        %v3358 = vpop.f32.mrf.mxu0
        %v3359 = vadd.f32 %v3278, %v3358
        %3360 = vmatmul.f32.gmra.mxu0 %v2728
        %v3361 = vpop.f32.mrf.mxu0
        %3362 = vmatmul.f32.gmra.mxu0 %v2734
        %v3363 = vpop.f32.mrf.mxu0
        %v3364 = vadd.f32 %v3283, %v3363
        %3365 = vmatmul.f32.gmra.mxu0 %v2740
        %v3366 = vpop.f32.mrf.mxu0
        %v3367 = vadd.f32 %v3286, %v3366
        %3368 = vmatmul.f32.gmra.mxu0 %v2746
        %v3369 = vpop.f32.mrf.mxu0
        %3370 = vmatmul.f32.gmra.mxu0 %v2752
        %v3371 = vpop.f32.mrf.mxu0
        %v3372 = vadd.f32 %v3291, %v3371
        %3373 = vmatmul.f32.gmra.mxu0 %v2758
        %v3374 = vpop.f32.mrf.mxu0
        %v3375 = vadd.f32 %v3294, %v3374
        %3376 = vmatmul.f32.gmra.mxu0 %v2764
        %v3377 = vpop.f32.mrf.mxu0
        %3378 = vmatmul.f32.gmra.mxu0 %v2770
        %v3379 = vpop.f32.mrf.mxu0
        %v3380 = vadd.f32 %v3299, %v3379
        %3381 = vmatmul.f32.gmra.mxu0 %v2776
        %v3382 = vpop.f32.mrf.mxu0
        %v3383 = vadd.f32 %v3302, %v3382
        %3384 = vmatmul.f32.gmra.mxu0 %v2782
        %v3385 = vpop.f32.mrf.mxu0
        %3386 = vdwg.mxu0
        %3387 = vmatpush.msra.mxu0 %v2577
        %3388 = vmatpush.msra.mxu0 %v2576
        %3389 = vmatpush.msra.mxu0 %v2575
        %3390 = vmatpush.msra.mxu0 %v2574
        %3391 = vmatpush.msra.mxu0 %v2573
        %3392 = vmatpush.msra.mxu0 %v2572
        %3393 = vmatpush.msra.mxu0 %v2571
        %3394 = vmatpush.msra.mxu0 %v2570
        %3395 = vmatpush.msra.mxu0 %v2569
        %3396 = vmatpush.msra.mxu0 %v2568
        %3397 = vmatpush.msra.mxu0 %v2567
        %3398 = vmatpush.msra.mxu0 %v2566
        %3399 = vmatpush.msra.mxu0 %v2565
        %3400 = vmatpush.msra.mxu0 %v2564
        %3401 = vmatpush.msra.mxu0 %v2563
        %3402 = vmatpush.msra.mxu0 %v2562
        %3403 = vmatmul.f32.gmra.mxu0 %v2630
        %v3404 = vpop.f32.mrf.mxu0
        %v3405 = vadd.f32 %v3324, %v3404
        %3406 = vmatmul.f32.gmra.mxu0 %v2650
        %v3407 = vpop.f32.mrf.mxu0
        %v3408 = vadd.f32 %v3327, %v3407
        %3409 = vmatmul.f32.gmra.mxu0 %v2666
        %v3410 = vpop.f32.mrf.mxu0
        %3411 = vmatmul.f32.gmra.mxu0 %v2676
        %v3412 = vpop.f32.mrf.mxu0
        %v3413 = vadd.f32 %v3332, %v3412
        %3414 = vmatmul.f32.gmra.mxu0 %v2682
        %v3415 = vpop.f32.mrf.mxu0
        %v3416 = vadd.f32 %v3335, %v3415
        %3417 = vmatmul.f32.gmra.mxu0 %v2688
        %v3418 = vpop.f32.mrf.mxu0
        %3419 = vmatmul.f32.gmra.mxu0 %v2694
        %v3420 = vpop.f32.mrf.mxu0
        %v3421 = vadd.f32 %v3340, %v3420
        %3422 = vmatmul.f32.gmra.mxu0 %v2700
        %v3423 = vpop.f32.mrf.mxu0
        %v3424 = vadd.f32 %v3343, %v3423
        %3425 = vmatmul.f32.gmra.mxu0 %v2706
        %v3426 = vpop.f32.mrf.mxu0
        %3427 = vmatmul.f32.gmra.mxu0 %v2712
        %v3428 = vpop.f32.mrf.mxu0
        %v3429 = vadd.f32 %v3348, %v3428
        %3430 = vmatmul.f32.gmra.mxu0 %v2718
        %v3431 = vpop.f32.mrf.mxu0
        %v3432 = vadd.f32 %v3351, %v3431
        %3433 = vmatmul.f32.gmra.mxu0 %v2724
        %v3434 = vpop.f32.mrf.mxu0
        %3435 = vmatmul.f32.gmra.mxu0 %v2730
        %v3436 = vpop.f32.mrf.mxu0
        %v3437 = vadd.f32 %v3356, %v3436
        %3438 = vmatmul.f32.gmra.mxu0 %v2736
        %v3439 = vpop.f32.mrf.mxu0
        %v3440 = vadd.f32 %v3359, %v3439
        %3441 = vmatmul.f32.gmra.mxu0 %v2742
        %v3442 = vpop.f32.mrf.mxu0
        %3443 = vmatmul.f32.gmra.mxu0 %v2748
        %v3444 = vpop.f32.mrf.mxu0
        %v3445 = vadd.f32 %v3364, %v3444
        %3446 = vmatmul.f32.gmra.mxu0 %v2754
        %v3447 = vpop.f32.mrf.mxu0
        %v3448 = vadd.f32 %v3367, %v3447
        %3449 = vmatmul.f32.gmra.mxu0 %v2760
        %v3450 = vpop.f32.mrf.mxu0
        %3451 = vmatmul.f32.gmra.mxu0 %v2766
        %v3452 = vpop.f32.mrf.mxu0
        %v3453 = vadd.f32 %v3372, %v3452
        %3454 = vmatmul.f32.gmra.mxu0 %v2772
        %v3455 = vpop.f32.mrf.mxu0
        %v3456 = vadd.f32 %v3375, %v3455
        %3457 = vmatmul.f32.gmra.mxu0 %v2778
        %v3458 = vpop.f32.mrf.mxu0
        %3459 = vmatmul.f32.gmra.mxu0 %v2784
        %v3460 = vpop.f32.mrf.mxu0
        %v3461 = vadd.f32 %v3380, %v3460
        %3462 = vmatmul.f32.gmra.mxu0 %v2790
        %v3463 = vpop.f32.mrf.mxu0
        %v3464 = vadd.f32 %v3383, %v3463
        %3465 = vmatmul.f32.gmra.mxu0 %v2800
        %v3466 = vpop.f32.mrf.mxu0
        %3467 = vdwg.mxu0
        %3468 = vmatpush.msra.mxu0 %v2593
        %3469 = vmatpush.msra.mxu0 %v2592
        %3470 = vmatpush.msra.mxu0 %v2591
        %3471 = vmatpush.msra.mxu0 %v2590
        %3472 = vmatpush.msra.mxu0 %v2589
        %3473 = vmatpush.msra.mxu0 %v2588
        %3474 = vmatpush.msra.mxu0 %v2587
        %3475 = vmatpush.msra.mxu0 %v2586
        %3476 = vmatpush.msra.mxu0 %v2585
        %3477 = vmatpush.msra.mxu0 %v2584
        %3478 = vmatpush.msra.mxu0 %v2583
        %3479 = vmatpush.msra.mxu0 %v2582
        %3480 = vmatpush.msra.mxu0 %v2581
        %3481 = vmatpush.msra.mxu0 %v2580
        %3482 = vmatpush.msra.mxu0 %v2579
        %3483 = vmatpush.msra.mxu0 %v2578
        %3484 = vmatmul.f32.gmra.mxu0 %v2633
        %v3485 = vpop.f32.mrf.mxu0
        %v3486 = vadd.f32 %v3405, %v3485
        %3487 = vmatmul.f32.gmra.mxu0 %v2652
        %v3488 = vpop.f32.mrf.mxu0
        %v3489 = vadd.f32 %v3408, %v3488
        %3490 = vmatmul.f32.gmra.mxu0 %v2668
        %v3491 = vpop.f32.mrf.mxu0
        %3492 = vmatmul.f32.gmra.mxu0 %v2678
        %v3493 = vpop.f32.mrf.mxu0
        %v3494 = vadd.f32 %v3413, %v3493
        %3495 = vmatmul.f32.gmra.mxu0 %v2684
        %v3496 = vpop.f32.mrf.mxu0
        %v3497 = vadd.f32 %v3416, %v3496
        %3498 = vmatmul.f32.gmra.mxu0 %v2690
        %v3499 = vpop.f32.mrf.mxu0
        %3500 = vmatmul.f32.gmra.mxu0 %v2696
        %v3501 = vpop.f32.mrf.mxu0
        %v3502 = vadd.f32 %v3421, %v3501
        %3503 = vmatmul.f32.gmra.mxu0 %v2702
        %v3504 = vpop.f32.mrf.mxu0
        %v3505 = vadd.f32 %v3424, %v3504
        %3506 = vmatmul.f32.gmra.mxu0 %v2708
        %v3507 = vpop.f32.mrf.mxu0
        %3508 = vmatmul.f32.gmra.mxu0 %v2714
        %v3509 = vpop.f32.mrf.mxu0
        %v3510 = vadd.f32 %v3429, %v3509
        %3511 = vmatmul.f32.gmra.mxu0 %v2720
        %v3512 = vpop.f32.mrf.mxu0
        %v3513 = vadd.f32 %v3432, %v3512
        %3514 = vmatmul.f32.gmra.mxu0 %v2726
        %v3515 = vpop.f32.mrf.mxu0
        %3516 = vmatmul.f32.gmra.mxu0 %v2732
        %v3517 = vpop.f32.mrf.mxu0
        %v3518 = vadd.f32 %v3437, %v3517
        %3519 = vmatmul.f32.gmra.mxu0 %v2738
        %v3520 = vpop.f32.mrf.mxu0
        %v3521 = vadd.f32 %v3440, %v3520
        %3522 = vmatmul.f32.gmra.mxu0 %v2744
        %v3523 = vpop.f32.mrf.mxu0
        %3524 = vmatmul.f32.gmra.mxu0 %v2750
        %v3525 = vpop.f32.mrf.mxu0
        %v3526 = vadd.f32 %v3445, %v3525
        %3527 = vmatmul.f32.gmra.mxu0 %v2756
        %v3528 = vpop.f32.mrf.mxu0
        %v3529 = vadd.f32 %v3448, %v3528
        %3530 = vmatmul.f32.gmra.mxu0 %v2762
        %v3531 = vpop.f32.mrf.mxu0
        %3532 = vmatmul.f32.gmra.mxu0 %v2768
        %v3533 = vpop.f32.mrf.mxu0
        %v3534 = vadd.f32 %v3453, %v3533
        %3535 = vmatmul.f32.gmra.mxu0 %v2774
        %v3536 = vpop.f32.mrf.mxu0
        %v3537 = vadd.f32 %v3456, %v3536
        %3538 = vmatmul.f32.gmra.mxu0 %v2780
        %v3539 = vpop.f32.mrf.mxu0
        %3540 = vmatmul.f32.gmra.mxu0 %v2786
        %v3541 = vpop.f32.mrf.mxu0
        %v3542 = vadd.f32 %v3461, %v3541
        %3543 = vmatmul.f32.gmra.mxu0 %v2792
        %v3544 = vpop.f32.mrf.mxu0
        %v3545 = vadd.f32 %v3464, %v3544
        %3546 = vmatmul.f32.gmra.mxu0 %v2802
        %v3547 = vpop.f32.mrf.mxu0
        %3548 = vdwg.mxu0
        %3549 = vmatpush.msra.mxu0 %v2609
        %3550 = vmatpush.msra.mxu0 %v2608
        %3551 = vmatpush.msra.mxu0 %v2607
        %3552 = vmatpush.msra.mxu0 %v2606
        %3553 = vmatpush.msra.mxu0 %v2605
        %3554 = vmatpush.msra.mxu0 %v2604
        %3555 = vmatpush.msra.mxu0 %v2603
        %3556 = vmatpush.msra.mxu0 %v2602
        %3557 = vmatpush.msra.mxu0 %v2601
        %3558 = vmatpush.msra.mxu0 %v2600
        %3559 = vmatpush.msra.mxu0 %v2599
        %3560 = vmatpush.msra.mxu0 %v2598
        %3561 = vmatpush.msra.mxu0 %v2597
        %3562 = vmatpush.msra.mxu0 %v2596
        %3563 = vmatpush.msra.mxu0 %v2595
        %3564 = vmatpush.msra.mxu0 %v2594
        %3565 = vmatmul.f32.gmra.mxu0 %v2636
        %v3566 = vpop.f32.mrf.mxu0
        %v3567 = vadd.f32 %v3486, %v3566
        %3568 = vmatmul.f32.gmra.mxu0 %v2654
        %v3569 = vpop.f32.mrf.mxu0
        %v3570 = vadd.f32 %v3489, %v3569
        %3571 = vmatmul.f32.gmra.mxu0 %v2670
        %v3572 = vpop.f32.mrf.mxu0
        %3573 = vmatmul.f32.gmra.mxu0 %v2680
        %v3574 = vpop.f32.mrf.mxu0
        %v3575 = vadd.f32 %v3494, %v3574
        %3576 = vmatmul.f32.gmra.mxu0 %v2686
        %v3577 = vpop.f32.mrf.mxu0
        %v3578 = vadd.f32 %v3497, %v3577
        %3579 = vmatmul.f32.gmra.mxu0 %v2692
        %v3580 = vpop.f32.mrf.mxu0
        %3581 = vmatmul.f32.gmra.mxu0 %v2698
        %v3582 = vpop.f32.mrf.mxu0
        %v3583 = vadd.f32 %v3502, %v3582
        %3584 = vmatmul.f32.gmra.mxu0 %v2704
        %v3585 = vpop.f32.mrf.mxu0
        %v3586 = vadd.f32 %v3505, %v3585
        %3587 = vmatmul.f32.gmra.mxu0 %v2710
        %v3588 = vpop.f32.mrf.mxu0
        %3589 = vmatmul.f32.gmra.mxu0 %v2716
        %v3590 = vpop.f32.mrf.mxu0
        %v3591 = vadd.f32 %v3510, %v3590
        %3592 = vmatmul.f32.gmra.mxu0 %v2722
        %v3593 = vpop.f32.mrf.mxu0
        %v3594 = vadd.f32 %v3513, %v3593
        %3595 = vmatmul.f32.gmra.mxu0 %v2728
        %v3596 = vpop.f32.mrf.mxu0
        %3597 = vmatmul.f32.gmra.mxu0 %v2734
        %v3598 = vpop.f32.mrf.mxu0
        %v3599 = vadd.f32 %v3518, %v3598
        %3600 = vmatmul.f32.gmra.mxu0 %v2740
        %v3601 = vpop.f32.mrf.mxu0
        %v3602 = vadd.f32 %v3521, %v3601
        %3603 = vmatmul.f32.gmra.mxu0 %v2746
        %v3604 = vpop.f32.mrf.mxu0
        %3605 = vmatmul.f32.gmra.mxu0 %v2752
        %v3606 = vpop.f32.mrf.mxu0
        %v3607 = vadd.f32 %v3526, %v3606
        %3608 = vmatmul.f32.gmra.mxu0 %v2758
        %v3609 = vpop.f32.mrf.mxu0
        %v3610 = vadd.f32 %v3529, %v3609
        %3611 = vmatmul.f32.gmra.mxu0 %v2764
        %v3612 = vpop.f32.mrf.mxu0
        %3613 = vmatmul.f32.gmra.mxu0 %v2770
        %v3614 = vpop.f32.mrf.mxu0
        %v3615 = vadd.f32 %v3534, %v3614
        %3616 = vmatmul.f32.gmra.mxu0 %v2776
        %v3617 = vpop.f32.mrf.mxu0
        %v3618 = vadd.f32 %v3537, %v3617
        %3619 = vmatmul.f32.gmra.mxu0 %v2782
        %v3620 = vpop.f32.mrf.mxu0
        %3621 = vmatmul.f32.gmra.mxu0 %v2788
        %v3622 = vpop.f32.mrf.mxu0
        %v3623 = vadd.f32 %v3542, %v3622
        %3624 = vmatmul.f32.gmra.mxu0 %v2794
        %v3625 = vpop.f32.mrf.mxu0
        %v3626 = vadd.f32 %v3545, %v3625
        %3627 = vmatmul.f32.gmra.mxu0 %v2804
        %v3628 = vpop.f32.mrf.mxu0
        %3629 = vdwg.mxu0
        %v3630 = vld [vmem:[%s6] sm:$0x1]
        %v3632 = vperm.slane %v3630, 0
        %v3634 = vmul.f32 %v3567, %v3632
        %v3635 = vmul.f32 %v3570, %v3632
        %v3636 = vmul.f32 %v3575, %v3632
        %v3637 = vmul.f32 %v3578, %v3632
        %v3638 = vmul.f32 %v3583, %v3632
        %v3639 = vmul.f32 %v3586, %v3632
        %v3640 = vmul.f32 %v3591, %v3632
        %v3641 = vmul.f32 %v3594, %v3632
        %v3642 = vmul.f32 %v3599, %v3632
        %v3643 = vmul.f32 %v3602, %v3632
        %v3644 = vmul.f32 %v3607, %v3632
        %v3645 = vmul.f32 %v3610, %v3632
        %v3646 = vmul.f32 %v3615, %v3632
        %v3647 = vmul.f32 %v3618, %v3632
        %v3648 = vmul.f32 %v3623, %v3632
        %v3649 = vmul.f32 %v3626, %v3632
        %v3650 = vld [vmem:[%s7] sm:$0x1]
        %v3652 = vperm.slane %v3650, 0
        %v3654 = vadd.f32 %v3634, %v3652
        %v3655 = vadd.f32 %v3635, %v3652
        %v3656 = vadd.f32 %v3636, %v3652
        %v3657 = vadd.f32 %v3637, %v3652
        %v3658 = vadd.f32 %v3638, %v3652
        %v3659 = vadd.f32 %v3639, %v3652
        %v3660 = vadd.f32 %v3640, %v3652
        %v3661 = vadd.f32 %v3641, %v3652
        %v3662 = vadd.f32 %v3642, %v3652
        %v3663 = vadd.f32 %v3643, %v3652
        %v3664 = vadd.f32 %v3644, %v3652
        %v3665 = vadd.f32 %v3645, %v3652
        %v3666 = vadd.f32 %v3646, %v3652
        %v3667 = vadd.f32 %v3647, %v3652
        %v3668 = vadd.f32 %v3648, %v3652
        %v3669 = vadd.f32 %v3649, %v3652
        %v3670 = vmax.f32 %v3654, 0.0
        %v3671 = vmax.f32 %v3655, 0.0
        %v3672 = vmax.f32 %v3656, 0.0
        %v3673 = vmax.f32 %v3657, 0.0
        %v3674 = vmax.f32 %v3658, 0.0
        %v3675 = vmax.f32 %v3659, 0.0
        %v3676 = vmax.f32 %v3660, 0.0
        %v3677 = vmax.f32 %v3661, 0.0
        %v3678 = vmax.f32 %v3662, 0.0
        %v3679 = vmax.f32 %v3663, 0.0
        %v3680 = vmax.f32 %v3664, 0.0
        %v3681 = vmax.f32 %v3665, 0.0
        %v3682 = vmax.f32 %v3666, 0.0
        %v3683 = vmax.f32 %v3667, 0.0
        %v3684 = vmax.f32 %v3668, 0.0
        %v3685 = vmax.f32 %v3669, 0.0
        %3686 = vst [vmem:[%s351] sm:$0xff] %v3670
        %3687 = vst [vmem:[%s351 + $0x8] sm:$0xff] %v3671
        %3688 = vst [vmem:[%s351 + $0x10] sm:$0xff] %v3672
        %3689 = vst [vmem:[%s351 + $0x18] sm:$0xff] %v3673
        %3690 = vst [vmem:[%s351 + $0x20] sm:$0xff] %v3674
        %3691 = vst [vmem:[%s351 + $0x28] sm:$0xff] %v3675
        %3692 = vst [vmem:[%s351 + $0x30] sm:$0xff] %v3676
        %3693 = vst [vmem:[%s351 + $0x38] sm:$0xff] %v3677
        %3694 = vst [vmem:[%s351 + $0x40] sm:$0xff] %v3678
        %3695 = vst [vmem:[%s351 + $0x48] sm:$0xff] %v3679
        %3696 = vst [vmem:[%s351 + $0x50] sm:$0xff] %v3680
        %3697 = vst [vmem:[%s351 + $0x58] sm:$0xff] %v3681
        %3698 = vst [vmem:[%s351 + $0x60] sm:$0xff] %v3682
        %3699 = vst [vmem:[%s351 + $0x68] sm:$0xff] %v3683
        %3700 = vst [vmem:[%s351 + $0x70] sm:$0xff] %v3684
        %3701 = vst [vmem:[%s351 + $0x78] sm:$0xff] %v3685
        %s3702 = sand.u32 %s202, 1
        %s3703 = scalar_lea.sflag [#allocation6], %s3702
        %s3704 = sand.u32 %s202, 1
        %s3705 = smul.addr %s3704, 128
        %s3706 = scalar_lea.vmem [#allocation10], %s3705
        // Predicated region
        $region69: #{tpu_custom_call.1} parent=47 // pred_check
          %p3707 = pneg %p212
        $region70: #{tpu_custom_call.1} parent=47 // pred_check_branch
          %3709 = sbr.rel (%p3707) target = $region72
        $region71: #{tpu_custom_call.1} parent=47 // pred_region
          %s3710 = smul.u32 8, %s31
          %3712 = vsyncadd %s3703, 0
          %s3713 = smul.addr %s3710, 2
          %s3714 = smul.addr %s30, 32
          %s3715 = sadd.s32 %s3713, %s3714
          %s3716 = smul.addr %s3715, 8
          %s3717 = scalar_lea.hbm %s8, %s3716
          %s3718 = sshll.u32 %s3706, 4
          %s3719 = int_to_ptr.vmem [resolvable:$true] %s3718
          %s3720 = sshll.u32 %s3717, 4
          %s3721 = int_to_ptr.hbm [resolvable:$true] %s3720
          %3726 = dma.vmem_to_hbm [thread:$0]  %s3719, 2048, %s3721, %s3703, 128, 128, 8
        $region72: #{tpu_custom_call.1} parent=47 // pred_fallthru
          _
      $region48: #{tpu_custom_call.1} parent=5 // pred_fallthru
        _
      %p3727 = scmp.le.s32.totalorder 2, %s21
      // Predicated region
      $region73: #{tpu_custom_call.1} parent=5 // pred_check
        %p3728 = pneg %p3727
      $region74: #{tpu_custom_call.1} parent=5 // pred_check_branch
        %3730 = sbr.rel (%p3728) target = $region76
      $region75: #{tpu_custom_call.1} parent=5 // pred_region
        %s3731 = ssub.s32 %s21, 2
        // Predicated region
        $region77: #{tpu_custom_call.1} parent=75 // pred_check
          %p3732 = pneg %p218
        $region78: #{tpu_custom_call.1} parent=75 // pred_check_branch
          %3734 = sbr.rel (%p3732) target = $region80
        $region79: #{tpu_custom_call.1} parent=75 // pred_region
          %s3735 = sand.u32 %s203, 1
          %s3736 = scalar_lea.sflag [#allocation6], %s3735
          %s3737 = sand.u32 %s203, 1
          %s3738 = smul.addr %s3737, 128
          %s3739 = scalar_lea.vmem [#allocation10], %s3738
          %3741 = dma.done %s3736, 2048
        $region80: #{tpu_custom_call.1} parent=75 // pred_fallthru
          _
      $region76: #{tpu_custom_call.1} parent=5 // pred_fallthru
        _
    $region6: #{tpu_custom_call.1} parent=1 // loop_footer
      %s25 = sadd.s32 1, %s21
    $region7: #{tpu_custom_call.1} parent=1 // loop_footer_branch
      %20 = sbr.rel target = $region3
    $region8: #{tpu_custom_call.1} parent=1 // loop_exit
      _
    %3742 = vsyncpa [#allocation5], 1
    %s3743 = scalar_lea.sflag [#allocation5], 1
    %3744 = vsyncpa %s3743, 1
    %3745 = vsyncpa [#allocation8], 1
    %3746 = vsyncpa [#allocation6], 1
    %s3747 = scalar_lea.sflag [#allocation6], 1
    %3748 = vsyncpa %s3747, 1
  %3749 = vsyncmov [#allocation3]
  %s3750 = vpop.sfrf %3749
  %p3751 = scmp.eq.s32.totalorder %s3750, 0
  %p3752 = pneg %p3751
  %3754 = shalt.err (%p3752)
  %s3755 = scalar_lea.sflag [#allocation3], 1
  %3756 = vsyncmov %s3755
  %s3757 = vpop.sfrf %3756
  %p3758 = scmp.eq.s32.totalorder %s3757, 0
  %p3759 = pneg %p3758
  %3761 = shalt.err (%p3759)

</llo_original>
